<compile_context>
chip_gen: v7x
topology: tpu7x:2x2x1
jax: 0.10.0
libtpu: 0.0.40
codegen_flags: <defaults>
</compile_context>

<pallas_src>
import jax
import jax.numpy as jnp
from jax.experimental import pallas as pl
from jax.experimental.pallas import tpu as pltpu

# ---- model / problem sizes (small, self-consistent) -------------------------
B, T, D = 2, 8, 32          # batch, tokens, embedding dim
H = 4                       # attention heads
DH = D // H                 # head dim
DFF = 64                    # feed-forward hidden dim
N_LAYER = 2                 # encoder depth
LN_EPS = 1e-5               # torch nn.LayerNorm default
BT = B * T
SCALE = 1.0 / (DH ** 0.5)

# ---- packed-parameter slab layout (row offsets, all multiples of 8) ---------
_R_WQ = 0 * D               # (D, D)
_R_WK = 1 * D               # (D, D)
_R_WV = 2 * D               # (D, D)
_R_WO = 3 * D               # (D, D)
_R_W2 = 4 * D               # (DFF, D)
_R_PE = 4 * D + DFF         # (T, D) sinusoidal positional encoding
_R_VEC = 4 * D + DFF + T    # 9 rows: g1, be1, g2, be2, bq, bk, bv, bo, bf2
SLAB_ROWS = 216             # 209 used rows, padded to a multiple of 8
W1B_ROWS = D + 8            # rows 0:D = w1, row D = b1, rest zero


# -----------------------------------------------------------------------------
# helpers (used both in-kernel and by the pure-JAX reference)
# -----------------------------------------------------------------------------
def _layer_norm(x, gamma, beta):
    mean = jnp.mean(x, axis=-1, keepdims=True)
    var = jnp.mean(jnp.square(x - mean), axis=-1, keepdims=True)
    return (x - mean) * jax.lax.rsqrt(var + LN_EPS) * gamma + beta


def _gelu(x):
    # TODO(synk): torch nn.GELU defaults to the exact erf form; the tanh
    # approximation is used because it lowers cleanly to the TPU EUP.
    c = 0.7978845608028654  # sqrt(2/pi)
    return 0.5 * x * (1.0 + jnp.tanh(c * (x + 0.044715 * x * x * x)))


# -----------------------------------------------------------------------------
# fused kernel: PE add + N_LAYER pre-norm encoder layers for ONE batch element
# (grid axis over batch is "parallel" -> uses both TensorCores on v7x)
# -----------------------------------------------------------------------------
def fused_encoder_kernel(x_ref, slab_ref, w1b_ref, o_ref, ctx_ref):
    # ---- unpack the resident parameter slabs (all slices sublane-aligned) ----
    wq = slab_ref[_R_WQ:_R_WQ + D, :]
    wk = slab_ref[_R_WK:_R_WK + D, :]
    wv = slab_ref[_R_WV:_R_WV + D, :]
    wo = slab_ref[_R_WO:_R_WO + D, :]
    w2 = slab_ref[_R_W2:_R_W2 + DFF, :]
    pe = slab_ref[_R_PE:_R_PE + T, :]
    g1 = slab_ref[_R_VEC + 0:_R_VEC + 1, :]
    be1 = slab_ref[_R_VEC + 1:_R_VEC + 2, :]
    g2 = slab_ref[_R_VEC + 2:_R_VEC + 3, :]
    be2 = slab_ref[_R_VEC + 3:_R_VEC + 4, :]
    bq = slab_ref[_R_VEC + 4:_R_VEC + 5, :]
    bk = slab_ref[_R_VEC + 5:_R_VEC + 6, :]
    bv = slab_ref[_R_VEC + 6:_R_VEC + 7, :]
    bo = slab_ref[_R_VEC + 7:_R_VEC + 8, :]
    bf2 = slab_ref[_R_VEC + 8:_R_VEC + 9, :]
    w1 = w1b_ref[0:D, :]
    b1 = w1b_ref[D:D + 1, :]

    # ---- positional encoding for this batch's (T, D) block ----
    x = x_ref[...].astype(jnp.float32) + pe

    def split_heads(z):                       # (T, D) -> (H, T, DH), done ONCE
        return jnp.stack([z[:, h * DH:(h + 1) * DH] for h in range(H)], axis=0)

    def layer_body(_, xc):                    # xc: (T, D) f32
        # --- multi-head self-attention (pre-norm) ---
        xn = _layer_norm(xc, g1, be1)
        # three lane-aligned projections (each result starts at lane 0)
        q = jnp.dot(xn, wq, preferred_element_type=jnp.float32) + bq
        k = jnp.dot(xn, wk, preferred_element_type=jnp.float32) + bk
        v = jnp.dot(xn, wv, preferred_element_type=jnp.float32) + bv
        qh, kh, vh = split_heads(q), split_heads(k), split_heads(v)

        # one batched dot_general for scores, one for context (batch dim = head)
        s = jnp.einsum('hqd,hkd->hqk', qh, kh,
                       preferred_element_type=jnp.float32) * SCALE
        s = s - jnp.max(s, axis=-1, keepdims=True)
        p = jnp.exp(s)
        p = p / jnp.sum(p, axis=-1, keepdims=True)       # exact softmax
        ctx = jnp.einsum('hqk,hkd->hqd', p, vh,
                         preferred_element_type=jnp.float32)   # (H, T, DH)

        # reassemble heads into one (T, D) VMEM slab, then ONE output projection
        for h in range(H):
            ctx_ref[:, h * DH:(h + 1) * DH] = ctx[h]
        attn = jnp.dot(ctx_ref[...], wo, preferred_element_type=jnp.float32) + bo
        x1 = xc + attn

        # --- feed-forward (pre-norm) ---
        x1n = _layer_norm(x1, g2, be2)
        hid = _gelu(jnp.dot(x1n, w1, preferred_element_type=jnp.float32) + b1)
        ff = jnp.dot(hid, w2, preferred_element_type=jnp.float32) + bf2
        return x1 + ff

    # clone_layer() => all layers share identical parameters; loop in-kernel,
    # unrolled so the LLO scheduler sees the whole forward.
    out = jax.lax.fori_loop(0, N_LAYER, layer_body, x, unroll=True)
    o_ref[...] = out.astype(o_ref.dtype)


def _cost_estimate():
    per_layer_per_batch = (
        3 * 2 * T * D * D        # q / k / v projections
        + 2 * H * T * T * DH     # scores
        + 2 * H * T * T * DH     # context
        + 2 * T * D * D          # output projection
        + 2 * T * D * DFF        # FFN up
        + 2 * T * DFF * D        # FFN down
    )
    flops = B * N_LAYER * per_layer_per_batch
    transcendentals = B * N_LAYER * (H * T * T + T * DFF + 2 * T)  # exp, tanh, rsqrt
    bytes_accessed = 4 * (2 * BT * D + SLAB_ROWS * D + W1B_ROWS * DFF)
    return pl.CostEstimate(flops=flops, transcendentals=transcendentals,
                           bytes_accessed=bytes_accessed)


def transformer_encoder(x, slab, w1b):
    x_flat = x.reshape(BT, D)
    out = pl.pallas_call(
        fused_encoder_kernel,
        out_shape=jax.ShapeDtypeStruct((BT, D), x.dtype),
        grid=(B,),                                            # parallel over batch
        in_specs=[
            pl.BlockSpec((T, D), lambda b: (b, 0)),           # this batch's rows
            pl.BlockSpec((SLAB_ROWS, D), lambda b: (0, 0)),   # weights pinned in VMEM
            pl.BlockSpec((W1B_ROWS, DFF), lambda b: (0, 0)),  # weights pinned in VMEM
        ],
        out_specs=pl.BlockSpec((T, D), lambda b: (b, 0)),
        scratch_shapes=[pltpu.VMEM((T, D), jnp.float32)],     # head-reassembly slab
        compiler_params=pltpu.CompilerParams(
            dimension_semantics=("parallel",)),
        cost_estimate=_cost_estimate(),
    )(x_flat, slab, w1b)
    return out.reshape(B, T, D)


# -----------------------------------------------------------------------------
# parameter construction + packing + sinusoidal PE
# -----------------------------------------------------------------------------
def make_sinusoidal_pe(t, d):
    pos = jnp.arange(t, dtype=jnp.float32)[:, None]
    i = jnp.arange(0, d, 2, dtype=jnp.float32)
    div = jnp.exp(-jnp.log(10000.0) * i / d)
    pe = jnp.zeros((t, d), dtype=jnp.float32)
    pe = pe.at[:, 0::2].set(jnp.sin(pos * div))
    pe = pe.at[:, 1::2].set(jnp.cos(pos * div))
    return pe


def init_params(key):
    ks = jax.random.split(key, 16)
    std = 0.05

    def w(k, shape):
        return std * jax.random.normal(k, shape, jnp.float32)

    return dict(
        wq=w(ks[0], (D, D)), wk=w(ks[1], (D, D)), wv=w(ks[2], (D, D)),
        wo=w(ks[3], (D, D)), w1=w(ks[4], (D, DFF)), w2=w(ks[5], (DFF, D)),
        bq=w(ks[6], (1, D)), bk=w(ks[7], (1, D)), bv=w(ks[8], (1, D)),
        bo=w(ks[9], (1, D)), b1=w(ks[10], (1, DFF)), bf2=w(ks[11], (1, D)),
        g1=1.0 + 0.1 * jax.random.normal(ks[12], (1, D), jnp.float32),
        be1=0.1 * jax.random.normal(ks[13], (1, D), jnp.float32),
        g2=1.0 + 0.1 * jax.random.normal(ks[14], (1, D), jnp.float32),
        be2=0.1 * jax.random.normal(ks[15], (1, D), jnp.float32),
        pe=make_sinusoidal_pe(T, D),
    )


def pack_params(raw):
    vec_rows = jnp.concatenate([raw['g1'], raw['be1'], raw['g2'], raw['be2'],
                                raw['bq'], raw['bk'], raw['bv'], raw['bo'],
                                raw['bf2']], axis=0)                      # (9, D)
    used = 4 * D + DFF + T + 9
    slab = jnp.concatenate([raw['wq'], raw['wk'], raw['wv'], raw['wo'],
                            raw['w2'], raw['pe'], vec_rows,
                            jnp.zeros((SLAB_ROWS - used, D), jnp.float32)],
                           axis=0)                                        # (216, D)
    w1b = jnp.concatenate([raw['w1'], raw['b1'],
                           jnp.zeros((W1B_ROWS - D - 1, DFF), jnp.float32)],
                          axis=0)                                         # (40, DFF)
    return slab, w1b


# -----------------------------------------------------------------------------
# pure-JAX reference (same math, HIGHEST-precision matmuls) for a sanity check
# -----------------------------------------------------------------------------
def reference_forward(x, raw):
    hp = jax.lax.Precision.HIGHEST
    out = x + raw['pe'][None]
    for _ in range(N_LAYER):
        xn = _layer_norm(out, raw['g1'], raw['be1'])
        q = jnp.einsum('btd,de->bte', xn, raw['wq'], precision=hp) + raw['bq']
        k = jnp.einsum('btd,de->bte', xn, raw['wk'], precision=hp) + raw['bk']
        v = jnp.einsum('btd,de->bte', xn, raw['wv'], precision=hp) + raw['bv']

        def split(z):  # (B,T,D) -> (B,H,T,DH)
            return z.reshape(B, T, H, DH).transpose(0, 2, 1, 3)

        s = jnp.einsum('bhqd,bhkd->bhqk', split(q), split(k), precision=hp) * SCALE
        p = jax.nn.softmax(s, axis=-1)
        ctx = jnp.einsum('bhqk,bhkd->bhqd', p, split(v), precision=hp)
        ctx = ctx.transpose(0, 2, 1, 3).reshape(B, T, D)
        out = out + jnp.einsum('btd,de->bte', ctx, raw['wo'], precision=hp) + raw['bo']

        x1n = _layer_norm(out, raw['g2'], raw['be2'])
        hid = _gelu(jnp.einsum('btd,df->btf', x1n, raw['w1'], precision=hp) + raw['b1'])
        out = out + jnp.einsum('btf,fd->btd', hid, raw['w2'], precision=hp) + raw['bf2']
    return out


if __name__ == "__main__":
    key = jax.random.PRNGKey(0)
    kx, kp = jax.random.split(key)
    x = jax.random.normal(kx, (B, T, D), jnp.float32)
    raw = init_params(kp)
    slab, w1b = pack_params(raw)

    out = transformer_encoder(x, slab, w1b)
    out = jax.block_until_ready(out)
    assert out.shape == (B, T, D) and out.dtype == jnp.float32

    ref = reference_forward(x, raw)
    max_err = float(jnp.max(jnp.abs(out - ref)))
    # 100x tighter than before (was 1e-1); any layout / slab-indexing bug shows
    # up as O(0.1-1) error, while f32 MXU pass rounding over 2 layers stays well
    # below 1e-3.
    assert max_err < 1e-3, f"max abs error vs reference: {max_err}"
    print("KERNEL_OK")
</pallas_src>

<mosaic_0001>
module attributes {stable_mosaic.version = 11 : i64} {
  func.func @fused_encoder_kernel(%arg0: i32, %arg1: memref<8x32xf32, #tpu.memory_space<vmem>>, %arg2: memref<216x32xf32, #tpu.memory_space<vmem>>, %arg3: memref<40x64xf32, #tpu.memory_space<vmem>>, %arg4: memref<8x32xf32, #tpu.memory_space<vmem>>, %arg5: memref<8x32xf32, #tpu.memory_space<vmem>>) attributes {dimension_semantics = [#tpu.dimension_semantics<parallel>], iteration_bounds = array<i64: 2>, scalar_prefetch = 0 : i64, scratch_operands = 1 : i64, tpu.core_type = #tpu.core_type<tc>, window_params = [{transform_indices = @transform_0, window_bounds = array<i64: 8, 32>}, {pipeline_mode = #tpu.pipeline_mode<synchronous>, transform_indices = @transform_1, window_bounds = array<i64: 216, 32>}, {pipeline_mode = #tpu.pipeline_mode<synchronous>, transform_indices = @transform_2, window_bounds = array<i64: 40, 64>}, {transform_indices = @transform_3, window_bounds = array<i64: 8, 32>}]} {
    %c0 = arith.constant 0 : index
    %c0_0 = arith.constant 0 : index
    %0 = vector.load %arg2[%c0, %c0_0] : memref<216x32xf32, #tpu.memory_space<vmem>>, vector<32x32xf32>
    %c32 = arith.constant 32 : index
    %c0_1 = arith.constant 0 : index
    %1 = vector.load %arg2[%c32, %c0_1] : memref<216x32xf32, #tpu.memory_space<vmem>>, vector<32x32xf32>
    %c64 = arith.constant 64 : index
    %c0_2 = arith.constant 0 : index
    %2 = vector.load %arg2[%c64, %c0_2] : memref<216x32xf32, #tpu.memory_space<vmem>>, vector<32x32xf32>
    %c96 = arith.constant 96 : index
    %c0_3 = arith.constant 0 : index
    %3 = vector.load %arg2[%c96, %c0_3] : memref<216x32xf32, #tpu.memory_space<vmem>>, vector<32x32xf32>
    %c128 = arith.constant 128 : index
    %c0_4 = arith.constant 0 : index
    %4 = vector.load %arg2[%c128, %c0_4] : memref<216x32xf32, #tpu.memory_space<vmem>>, vector<64x32xf32>
    %c192 = arith.constant 192 : index
    %c0_5 = arith.constant 0 : index
    %5 = vector.load %arg2[%c192, %c0_5] : memref<216x32xf32, #tpu.memory_space<vmem>>, vector<8x32xf32>
    %c200 = arith.constant 200 : index
    %c0_6 = arith.constant 0 : index
    %6 = vector.load %arg2[%c200, %c0_6] : memref<216x32xf32, #tpu.memory_space<vmem>>, vector<1x32xf32>
    %c201 = arith.constant 201 : index
    %c0_7 = arith.constant 0 : index
    %7 = vector.load %arg2[%c201, %c0_7] : memref<216x32xf32, #tpu.memory_space<vmem>>, vector<1x32xf32>
    %c202 = arith.constant 202 : index
    %c0_8 = arith.constant 0 : index
    %8 = vector.load %arg2[%c202, %c0_8] : memref<216x32xf32, #tpu.memory_space<vmem>>, vector<1x32xf32>
    %c203 = arith.constant 203 : index
    %c0_9 = arith.constant 0 : index
    %9 = vector.load %arg2[%c203, %c0_9] : memref<216x32xf32, #tpu.memory_space<vmem>>, vector<1x32xf32>
    %c204 = arith.constant 204 : index
    %c0_10 = arith.constant 0 : index
    %10 = vector.load %arg2[%c204, %c0_10] : memref<216x32xf32, #tpu.memory_space<vmem>>, vector<1x32xf32>
    %c205 = arith.constant 205 : index
    %c0_11 = arith.constant 0 : index
    %11 = vector.load %arg2[%c205, %c0_11] : memref<216x32xf32, #tpu.memory_space<vmem>>, vector<1x32xf32>
    %c206 = arith.constant 206 : index
    %c0_12 = arith.constant 0 : index
    %12 = vector.load %arg2[%c206, %c0_12] : memref<216x32xf32, #tpu.memory_space<vmem>>, vector<1x32xf32>
    %c207 = arith.constant 207 : index
    %c0_13 = arith.constant 0 : index
    %13 = vector.load %arg2[%c207, %c0_13] : memref<216x32xf32, #tpu.memory_space<vmem>>, vector<1x32xf32>
    %c208 = arith.constant 208 : index
    %c0_14 = arith.constant 0 : index
    %14 = vector.load %arg2[%c208, %c0_14] : memref<216x32xf32, #tpu.memory_space<vmem>>, vector<1x32xf32>
    %c0_15 = arith.constant 0 : index
    %c0_16 = arith.constant 0 : index
    %15 = vector.load %arg3[%c0_15, %c0_16] : memref<40x64xf32, #tpu.memory_space<vmem>>, vector<32x64xf32>
    %c32_17 = arith.constant 32 : index
    %c0_18 = arith.constant 0 : index
    %16 = vector.load %arg3[%c32_17, %c0_18] : memref<40x64xf32, #tpu.memory_space<vmem>>, vector<1x64xf32>
    %c0_19 = arith.constant 0 : index
    %c0_20 = arith.constant 0 : index
    %17 = vector.load %arg1[%c0_19, %c0_20] : memref<8x32xf32, #tpu.memory_space<vmem>>, vector<8x32xf32>
    %18 = arith.addf %17, %5 : vector<8x32xf32>
    %c0_i32 = arith.constant 0 : i32
    %cst = arith.constant dense<0.000000e+00> : vector<8xf32>
    %19 = vector.multi_reduction <add>, %18, %cst [1] : vector<8x32xf32> to vector<8xf32>
    %20 = vector.shape_cast %19 : vector<8xf32> to vector<8x1xf32>
    %cst_21 = arith.constant 3.200000e+01 : f32
    %21 = vector.broadcast %cst_21 : f32 to vector<8x1xf32>
    %22 = arith.divf %20, %21 : vector<8x1xf32>
    %23 = vector.broadcast %22 : vector<8x1xf32> to vector<8x32xf32>
    %24 = arith.subf %18, %23 : vector<8x32xf32>
    %25 = arith.mulf %24, %24 : vector<8x32xf32>
    %cst_22 = arith.constant dense<0.000000e+00> : vector<8xf32>
    %26 = vector.multi_reduction <add>, %25, %cst_22 [1] : vector<8x32xf32> to vector<8xf32>
    %27 = vector.shape_cast %26 : vector<8xf32> to vector<8x1xf32>
    %cst_23 = arith.constant 3.200000e+01 : f32
    %28 = vector.broadcast %cst_23 : f32 to vector<8x1xf32>
    %29 = arith.divf %27, %28 : vector<8x1xf32>
    %30 = vector.broadcast %22 : vector<8x1xf32> to vector<8x32xf32>
    %31 = arith.subf %18, %30 : vector<8x32xf32>
    %cst_24 = arith.constant 9.99999974E-6 : f32
    %32 = vector.broadcast %cst_24 : f32 to vector<8x1xf32>
    %33 = arith.addf %29, %32 : vector<8x1xf32>
    %34 = math.rsqrt %33 : vector<8x1xf32>
    %35 = vector.broadcast %34 : vector<8x1xf32> to vector<8x32xf32>
    %36 = arith.mulf %31, %35 : vector<8x32xf32>
    %37 = vector.broadcast %6 : vector<1x32xf32> to vector<8x32xf32>
    %38 = arith.mulf %36, %37 : vector<8x32xf32>
    %39 = vector.broadcast %7 : vector<1x32xf32> to vector<8x32xf32>
    %40 = arith.addf %38, %39 : vector<8x32xf32>
    %cst_25 = arith.constant dense<0.000000e+00> : vector<8x32xf32>
    %41 = tpu.matmul %40, %0, %cst_25 {dimension_numbers = #tpu.dot_dimension_numbers<[1], [0], [0], [1], [0, 0, 1, 1], [], []>} : vector<8x32xf32>, vector<32x32xf32>, vector<8x32xf32> -> vector<8x32xf32>
    %42 = vector.broadcast %10 : vector<1x32xf32> to vector<8x32xf32>
    %43 = arith.addf %41, %42 : vector<8x32xf32>
    %cst_26 = arith.constant dense<0.000000e+00> : vector<8x32xf32>
    %44 = tpu.matmul %40, %1, %cst_26 {dimension_numbers = #tpu.dot_dimension_numbers<[1], [0], [0], [1], [0, 0, 1, 1], [], []>} : vector<8x32xf32>, vector<32x32xf32>, vector<8x32xf32> -> vector<8x32xf32>
    %45 = vector.broadcast %11 : vector<1x32xf32> to vector<8x32xf32>
    %46 = arith.addf %44, %45 : vector<8x32xf32>
    %cst_27 = arith.constant dense<0.000000e+00> : vector<8x32xf32>
    %47 = tpu.matmul %40, %2, %cst_27 {dimension_numbers = #tpu.dot_dimension_numbers<[1], [0], [0], [1], [0, 0, 1, 1], [], []>} : vector<8x32xf32>, vector<32x32xf32>, vector<8x32xf32> -> vector<8x32xf32>
    %48 = vector.broadcast %12 : vector<1x32xf32> to vector<8x32xf32>
    %49 = arith.addf %47, %48 : vector<8x32xf32>
    %50 = vector.extract_strided_slice %43 {offsets = [0, 0], sizes = [8, 8], strides = [1, 1]} : vector<8x32xf32> to vector<8x8xf32>
    %51 = vector.extract_strided_slice %43 {offsets = [0, 8], sizes = [8, 8], strides = [1, 1]} : vector<8x32xf32> to vector<8x8xf32>
    %52 = vector.extract_strided_slice %43 {offsets = [0, 16], sizes = [8, 8], strides = [1, 1]} : vector<8x32xf32> to vector<8x8xf32>
    %53 = vector.extract_strided_slice %43 {offsets = [0, 24], sizes = [8, 8], strides = [1, 1]} : vector<8x32xf32> to vector<8x8xf32>
    %54 = vector.shape_cast %50 : vector<8x8xf32> to vector<1x8x8xf32>
    %55 = vector.shape_cast %51 : vector<8x8xf32> to vector<1x8x8xf32>
    %56 = vector.shape_cast %52 : vector<8x8xf32> to vector<1x8x8xf32>
    %57 = vector.shape_cast %53 : vector<8x8xf32> to vector<1x8x8xf32>
    %58 = tpu.concatenate %54, %55, %56, %57 in 0 : vector<1x8x8xf32>, vector<1x8x8xf32>, vector<1x8x8xf32>, vector<1x8x8xf32> -> vector<4x8x8xf32>
    %59 = vector.extract_strided_slice %46 {offsets = [0, 0], sizes = [8, 8], strides = [1, 1]} : vector<8x32xf32> to vector<8x8xf32>
    %60 = vector.extract_strided_slice %46 {offsets = [0, 8], sizes = [8, 8], strides = [1, 1]} : vector<8x32xf32> to vector<8x8xf32>
    %61 = vector.extract_strided_slice %46 {offsets = [0, 16], sizes = [8, 8], strides = [1, 1]} : vector<8x32xf32> to vector<8x8xf32>
    %62 = vector.extract_strided_slice %46 {offsets = [0, 24], sizes = [8, 8], strides = [1, 1]} : vector<8x32xf32> to vector<8x8xf32>
    %63 = vector.shape_cast %59 : vector<8x8xf32> to vector<1x8x8xf32>
    %64 = vector.shape_cast %60 : vector<8x8xf32> to vector<1x8x8xf32>
    %65 = vector.shape_cast %61 : vector<8x8xf32> to vector<1x8x8xf32>
    %66 = vector.shape_cast %62 : vector<8x8xf32> to vector<1x8x8xf32>
    %67 = tpu.concatenate %63, %64, %65, %66 in 0 : vector<1x8x8xf32>, vector<1x8x8xf32>, vector<1x8x8xf32>, vector<1x8x8xf32> -> vector<4x8x8xf32>
    %68 = vector.extract_strided_slice %49 {offsets = [0, 0], sizes = [8, 8], strides = [1, 1]} : vector<8x32xf32> to vector<8x8xf32>
    %69 = vector.extract_strided_slice %49 {offsets = [0, 8], sizes = [8, 8], strides = [1, 1]} : vector<8x32xf32> to vector<8x8xf32>
    %70 = vector.extract_strided_slice %49 {offsets = [0, 16], sizes = [8, 8], strides = [1, 1]} : vector<8x32xf32> to vector<8x8xf32>
    %71 = vector.extract_strided_slice %49 {offsets = [0, 24], sizes = [8, 8], strides = [1, 1]} : vector<8x32xf32> to vector<8x8xf32>
    %72 = vector.shape_cast %68 : vector<8x8xf32> to vector<1x8x8xf32>
    %73 = vector.shape_cast %69 : vector<8x8xf32> to vector<1x8x8xf32>
    %74 = vector.shape_cast %70 : vector<8x8xf32> to vector<1x8x8xf32>
    %75 = vector.shape_cast %71 : vector<8x8xf32> to vector<1x8x8xf32>
    %76 = tpu.concatenate %72, %73, %74, %75 in 0 : vector<1x8x8xf32>, vector<1x8x8xf32>, vector<1x8x8xf32>, vector<1x8x8xf32> -> vector<4x8x8xf32>
    "tpu.trace_start"() <{level = 10 : i32, message = "hqd,hkd->hqk"}> : () -> ()
    %cst_28 = arith.constant dense<0.000000e+00> : vector<4x8x8xf32>
    %77 = tpu.matmul %58, %67, %cst_28 {dimension_numbers = #tpu.dot_dimension_numbers<[2], [2], [1], [1], [0, 0, 0, 1, 1, 1], [0], [0]>} : vector<4x8x8xf32>, vector<4x8x8xf32>, vector<4x8x8xf32> -> vector<4x8x8xf32>
    "tpu.trace_stop"() : () -> ()
    %cst_29 = arith.constant 0.353553385 : f32
    %78 = vector.broadcast %cst_29 : f32 to vector<4x8x8xf32>
    %79 = arith.mulf %77, %78 : vector<4x8x8xf32>
    %cst_30 = arith.constant dense<0xFF800000> : vector<4x8xf32>
    %80 = vector.multi_reduction <maximumf>, %79, %cst_30 [2] : vector<4x8x8xf32> to vector<4x8xf32>
    %81 = vector.shape_cast %80 : vector<4x8xf32> to vector<4x8x1xf32>
    %82 = vector.broadcast %81 : vector<4x8x1xf32> to vector<4x8x8xf32>
    %83 = arith.subf %79, %82 : vector<4x8x8xf32>
    %84 = math.exp %83 : vector<4x8x8xf32>
    %cst_31 = arith.constant dense<0.000000e+00> : vector<4x8xf32>
    %85 = vector.multi_reduction <add>, %84, %cst_31 [2] : vector<4x8x8xf32> to vector<4x8xf32>
    %86 = vector.shape_cast %85 : vector<4x8xf32> to vector<4x8x1xf32>
    %87 = vector.broadcast %86 : vector<4x8x1xf32> to vector<4x8x8xf32>
    %88 = arith.divf %84, %87 : vector<4x8x8xf32>
    "tpu.trace_start"() <{level = 10 : i32, message = "hqk,hkd->hqd"}> : () -> ()
    %cst_32 = arith.constant dense<0.000000e+00> : vector<4x8x8xf32>
    %89 = tpu.matmul %88, %76, %cst_32 {dimension_numbers = #tpu.dot_dimension_numbers<[2], [1], [1], [2], [0, 0, 0, 1, 1, 2], [0], [0]>} : vector<4x8x8xf32>, vector<4x8x8xf32>, vector<4x8x8xf32> -> vector<4x8x8xf32>
    "tpu.trace_stop"() : () -> ()
    %90 = vector.extract_strided_slice %89 {offsets = [0, 0, 0], sizes = [1, 8, 8], strides = [1, 1, 1]} : vector<4x8x8xf32> to vector<1x8x8xf32>
    %91 = vector.shape_cast %90 : vector<1x8x8xf32> to vector<8x8xf32>
    %c0_33 = arith.constant 0 : index
    %c0_34 = arith.constant 0 : index
    %92 = vector.load %arg5[%c0_33, %c0_34] : memref<8x32xf32, #tpu.memory_space<vmem>>, vector<8x8xf32>
    tpu.vector_store %arg5[%c0_33, %c0_34], %91 {strides = array<i32>} : memref<8x32xf32, #tpu.memory_space<vmem>>, vector<8x8xf32>,
    %93 = vector.extract_strided_slice %89 {offsets = [1, 0, 0], sizes = [1, 8, 8], strides = [1, 1, 1]} : vector<4x8x8xf32> to vector<1x8x8xf32>
    %94 = vector.shape_cast %93 : vector<1x8x8xf32> to vector<8x8xf32>
    %c0_35 = arith.constant 0 : index
    %c8 = arith.constant 8 : index
    %95 = vector.load %arg5[%c0_35, %c8] : memref<8x32xf32, #tpu.memory_space<vmem>>, vector<8x8xf32>
    tpu.vector_store %arg5[%c0_35, %c8], %94 {strides = array<i32>} : memref<8x32xf32, #tpu.memory_space<vmem>>, vector<8x8xf32>,
    %96 = vector.extract_strided_slice %89 {offsets = [2, 0, 0], sizes = [1, 8, 8], strides = [1, 1, 1]} : vector<4x8x8xf32> to vector<1x8x8xf32>
    %97 = vector.shape_cast %96 : vector<1x8x8xf32> to vector<8x8xf32>
    %c0_36 = arith.constant 0 : index
    %c16 = arith.constant 16 : index
    %98 = vector.load %arg5[%c0_36, %c16] : memref<8x32xf32, #tpu.memory_space<vmem>>, vector<8x8xf32>
    tpu.vector_store %arg5[%c0_36, %c16], %97 {strides = array<i32>} : memref<8x32xf32, #tpu.memory_space<vmem>>, vector<8x8xf32>,
    %99 = vector.extract_strided_slice %89 {offsets = [3, 0, 0], sizes = [1, 8, 8], strides = [1, 1, 1]} : vector<4x8x8xf32> to vector<1x8x8xf32>
    %100 = vector.shape_cast %99 : vector<1x8x8xf32> to vector<8x8xf32>
    %c0_37 = arith.constant 0 : index
    %c24 = arith.constant 24 : index
    %101 = vector.load %arg5[%c0_37, %c24] : memref<8x32xf32, #tpu.memory_space<vmem>>, vector<8x8xf32>
    tpu.vector_store %arg5[%c0_37, %c24], %100 {strides = array<i32>} : memref<8x32xf32, #tpu.memory_space<vmem>>, vector<8x8xf32>,
    %c0_38 = arith.constant 0 : index
    %c0_39 = arith.constant 0 : index
    %102 = vector.load %arg5[%c0_38, %c0_39] : memref<8x32xf32, #tpu.memory_space<vmem>>, vector<8x32xf32>
    %cst_40 = arith.constant dense<0.000000e+00> : vector<8x32xf32>
    %103 = tpu.matmul %102, %3, %cst_40 {dimension_numbers = #tpu.dot_dimension_numbers<[1], [0], [0], [1], [0, 0, 1, 1], [], []>} : vector<8x32xf32>, vector<32x32xf32>, vector<8x32xf32> -> vector<8x32xf32>
    %104 = vector.broadcast %13 : vector<1x32xf32> to vector<8x32xf32>
    %105 = arith.addf %103, %104 : vector<8x32xf32>
    %106 = arith.addf %18, %105 : vector<8x32xf32>
    %cst_41 = arith.constant dense<0.000000e+00> : vector<8xf32>
    %107 = vector.multi_reduction <add>, %106, %cst_41 [1] : vector<8x32xf32> to vector<8xf32>
    %108 = vector.shape_cast %107 : vector<8xf32> to vector<8x1xf32>
    %cst_42 = arith.constant 3.200000e+01 : f32
    %109 = vector.broadcast %cst_42 : f32 to vector<8x1xf32>
    %110 = arith.divf %108, %109 : vector<8x1xf32>
    %111 = vector.broadcast %110 : vector<8x1xf32> to vector<8x32xf32>
    %112 = arith.subf %106, %111 : vector<8x32xf32>
    %113 = arith.mulf %112, %112 : vector<8x32xf32>
    %cst_43 = arith.constant dense<0.000000e+00> : vector<8xf32>
    %114 = vector.multi_reduction <add>, %113, %cst_43 [1] : vector<8x32xf32> to vector<8xf32>
    %115 = vector.shape_cast %114 : vector<8xf32> to vector<8x1xf32>
    %cst_44 = arith.constant 3.200000e+01 : f32
    %116 = vector.broadcast %cst_44 : f32 to vector<8x1xf32>
    %117 = arith.divf %115, %116 : vector<8x1xf32>
    %118 = vector.broadcast %110 : vector<8x1xf32> to vector<8x32xf32>
    %119 = arith.subf %106, %118 : vector<8x32xf32>
    %cst_45 = arith.constant 9.99999974E-6 : f32
    %120 = vector.broadcast %cst_45 : f32 to vector<8x1xf32>
    %121 = arith.addf %117, %120 : vector<8x1xf32>
    %122 = math.rsqrt %121 : vector<8x1xf32>
    %123 = vector.broadcast %122 : vector<8x1xf32> to vector<8x32xf32>
    %124 = arith.mulf %119, %123 : vector<8x32xf32>
    %125 = vector.broadcast %8 : vector<1x32xf32> to vector<8x32xf32>
    %126 = arith.mulf %124, %125 : vector<8x32xf32>
    %127 = vector.broadcast %9 : vector<1x32xf32> to vector<8x32xf32>
    %128 = arith.addf %126, %127 : vector<8x32xf32>
    %cst_46 = arith.constant dense<0.000000e+00> : vector<8x64xf32>
    %129 = tpu.matmul %128, %15, %cst_46 {dimension_numbers = #tpu.dot_dimension_numbers<[1], [0], [0], [1], [0, 0, 1, 1], [], []>} : vector<8x32xf32>, vector<32x64xf32>, vector<8x64xf32> -> vector<8x64xf32>
    %130 = vector.broadcast %16 : vector<1x64xf32> to vector<8x64xf32>
    %131 = arith.addf %129, %130 : vector<8x64xf32>
    %cst_47 = arith.constant 5.000000e-01 : f32
    %132 = vector.broadcast %cst_47 : f32 to vector<8x64xf32>
    %133 = arith.mulf %132, %131 : vector<8x64xf32>
    %cst_48 = arith.constant 4.471500e-02 : f32
    %134 = vector.broadcast %cst_48 : f32 to vector<8x64xf32>
    %135 = arith.mulf %134, %131 : vector<8x64xf32>
    %136 = arith.mulf %135, %131 : vector<8x64xf32>
    %137 = arith.mulf %136, %131 : vector<8x64xf32>
    %138 = arith.addf %131, %137 : vector<8x64xf32>
    %cst_49 = arith.constant 0.797884583 : f32
    %139 = vector.broadcast %cst_49 : f32 to vector<8x64xf32>
    %140 = arith.mulf %139, %138 : vector<8x64xf32>
    %141 = math.tanh %140 : vector<8x64xf32>
    %cst_50 = arith.constant 1.000000e+00 : f32
    %142 = vector.broadcast %cst_50 : f32 to vector<8x64xf32>
    %143 = arith.addf %142, %141 : vector<8x64xf32>
    %144 = arith.mulf %133, %143 : vector<8x64xf32>
    %cst_51 = arith.constant dense<0.000000e+00> : vector<8x32xf32>
    %145 = tpu.matmul %144, %4, %cst_51 {dimension_numbers = #tpu.dot_dimension_numbers<[1], [0], [0], [1], [0, 0, 1, 1], [], []>} : vector<8x64xf32>, vector<64x32xf32>, vector<8x32xf32> -> vector<8x32xf32>
    %146 = vector.broadcast %14 : vector<1x32xf32> to vector<8x32xf32>
    %147 = arith.addf %145, %146 : vector<8x32xf32>
    %148 = arith.addf %106, %147 : vector<8x32xf32>
    %c1_i32 = arith.constant 1 : i32
    %cst_52 = arith.constant dense<0.000000e+00> : vector<8xf32>
    %149 = vector.multi_reduction <add>, %148, %cst_52 [1] : vector<8x32xf32> to vector<8xf32>
    %150 = vector.shape_cast %149 : vector<8xf32> to vector<8x1xf32>
    %cst_53 = arith.constant 3.200000e+01 : f32
    %151 = vector.broadcast %cst_53 : f32 to vector<8x1xf32>
    %152 = arith.divf %150, %151 : vector<8x1xf32>
    %153 = vector.broadcast %152 : vector<8x1xf32> to vector<8x32xf32>
    %154 = arith.subf %148, %153 : vector<8x32xf32>
    %155 = arith.mulf %154, %154 : vector<8x32xf32>
    %cst_54 = arith.constant dense<0.000000e+00> : vector<8xf32>
    %156 = vector.multi_reduction <add>, %155, %cst_54 [1] : vector<8x32xf32> to vector<8xf32>
    %157 = vector.shape_cast %156 : vector<8xf32> to vector<8x1xf32>
    %cst_55 = arith.constant 3.200000e+01 : f32
    %158 = vector.broadcast %cst_55 : f32 to vector<8x1xf32>
    %159 = arith.divf %157, %158 : vector<8x1xf32>
    %160 = vector.broadcast %152 : vector<8x1xf32> to vector<8x32xf32>
    %161 = arith.subf %148, %160 : vector<8x32xf32>
    %cst_56 = arith.constant 9.99999974E-6 : f32
    %162 = vector.broadcast %cst_56 : f32 to vector<8x1xf32>
    %163 = arith.addf %159, %162 : vector<8x1xf32>
    %164 = math.rsqrt %163 : vector<8x1xf32>
    %165 = vector.broadcast %164 : vector<8x1xf32> to vector<8x32xf32>
    %166 = arith.mulf %161, %165 : vector<8x32xf32>
    %167 = vector.broadcast %6 : vector<1x32xf32> to vector<8x32xf32>
    %168 = arith.mulf %166, %167 : vector<8x32xf32>
    %169 = vector.broadcast %7 : vector<1x32xf32> to vector<8x32xf32>
    %170 = arith.addf %168, %169 : vector<8x32xf32>
    %cst_57 = arith.constant dense<0.000000e+00> : vector<8x32xf32>
    %171 = tpu.matmul %170, %0, %cst_57 {dimension_numbers = #tpu.dot_dimension_numbers<[1], [0], [0], [1], [0, 0, 1, 1], [], []>} : vector<8x32xf32>, vector<32x32xf32>, vector<8x32xf32> -> vector<8x32xf32>
    %172 = vector.broadcast %10 : vector<1x32xf32> to vector<8x32xf32>
    %173 = arith.addf %171, %172 : vector<8x32xf32>
    %cst_58 = arith.constant dense<0.000000e+00> : vector<8x32xf32>
    %174 = tpu.matmul %170, %1, %cst_58 {dimension_numbers = #tpu.dot_dimension_numbers<[1], [0], [0], [1], [0, 0, 1, 1], [], []>} : vector<8x32xf32>, vector<32x32xf32>, vector<8x32xf32> -> vector<8x32xf32>
    %175 = vector.broadcast %11 : vector<1x32xf32> to vector<8x32xf32>
    %176 = arith.addf %174, %175 : vector<8x32xf32>
    %cst_59 = arith.constant dense<0.000000e+00> : vector<8x32xf32>
    %177 = tpu.matmul %170, %2, %cst_59 {dimension_numbers = #tpu.dot_dimension_numbers<[1], [0], [0], [1], [0, 0, 1, 1], [], []>} : vector<8x32xf32>, vector<32x32xf32>, vector<8x32xf32> -> vector<8x32xf32>
    %178 = vector.broadcast %12 : vector<1x32xf32> to vector<8x32xf32>
    %179 = arith.addf %177, %178 : vector<8x32xf32>
    %180 = vector.extract_strided_slice %173 {offsets = [0, 0], sizes = [8, 8], strides = [1, 1]} : vector<8x32xf32> to vector<8x8xf32>
    %181 = vector.extract_strided_slice %173 {offsets = [0, 8], sizes = [8, 8], strides = [1, 1]} : vector<8x32xf32> to vector<8x8xf32>
    %182 = vector.extract_strided_slice %173 {offsets = [0, 16], sizes = [8, 8], strides = [1, 1]} : vector<8x32xf32> to vector<8x8xf32>
    %183 = vector.extract_strided_slice %173 {offsets = [0, 24], sizes = [8, 8], strides = [1, 1]} : vector<8x32xf32> to vector<8x8xf32>
    %184 = vector.shape_cast %180 : vector<8x8xf32> to vector<1x8x8xf32>
    %185 = vector.shape_cast %181 : vector<8x8xf32> to vector<1x8x8xf32>
    %186 = vector.shape_cast %182 : vector<8x8xf32> to vector<1x8x8xf32>
    %187 = vector.shape_cast %183 : vector<8x8xf32> to vector<1x8x8xf32>
    %188 = tpu.concatenate %184, %185, %186, %187 in 0 : vector<1x8x8xf32>, vector<1x8x8xf32>, vector<1x8x8xf32>, vector<1x8x8xf32> -> vector<4x8x8xf32>
    %189 = vector.extract_strided_slice %176 {offsets = [0, 0], sizes = [8, 8], strides = [1, 1]} : vector<8x32xf32> to vector<8x8xf32>
    %190 = vector.extract_strided_slice %176 {offsets = [0, 8], sizes = [8, 8], strides = [1, 1]} : vector<8x32xf32> to vector<8x8xf32>
    %191 = vector.extract_strided_slice %176 {offsets = [0, 16], sizes = [8, 8], strides = [1, 1]} : vector<8x32xf32> to vector<8x8xf32>
    %192 = vector.extract_strided_slice %176 {offsets = [0, 24], sizes = [8, 8], strides = [1, 1]} : vector<8x32xf32> to vector<8x8xf32>
    %193 = vector.shape_cast %189 : vector<8x8xf32> to vector<1x8x8xf32>
    %194 = vector.shape_cast %190 : vector<8x8xf32> to vector<1x8x8xf32>
    %195 = vector.shape_cast %191 : vector<8x8xf32> to vector<1x8x8xf32>
    %196 = vector.shape_cast %192 : vector<8x8xf32> to vector<1x8x8xf32>
    %197 = tpu.concatenate %193, %194, %195, %196 in 0 : vector<1x8x8xf32>, vector<1x8x8xf32>, vector<1x8x8xf32>, vector<1x8x8xf32> -> vector<4x8x8xf32>
    %198 = vector.extract_strided_slice %179 {offsets = [0, 0], sizes = [8, 8], strides = [1, 1]} : vector<8x32xf32> to vector<8x8xf32>
    %199 = vector.extract_strided_slice %179 {offsets = [0, 8], sizes = [8, 8], strides = [1, 1]} : vector<8x32xf32> to vector<8x8xf32>
    %200 = vector.extract_strided_slice %179 {offsets = [0, 16], sizes = [8, 8], strides = [1, 1]} : vector<8x32xf32> to vector<8x8xf32>
    %201 = vector.extract_strided_slice %179 {offsets = [0, 24], sizes = [8, 8], strides = [1, 1]} : vector<8x32xf32> to vector<8x8xf32>
    %202 = vector.shape_cast %198 : vector<8x8xf32> to vector<1x8x8xf32>
    %203 = vector.shape_cast %199 : vector<8x8xf32> to vector<1x8x8xf32>
    %204 = vector.shape_cast %200 : vector<8x8xf32> to vector<1x8x8xf32>
    %205 = vector.shape_cast %201 : vector<8x8xf32> to vector<1x8x8xf32>
    %206 = tpu.concatenate %202, %203, %204, %205 in 0 : vector<1x8x8xf32>, vector<1x8x8xf32>, vector<1x8x8xf32>, vector<1x8x8xf32> -> vector<4x8x8xf32>
    "tpu.trace_start"() <{level = 10 : i32, message = "hqd,hkd->hqk"}> : () -> ()
    %cst_60 = arith.constant dense<0.000000e+00> : vector<4x8x8xf32>
    %207 = tpu.matmul %188, %197, %cst_60 {dimension_numbers = #tpu.dot_dimension_numbers<[2], [2], [1], [1], [0, 0, 0, 1, 1, 1], [0], [0]>} : vector<4x8x8xf32>, vector<4x8x8xf32>, vector<4x8x8xf32> -> vector<4x8x8xf32>
    "tpu.trace_stop"() : () -> ()
    %cst_61 = arith.constant 0.353553385 : f32
    %208 = vector.broadcast %cst_61 : f32 to vector<4x8x8xf32>
    %209 = arith.mulf %207, %208 : vector<4x8x8xf32>
    %cst_62 = arith.constant dense<0xFF800000> : vector<4x8xf32>
    %210 = vector.multi_reduction <maximumf>, %209, %cst_62 [2] : vector<4x8x8xf32> to vector<4x8xf32>
    %211 = vector.shape_cast %210 : vector<4x8xf32> to vector<4x8x1xf32>
    %212 = vector.broadcast %211 : vector<4x8x1xf32> to vector<4x8x8xf32>
    %213 = arith.subf %209, %212 : vector<4x8x8xf32>
    %214 = math.exp %213 : vector<4x8x8xf32>
    %cst_63 = arith.constant dense<0.000000e+00> : vector<4x8xf32>
    %215 = vector.multi_reduction <add>, %214, %cst_63 [2] : vector<4x8x8xf32> to vector<4x8xf32>
    %216 = vector.shape_cast %215 : vector<4x8xf32> to vector<4x8x1xf32>
    %217 = vector.broadcast %216 : vector<4x8x1xf32> to vector<4x8x8xf32>
    %218 = arith.divf %214, %217 : vector<4x8x8xf32>
    "tpu.trace_start"() <{level = 10 : i32, message = "hqk,hkd->hqd"}> : () -> ()
    %cst_64 = arith.constant dense<0.000000e+00> : vector<4x8x8xf32>
    %219 = tpu.matmul %218, %206, %cst_64 {dimension_numbers = #tpu.dot_dimension_numbers<[2], [1], [1], [2], [0, 0, 0, 1, 1, 2], [0], [0]>} : vector<4x8x8xf32>, vector<4x8x8xf32>, vector<4x8x8xf32> -> vector<4x8x8xf32>
    "tpu.trace_stop"() : () -> ()
    %220 = vector.extract_strided_slice %219 {offsets = [0, 0, 0], sizes = [1, 8, 8], strides = [1, 1, 1]} : vector<4x8x8xf32> to vector<1x8x8xf32>
    %221 = vector.shape_cast %220 : vector<1x8x8xf32> to vector<8x8xf32>
    %c0_65 = arith.constant 0 : index
    %c0_66 = arith.constant 0 : index
    %222 = vector.load %arg5[%c0_65, %c0_66] : memref<8x32xf32, #tpu.memory_space<vmem>>, vector<8x8xf32>
    tpu.vector_store %arg5[%c0_65, %c0_66], %221 {strides = array<i32>} : memref<8x32xf32, #tpu.memory_space<vmem>>, vector<8x8xf32>,
    %223 = vector.extract_strided_slice %219 {offsets = [1, 0, 0], sizes = [1, 8, 8], strides = [1, 1, 1]} : vector<4x8x8xf32> to vector<1x8x8xf32>
    %224 = vector.shape_cast %223 : vector<1x8x8xf32> to vector<8x8xf32>
    %c0_67 = arith.constant 0 : index
    %c8_68 = arith.constant 8 : index
    %225 = vector.load %arg5[%c0_67, %c8_68] : memref<8x32xf32, #tpu.memory_space<vmem>>, vector<8x8xf32>
    tpu.vector_store %arg5[%c0_67, %c8_68], %224 {strides = array<i32>} : memref<8x32xf32, #tpu.memory_space<vmem>>, vector<8x8xf32>,
    %226 = vector.extract_strided_slice %219 {offsets = [2, 0, 0], sizes = [1, 8, 8], strides = [1, 1, 1]} : vector<4x8x8xf32> to vector<1x8x8xf32>
    %227 = vector.shape_cast %226 : vector<1x8x8xf32> to vector<8x8xf32>
    %c0_69 = arith.constant 0 : index
    %c16_70 = arith.constant 16 : index
    %228 = vector.load %arg5[%c0_69, %c16_70] : memref<8x32xf32, #tpu.memory_space<vmem>>, vector<8x8xf32>
    tpu.vector_store %arg5[%c0_69, %c16_70], %227 {strides = array<i32>} : memref<8x32xf32, #tpu.memory_space<vmem>>, vector<8x8xf32>,
    %229 = vector.extract_strided_slice %219 {offsets = [3, 0, 0], sizes = [1, 8, 8], strides = [1, 1, 1]} : vector<4x8x8xf32> to vector<1x8x8xf32>
    %230 = vector.shape_cast %229 : vector<1x8x8xf32> to vector<8x8xf32>
    %c0_71 = arith.constant 0 : index
    %c24_72 = arith.constant 24 : index
    %231 = vector.load %arg5[%c0_71, %c24_72] : memref<8x32xf32, #tpu.memory_space<vmem>>, vector<8x8xf32>
    tpu.vector_store %arg5[%c0_71, %c24_72], %230 {strides = array<i32>} : memref<8x32xf32, #tpu.memory_space<vmem>>, vector<8x8xf32>,
    %c0_73 = arith.constant 0 : index
    %c0_74 = arith.constant 0 : index
    %232 = vector.load %arg5[%c0_73, %c0_74] : memref<8x32xf32, #tpu.memory_space<vmem>>, vector<8x32xf32>
    %cst_75 = arith.constant dense<0.000000e+00> : vector<8x32xf32>
    %233 = tpu.matmul %232, %3, %cst_75 {dimension_numbers = #tpu.dot_dimension_numbers<[1], [0], [0], [1], [0, 0, 1, 1], [], []>} : vector<8x32xf32>, vector<32x32xf32>, vector<8x32xf32> -> vector<8x32xf32>
    %234 = vector.broadcast %13 : vector<1x32xf32> to vector<8x32xf32>
    %235 = arith.addf %233, %234 : vector<8x32xf32>
    %236 = arith.addf %148, %235 : vector<8x32xf32>
    %cst_76 = arith.constant dense<0.000000e+00> : vector<8xf32>
    %237 = vector.multi_reduction <add>, %236, %cst_76 [1] : vector<8x32xf32> to vector<8xf32>
    %238 = vector.shape_cast %237 : vector<8xf32> to vector<8x1xf32>
    %cst_77 = arith.constant 3.200000e+01 : f32
    %239 = vector.broadcast %cst_77 : f32 to vector<8x1xf32>
    %240 = arith.divf %238, %239 : vector<8x1xf32>
    %241 = vector.broadcast %240 : vector<8x1xf32> to vector<8x32xf32>
    %242 = arith.subf %236, %241 : vector<8x32xf32>
    %243 = arith.mulf %242, %242 : vector<8x32xf32>
    %cst_78 = arith.constant dense<0.000000e+00> : vector<8xf32>
    %244 = vector.multi_reduction <add>, %243, %cst_78 [1] : vector<8x32xf32> to vector<8xf32>
    %245 = vector.shape_cast %244 : vector<8xf32> to vector<8x1xf32>
    %cst_79 = arith.constant 3.200000e+01 : f32
    %246 = vector.broadcast %cst_79 : f32 to vector<8x1xf32>
    %247 = arith.divf %245, %246 : vector<8x1xf32>
    %248 = vector.broadcast %240 : vector<8x1xf32> to vector<8x32xf32>
    %249 = arith.subf %236, %248 : vector<8x32xf32>
    %cst_80 = arith.constant 9.99999974E-6 : f32
    %250 = vector.broadcast %cst_80 : f32 to vector<8x1xf32>
    %251 = arith.addf %247, %250 : vector<8x1xf32>
    %252 = math.rsqrt %251 : vector<8x1xf32>
    %253 = vector.broadcast %252 : vector<8x1xf32> to vector<8x32xf32>
    %254 = arith.mulf %249, %253 : vector<8x32xf32>
    %255 = vector.broadcast %8 : vector<1x32xf32> to vector<8x32xf32>
    %256 = arith.mulf %254, %255 : vector<8x32xf32>
    %257 = vector.broadcast %9 : vector<1x32xf32> to vector<8x32xf32>
    %258 = arith.addf %256, %257 : vector<8x32xf32>
    %cst_81 = arith.constant dense<0.000000e+00> : vector<8x64xf32>
    %259 = tpu.matmul %258, %15, %cst_81 {dimension_numbers = #tpu.dot_dimension_numbers<[1], [0], [0], [1], [0, 0, 1, 1], [], []>} : vector<8x32xf32>, vector<32x64xf32>, vector<8x64xf32> -> vector<8x64xf32>
    %260 = vector.broadcast %16 : vector<1x64xf32> to vector<8x64xf32>
    %261 = arith.addf %259, %260 : vector<8x64xf32>
    %cst_82 = arith.constant 5.000000e-01 : f32
    %262 = vector.broadcast %cst_82 : f32 to vector<8x64xf32>
    %263 = arith.mulf %262, %261 : vector<8x64xf32>
    %cst_83 = arith.constant 4.471500e-02 : f32
    %264 = vector.broadcast %cst_83 : f32 to vector<8x64xf32>
    %265 = arith.mulf %264, %261 : vector<8x64xf32>
    %266 = arith.mulf %265, %261 : vector<8x64xf32>
    %267 = arith.mulf %266, %261 : vector<8x64xf32>
    %268 = arith.addf %261, %267 : vector<8x64xf32>
    %cst_84 = arith.constant 0.797884583 : f32
    %269 = vector.broadcast %cst_84 : f32 to vector<8x64xf32>
    %270 = arith.mulf %269, %268 : vector<8x64xf32>
    %271 = math.tanh %270 : vector<8x64xf32>
    %cst_85 = arith.constant 1.000000e+00 : f32
    %272 = vector.broadcast %cst_85 : f32 to vector<8x64xf32>
    %273 = arith.addf %272, %271 : vector<8x64xf32>
    %274 = arith.mulf %263, %273 : vector<8x64xf32>
    %cst_86 = arith.constant dense<0.000000e+00> : vector<8x32xf32>
    %275 = tpu.matmul %274, %4, %cst_86 {dimension_numbers = #tpu.dot_dimension_numbers<[1], [0], [0], [1], [0, 0, 1, 1], [], []>} : vector<8x64xf32>, vector<64x32xf32>, vector<8x32xf32> -> vector<8x32xf32>
    %276 = vector.broadcast %14 : vector<1x32xf32> to vector<8x32xf32>
    %277 = arith.addf %275, %276 : vector<8x32xf32>
    %278 = arith.addf %236, %277 : vector<8x32xf32>
    %c0_87 = arith.constant 0 : index
    %c0_88 = arith.constant 0 : index
    %279 = vector.load %arg4[%c0_87, %c0_88] : memref<8x32xf32, #tpu.memory_space<vmem>>, vector<8x32xf32>
    tpu.vector_store %arg4[%c0_87, %c0_88], %278 {strides = array<i32>} : memref<8x32xf32, #tpu.memory_space<vmem>>, vector<8x32xf32>,
    return
  }
  func.func @transform_0(%arg0: i32) -> (i32, i32) {
    %c0_i32 = arith.constant 0 : i32
    %c0_i32_0 = arith.constant 0 : i32
    return %arg0, %c0_i32 : i32, i32
  }
  func.func @transform_1(%arg0: i32) -> (i32, i32) {
    %c0_i32 = arith.constant 0 : i32
    %c0_i32_0 = arith.constant 0 : i32
    %c0_i32_1 = arith.constant 0 : i32
    return %c0_i32, %c0_i32_0 : i32, i32
  }
  func.func @transform_2(%arg0: i32) -> (i32, i32) {
    %c0_i32 = arith.constant 0 : i32
    %c0_i32_0 = arith.constant 0 : i32
    %c0_i32_1 = arith.constant 0 : i32
    return %c0_i32, %c0_i32_0 : i32, i32
  }
  func.func @transform_3(%arg0: i32) -> (i32, i32) {
    %c0_i32 = arith.constant 0 : i32
    %c0_i32_0 = arith.constant 0 : i32
    return %arg0, %c0_i32 : i32, i32
  }
}

</mosaic_0001>

<llo_original>
// kernel: tpu_custom_call.1
$region0: #{tpu_custom_call.1}
  #allocation0 [shape = 'u32[]', space=smem, size = 0x4, offset = 0x4, fixed_abs, tag = 'smem constant byte address 0x4 - core index']
  #allocation1 [shape = 'u32[144,128]{1,0:T(1,128)}', space=vmem, size = 0x12000, scoped, tag = 'internal scratch']
  #allocation2 [shape = 'f32[8,32]{1,0:T(8,128)}', space=vmem, size = 0x1000, scoped, tag = 'scratch operand']
  %s0 = inlined_call_operand.vmem [shape: f32[16,32], index: 0, kind: input, shape index: {}]
  %s1 = inlined_call_operand.vmem [shape: f32[216,32], index: 1, kind: input, shape index: {}]
  %s2 = inlined_call_operand.vmem [shape: f32[40,64], index: 2, kind: input, shape index: {}]
  %s3 = inlined_call_operand.hbm [shape: f32[16,32], index: 3, kind: output, shape index: {}]
  %s4 = sld [smem:[#allocation0]]
  $region45: #{tpu_custom_call.1} parent=0
    _
  %s6 = ssub.s32 1, %s4
  %s7 = scalar_select 0, %s6, %s4
  $region1: #{tpu_custom_call.1} parent=0
    #allocation3 [shape = 'u8[8192]{0}', space=vmem, size = 0x2000, scoped, tag = 'output window, operand 0']
    #allocation4 [shape = 's32[2]{0}', space=sflag, size = 0x8, scoped, tag = 'scoped memory for tpu_custom_call.1']
    %8 = vsyncpa [#allocation4], 0
    %s9 = scalar_lea.sflag [#allocation4], 1
    %10 = vsyncpa %s9, 0
    loop: start=0, step=1, limit=4
    $region2: #{tpu_custom_call.1} parent=1 // loop_pre_header
      _
    $region3: #{tpu_custom_call.1} parent=1 // loop_header
      %s12 = sphi 0, %s16
      %p13 = scmp.ge.s32.totalorder %s12, 4
      %s22 = sphi 0, %s24
      %s25 = sphi 0, %s22
      %s26 = sphi 0, %s25
      %s42 = sphi 0, %s26
      %s46 = sphi 0, %s46
      %s48 = sphi 0, %s46
      %s49 = sphi 0, %s48
      %s63 = sphi 0, %s49
      %s67 = sphi 0, %s67
      %s69 = sphi 0, %s67
      %s70 = sphi 0, %s69
      %s84 = sphi 0, %s70
      %s90 = sphi 0, %s92
      %s93 = sphi 0, %s90
      %s94 = sphi 0, %s93
      %s110 = sphi 0, %s94
    $region4: #{tpu_custom_call.1} parent=1 // loop_header_branch
      %15 = sbr.rel (%p13) target = $region8
    $region5: #{tpu_custom_call.1} parent=1 // loop_body
      %s17 = ssub.s32 %s12, 1
      %s18 = ssub.s32 %s12, 2
      %s19 = sadd.s32 %s12, 1
      %s20 = ssub.s32 %s12, %s19
      %p21 = scmp.eq.s32.totalorder %s20, 0
      %s23 = sadd.s32 %s22, 1
      %s24 = scalar_select %p21, %s22, %s23
      %p27 = pneg %p21
      %p28 = scmp.eq.s32.totalorder %s12, 1
      %p29 = por %p27, %p28
      %p30 = scmp.ne.s32.totalorder %s22, %s25
      %p31 = scmp.eq.s32.totalorder %s12, 0
      %p32 = por %p30, %p31
      %p33 = scmp.ne.s32.totalorder %s22, %s25
      %p34 = scmp.eq.s32.totalorder %s17, 1
      %p35 = por %p33, %p34
      %p36 = scmp.ne.s32.totalorder %s25, %s26
      %p37 = scmp.eq.s32.totalorder %s17, 0
      %p38 = por %p36, %p37
      %p39 = scmp.ne.s32.totalorder %s25, %s26
      %p40 = scmp.eq.s32.totalorder %s18, 1
      %p41 = por %p39, %p40
      %p43 = scmp.ne.s32.totalorder %s26, %s42
      %p44 = scmp.eq.s32.totalorder %s18, 0
      %p45 = por %p43, %p44
      %s47 = sadd.s32 %s46, 1
      %p50 = scmp.eq.s32.totalorder %s12, 1
      %p51 = scmp.ne.s32.totalorder %s46, %s48
      %p52 = scmp.eq.s32.totalorder %s12, 0
      %p53 = por %p51, %p52
      %p54 = scmp.ne.s32.totalorder %s46, %s48
      %p55 = scmp.eq.s32.totalorder %s17, 1
      %p56 = por %p54, %p55
      %p57 = scmp.ne.s32.totalorder %s48, %s49
      %p58 = scmp.eq.s32.totalorder %s17, 0
      %p59 = por %p57, %p58
      %p60 = scmp.ne.s32.totalorder %s48, %s49
      %p61 = scmp.eq.s32.totalorder %s18, 1
      %p62 = por %p60, %p61
      %p64 = scmp.ne.s32.totalorder %s49, %s63
      %p65 = scmp.eq.s32.totalorder %s18, 0
      %p66 = por %p64, %p65
      %s68 = sadd.s32 %s67, 1
      %p71 = scmp.eq.s32.totalorder %s12, 1
      %p72 = scmp.ne.s32.totalorder %s67, %s69
      %p73 = scmp.eq.s32.totalorder %s12, 0
      %p74 = por %p72, %p73
      %p75 = scmp.ne.s32.totalorder %s67, %s69
      %p76 = scmp.eq.s32.totalorder %s17, 1
      %p77 = por %p75, %p76
      %p78 = scmp.ne.s32.totalorder %s69, %s70
      %p79 = scmp.eq.s32.totalorder %s17, 0
      %p80 = por %p78, %p79
      %p81 = scmp.ne.s32.totalorder %s69, %s70
      %p82 = scmp.eq.s32.totalorder %s18, 1
      %p83 = por %p81, %p82
      %p85 = scmp.ne.s32.totalorder %s70, %s84
      %p86 = scmp.eq.s32.totalorder %s18, 0
      %p87 = por %p85, %p86
      %s88 = ssub.s32 %s12, %s19
      %p89 = scmp.eq.s32.totalorder %s88, 0
      %s91 = sadd.s32 %s90, 1
      %s92 = scalar_select %p89, %s90, %s91
      %p95 = pneg %p89
      %p96 = scmp.eq.s32.totalorder %s12, 1
      %p97 = por %p95, %p96
      %p98 = scmp.ne.s32.totalorder %s90, %s93
      %p99 = scmp.eq.s32.totalorder %s12, 0
      %p100 = por %p98, %p99
      %p101 = scmp.ne.s32.totalorder %s90, %s93
      %p102 = scmp.eq.s32.totalorder %s17, 1
      %p103 = por %p101, %p102
      %p104 = scmp.ne.s32.totalorder %s93, %s94
      %p105 = scmp.eq.s32.totalorder %s17, 0
      %p106 = por %p104, %p105
      %p107 = scmp.ne.s32.totalorder %s93, %s94
      %p108 = scmp.eq.s32.totalorder %s18, 1
      %p109 = por %p107, %p108
      %p111 = scmp.ne.s32.totalorder %s94, %s110
      %p112 = scmp.eq.s32.totalorder %s18, 0
      %p113 = por %p111, %p112
      %p114 = scmp.le.s32.totalorder 1, %s12
      %p115 = scmp.lt.s32.totalorder %s12, 3
      %p116 = pnand %p114, %p115
      %p117 = pneg %p116
      // Predicated region
      $region9: #{tpu_custom_call.1} parent=5 // pred_check
        _
      $region10: #{tpu_custom_call.1} parent=5 // pred_check_branch
        %119 = sbr.rel (%p116) target = $region12
      $region11: #{tpu_custom_call.1} parent=5 // pred_region
        %s120 = ssub.s32 %s12, 1
        // Predicated region
        $region13: #{tpu_custom_call.1} parent=11 // pred_check
          %p121 = pneg %p59
        $region14: #{tpu_custom_call.1} parent=11 // pred_check_branch
          %123 = sbr.rel (%p121) target = $region16
        $region15: #{tpu_custom_call.1} parent=11 // pred_region
          _
        $region16: #{tpu_custom_call.1} parent=11 // pred_fallthru
          _
        // Predicated region
        $region17: #{tpu_custom_call.1} parent=11 // pred_check
          %p124 = pneg %p80
        $region18: #{tpu_custom_call.1} parent=11 // pred_check_branch
          %126 = sbr.rel (%p124) target = $region20
        $region19: #{tpu_custom_call.1} parent=11 // pred_region
          _
        $region20: #{tpu_custom_call.1} parent=11 // pred_fallthru
          _
      $region12: #{tpu_custom_call.1} parent=5 // pred_fallthru
        _
      %p127 = scmp.lt.s32.totalorder %s12, 2
      // Predicated region
      $region21: #{tpu_custom_call.1} parent=5 // pred_check
        %p128 = pneg %p127
      $region22: #{tpu_custom_call.1} parent=5 // pred_check_branch
        %130 = sbr.rel (%p128) target = $region24
      $region23: #{tpu_custom_call.1} parent=5 // pred_region
        // Predicated region
        $region25: #{tpu_custom_call.1} parent=23 // pred_check
          %p131 = pneg %p32
        $region26: #{tpu_custom_call.1} parent=23 // pred_check_branch
          %133 = sbr.rel (%p131) target = $region28
        $region27: #{tpu_custom_call.1} parent=23 // pred_region
          %p134 = scmp.lt.s32.totalorder %s12, 1
          %s135 = scalar_select %p134, %s12, 1
          %s136 = smul.addr %s135, 8
          %s137 = scalar_lea.vmem %s0, %s136
        $region28: #{tpu_custom_call.1} parent=23 // pred_fallthru
          _
      $region24: #{tpu_custom_call.1} parent=5 // pred_fallthru
        _
      %p138 = scmp.le.s32.totalorder 1, %s12
      %p139 = scmp.lt.s32.totalorder %s12, 3
      %p140 = pnand %p138, %p139
      %p141 = pneg %p140
      // Predicated region
      $region29: #{tpu_custom_call.1} parent=5 // pred_check
        _
      $region30: #{tpu_custom_call.1} parent=5 // pred_check_branch
        %143 = sbr.rel (%p140) target = $region32
      $region31: #{tpu_custom_call.1} parent=5 // pred_region
        %s144 = ssub.s32 %s12, 1
        %p145 = scmp.lt.s32.totalorder %s17, 1
        %s146 = scalar_select %p145, %s17, 1
        %s147 = smul.addr %s146, 8
        %s148 = scalar_lea.vmem %s0, %s147
        %p149 = pneg %p38
        %p150 = pneg %p35
        %p151 = pneg %p59
        %p152 = pneg %p56
        %p153 = pneg %p80
        %p154 = pneg %p77
        %p155 = pneg %p106
        %p156 = pneg %p103
        %s157 = sand.u32 %s93, 1
        %s158 = scalar_lea.sflag [#allocation4], %s157
        %s159 = sand.u32 %s93, 1
        %s160 = smul.addr %s159, 8
        %s161 = scalar_lea.vmem [#allocation3], %s160
        %p162 = scmp.lt.s32.totalorder %s17, 1
        %s163 = scalar_select %p162, %s17, 1
        %s164 = smul.addr %s163, 8
        %s165 = scalar_lea.vmem %s0, %s164
        %v166 = vld [vmem:[%s1] sm:$0xff]
        %v167 = vld [vmem:[%s1 + $0x8] sm:$0xff]
        %v168 = vld [vmem:[%s1 + $0x10] sm:$0xff]
        %v169 = vld [vmem:[%s1 + $0x18] sm:$0xff]
        %v170 = vld [vmem:[%s1 + $0x20] sm:$0xff]
        %v171 = vld [vmem:[%s1 + $0x28] sm:$0xff]
        %v172 = vld [vmem:[%s1 + $0x30] sm:$0xff]
        %v173 = vld [vmem:[%s1 + $0x38] sm:$0xff]
        %v174 = vld [vmem:[%s1 + $0x40] sm:$0xff]
        %v175 = vld [vmem:[%s1 + $0x48] sm:$0xff]
        %v176 = vld [vmem:[%s1 + $0x50] sm:$0xff]
        %v177 = vld [vmem:[%s1 + $0x58] sm:$0xff]
        %v178 = vld [vmem:[%s1 + $0x60] sm:$0xff]
        %v179 = vld [vmem:[%s1 + $0x68] sm:$0xff]
        %v180 = vld [vmem:[%s1 + $0x70] sm:$0xff]
        %v181 = vld [vmem:[%s1 + $0x78] sm:$0xff]
        %v182 = vld [vmem:[%s1 + $0x80] sm:$0xff]
        %v183 = vld [vmem:[%s1 + $0x88] sm:$0xff]
        %v184 = vld [vmem:[%s1 + $0x90] sm:$0xff]
        %v185 = vld [vmem:[%s1 + $0x98] sm:$0xff]
        %v186 = vld [vmem:[%s1 + $0xa0] sm:$0xff]
        %v187 = vld [vmem:[%s1 + $0xa8] sm:$0xff]
        %v188 = vld [vmem:[%s1 + $0xb0] sm:$0xff]
        %v189 = vld [vmem:[%s1 + $0xb8] sm:$0xff]
        %v190 = vld [vmem:[%s1 + $0xc0] sm:$0xff]
        %v191 = vld [vmem:[%s1 + $0xc8] sm:$0x1]
        %v192 = vld [vmem:[%s1 + $0xc9] sm:$0x1]
        %v193 = vld [vmem:[%s1 + $0xca] sm:$0x1]
        %v194 = vld [vmem:[%s1 + $0xcb] sm:$0x1]
        %v195 = vld [vmem:[%s1 + $0xcc] sm:$0x1]
        %v196 = vld [vmem:[%s1 + $0xcd] sm:$0x1]
        %v197 = vld [vmem:[%s1 + $0xce] sm:$0x1]
        %v198 = vld [vmem:[%s1 + $0xcf] sm:$0x1]
        %v199 = vld [vmem:[%s1 + $0xd0] sm:$0x1]
        %v200 = vld [vmem:[%s2] sm:$0xff]
        %v201 = vld [vmem:[%s2 + $0x8] sm:$0xff]
        %v202 = vld [vmem:[%s2 + $0x10] sm:$0xff]
        %v203 = vld [vmem:[%s2 + $0x18] sm:$0xff]
        %v204 = vld [vmem:[%s2 + $0x20] sm:$0x1]
        %v205 = vld [vmem:[%s165] sm:$0xff]
        %v206 = vadd.f32 %v205, %v190
        %vm207 = vcmask 261120
        %v208 = vsel %vm207, %v206, 0.0
        %209 = vadd.xlane.f32.xlu0 %v208
        %v210 = vpop.xlane.xlu0 %209
        %v211 = vrcp.pop 32.0
        %v212 = vmul.f32 %v210, %v211
        %v213 = vsub.f32 %v206, %v212
        %v214 = vmul.f32 %v213, %v213
        %v215 = vsel %vm207, %v214, 0.0
        %216 = vadd.xlane.f32.xlu0 %v215
        %v217 = vpop.xlane.xlu0 %216
        %v218 = vmul.f32 %v217, %v211
        %v219 = vadd.f32 %v218, 1e-05
        %v220 = vrsqrt.pop %v219
        %v221 = vmul.f32 %v213, %v220
        %v222 = vlaneseq
        %v223 = vshrl.u32 %v222, 7
        %v224 = vsub.s32 0, %v223
        %v225 = vrot.slane %v191, %v224
        %v226 = vmul.f32 %v221, %v225
        %v227 = vlaneseq
        %v228 = vshrl.u32 %v227, 7
        %v229 = vsub.s32 0, %v228
        %v230 = vrot.slane %v192, %v229
        %v231 = vadd.f32 %v226, %v230
        %v232 = vlaneseq
        %v233 = vshrl.u32 %v232, 7
        %v234 = vsub.s32 0, %v233
        %v235 = vrot.slane %v195, %v234
        %v237 = vsel %vm207, %v231, 0
        %239 = vmatprep.subr.mxu0 0.0
        %240 = vmatpush1.msra.mxu0 %v166
        %241 = vmatprep.subr.mxu0 0.0
        %242 = vmatpush1.msra.mxu0 %v167
        %243 = vmatprep.subr.mxu0 0.0
        %244 = vmatpush1.msra.mxu0 %v168
        %245 = vmatprep.subr.mxu0 0.0
        %246 = vmatpush1.msra.mxu0 %v169
        %247 = vmatprep.subr.mxu0 0.0
        %248 = vmatpush1.msra.mxu0 0.0
        %249 = vmatprep.subr.mxu0 0.0
        %250 = vmatpush1.msra.mxu0 0.0
        %251 = vmatprep.subr.mxu0 0.0
        %252 = vmatpush1.msra.mxu0 0.0
        %253 = vmatprep.subr.mxu0 0.0
        %254 = vmatpush1.msra.mxu0 0.0
        %255 = vmatprep.subr.mxu0 0.0
        %256 = vmatpush1.msra.mxu0 0.0
        %257 = vmatprep.subr.mxu0 0.0
        %258 = vmatpush1.msra.mxu0 0.0
        %259 = vmatprep.subr.mxu0 0.0
        %260 = vmatpush1.msra.mxu0 0.0
        %261 = vmatprep.subr.mxu0 0.0
        %262 = vmatpush1.msra.mxu0 0.0
        %263 = vmatprep.subr.mxu0 0.0
        %264 = vmatpush1.msra.mxu0 0.0
        %265 = vmatprep.subr.mxu0 0.0
        %266 = vmatpush1.msra.mxu0 0.0
        %267 = vmatprep.subr.mxu0 0.0
        %268 = vmatpush1.msra.mxu0 0.0
        %269 = vmatprep.subr.mxu0 0.0
        %270 = vmatpush1.msra.mxu0 0.0
        %271 = vmatprep.subr.mxu0 0.0
        %272 = vmatpush1.msra.mxu0 0.0
        %273 = vmatprep.subr.mxu0 0.0
        %274 = vmatpush1.msra.mxu0 0.0
        %275 = vmatprep.subr.mxu0 0.0
        %276 = vmatpush1.msra.mxu0 0.0
        %277 = vmatprep.subr.mxu0 0.0
        %278 = vmatpush1.msra.mxu0 0.0
        %279 = vmatprep.subr.mxu0 0.0
        %280 = vmatpush1.msra.mxu0 0.0
        %281 = vmatprep.subr.mxu0 0.0
        %282 = vmatpush1.msra.mxu0 0.0
        %283 = vmatprep.subr.mxu0 0.0
        %284 = vmatpush1.msra.mxu0 0.0
        %285 = vmatprep.subr.mxu0 0.0
        %286 = vmatpush1.msra.mxu0 0.0
        %287 = vmatprep.subr.mxu0 0.0
        %288 = vmatpush1.msra.mxu0 0.0
        %289 = vmatprep.subr.mxu0 0.0
        %290 = vmatpush1.msra.mxu0 0.0
        %291 = vmatprep.subr.mxu0 0.0
        %292 = vmatpush1.msra.mxu0 0.0
        %293 = vmatprep.subr.mxu0 0.0
        %294 = vmatpush1.msra.mxu0 0.0
        %295 = vmatprep.subr.mxu0 0.0
        %296 = vmatpush1.msra.mxu0 0.0
        %297 = vmatprep.subr.mxu0 0.0
        %298 = vmatpush1.msra.mxu0 0.0
        %299 = vmatprep.subr.mxu0 0.0
        %300 = vmatpush1.msra.mxu0 0.0
        %301 = vmatprep.subr.mxu0 0.0
        %302 = vmatpush1.msra.mxu0 0.0
        %303 = vmatprep.mubr.f32.mxu0 0.0
        %304 = vmatmul.mubr.f32.gmra.mrb[0].mxu0 %v237
        %v305 = vpop.f32.mrb[0].mxu0
        %v306 = vadd.f32 %v235, %v305
        %v307 = vpop.f32.mrb[0].mxu0
        %308 = vdwg.mxu0
        %v309 = vlaneseq
        %v310 = vshrl.u32 %v309, 7
        %v311 = vsub.s32 0, %v310
        %v312 = vrot.slane %v196, %v311
        %313 = vmatprep.subr.mxu0 0.0
        %314 = vmatpush1.msra.mxu0 %v170
        %315 = vmatprep.subr.mxu0 0.0
        %316 = vmatpush1.msra.mxu0 %v171
        %317 = vmatprep.subr.mxu0 0.0
        %318 = vmatpush1.msra.mxu0 %v172
        %319 = vmatprep.subr.mxu0 0.0
        %320 = vmatpush1.msra.mxu0 %v173
        %321 = vmatprep.subr.mxu0 0.0
        %322 = vmatpush1.msra.mxu0 0.0
        %323 = vmatprep.subr.mxu0 0.0
        %324 = vmatpush1.msra.mxu0 0.0
        %325 = vmatprep.subr.mxu0 0.0
        %326 = vmatpush1.msra.mxu0 0.0
        %327 = vmatprep.subr.mxu0 0.0
        %328 = vmatpush1.msra.mxu0 0.0
        %329 = vmatprep.subr.mxu0 0.0
        %330 = vmatpush1.msra.mxu0 0.0
        %331 = vmatprep.subr.mxu0 0.0
        %332 = vmatpush1.msra.mxu0 0.0
        %333 = vmatprep.subr.mxu0 0.0
        %334 = vmatpush1.msra.mxu0 0.0
        %335 = vmatprep.subr.mxu0 0.0
        %336 = vmatpush1.msra.mxu0 0.0
        %337 = vmatprep.subr.mxu0 0.0
        %338 = vmatpush1.msra.mxu0 0.0
        %339 = vmatprep.subr.mxu0 0.0
        %340 = vmatpush1.msra.mxu0 0.0
        %341 = vmatprep.subr.mxu0 0.0
        %342 = vmatpush1.msra.mxu0 0.0
        %343 = vmatprep.subr.mxu0 0.0
        %344 = vmatpush1.msra.mxu0 0.0
        %345 = vmatprep.subr.mxu0 0.0
        %346 = vmatpush1.msra.mxu0 0.0
        %347 = vmatprep.subr.mxu0 0.0
        %348 = vmatpush1.msra.mxu0 0.0
        %349 = vmatprep.subr.mxu0 0.0
        %350 = vmatpush1.msra.mxu0 0.0
        %351 = vmatprep.subr.mxu0 0.0
        %352 = vmatpush1.msra.mxu0 0.0
        %353 = vmatprep.subr.mxu0 0.0
        %354 = vmatpush1.msra.mxu0 0.0
        %355 = vmatprep.subr.mxu0 0.0
        %356 = vmatpush1.msra.mxu0 0.0
        %357 = vmatprep.subr.mxu0 0.0
        %358 = vmatpush1.msra.mxu0 0.0
        %359 = vmatprep.subr.mxu0 0.0
        %360 = vmatpush1.msra.mxu0 0.0
        %361 = vmatprep.subr.mxu0 0.0
        %362 = vmatpush1.msra.mxu0 0.0
        %363 = vmatprep.subr.mxu0 0.0
        %364 = vmatpush1.msra.mxu0 0.0
        %365 = vmatprep.subr.mxu0 0.0
        %366 = vmatpush1.msra.mxu0 0.0
        %367 = vmatprep.subr.mxu0 0.0
        %368 = vmatpush1.msra.mxu0 0.0
        %369 = vmatprep.subr.mxu0 0.0
        %370 = vmatpush1.msra.mxu0 0.0
        %371 = vmatprep.subr.mxu0 0.0
        %372 = vmatpush1.msra.mxu0 0.0
        %373 = vmatprep.subr.mxu0 0.0
        %374 = vmatpush1.msra.mxu0 0.0
        %375 = vmatprep.subr.mxu0 0.0
        %376 = vmatpush1.msra.mxu0 0.0
        %377 = vmatprep.mubr.f32.mxu0 0.0
        %378 = vmatmul.mubr.f32.gmra.mrb[0].mxu0 %v237
        %v379 = vpop.f32.mrb[0].mxu0
        %v380 = vadd.f32 %v312, %v379
        %v381 = vpop.f32.mrb[0].mxu0
        %382 = vdwg.mxu0
        %v383 = vlaneseq
        %v384 = vshrl.u32 %v383, 7
        %v385 = vsub.s32 0, %v384
        %v386 = vrot.slane %v197, %v385
        %387 = vmatprep.subr.mxu0 0.0
        %388 = vmatpush1.msra.mxu0 %v174
        %389 = vmatprep.subr.mxu0 0.0
        %390 = vmatpush1.msra.mxu0 %v175
        %391 = vmatprep.subr.mxu0 0.0
        %392 = vmatpush1.msra.mxu0 %v176
        %393 = vmatprep.subr.mxu0 0.0
        %394 = vmatpush1.msra.mxu0 %v177
        %395 = vmatprep.subr.mxu0 0.0
        %396 = vmatpush1.msra.mxu0 0.0
        %397 = vmatprep.subr.mxu0 0.0
        %398 = vmatpush1.msra.mxu0 0.0
        %399 = vmatprep.subr.mxu0 0.0
        %400 = vmatpush1.msra.mxu0 0.0
        %401 = vmatprep.subr.mxu0 0.0
        %402 = vmatpush1.msra.mxu0 0.0
        %403 = vmatprep.subr.mxu0 0.0
        %404 = vmatpush1.msra.mxu0 0.0
        %405 = vmatprep.subr.mxu0 0.0
        %406 = vmatpush1.msra.mxu0 0.0
        %407 = vmatprep.subr.mxu0 0.0
        %408 = vmatpush1.msra.mxu0 0.0
        %409 = vmatprep.subr.mxu0 0.0
        %410 = vmatpush1.msra.mxu0 0.0
        %411 = vmatprep.subr.mxu0 0.0
        %412 = vmatpush1.msra.mxu0 0.0
        %413 = vmatprep.subr.mxu0 0.0
        %414 = vmatpush1.msra.mxu0 0.0
        %415 = vmatprep.subr.mxu0 0.0
        %416 = vmatpush1.msra.mxu0 0.0
        %417 = vmatprep.subr.mxu0 0.0
        %418 = vmatpush1.msra.mxu0 0.0
        %419 = vmatprep.subr.mxu0 0.0
        %420 = vmatpush1.msra.mxu0 0.0
        %421 = vmatprep.subr.mxu0 0.0
        %422 = vmatpush1.msra.mxu0 0.0
        %423 = vmatprep.subr.mxu0 0.0
        %424 = vmatpush1.msra.mxu0 0.0
        %425 = vmatprep.subr.mxu0 0.0
        %426 = vmatpush1.msra.mxu0 0.0
        %427 = vmatprep.subr.mxu0 0.0
        %428 = vmatpush1.msra.mxu0 0.0
        %429 = vmatprep.subr.mxu0 0.0
        %430 = vmatpush1.msra.mxu0 0.0
        %431 = vmatprep.subr.mxu0 0.0
        %432 = vmatpush1.msra.mxu0 0.0
        %433 = vmatprep.subr.mxu0 0.0
        %434 = vmatpush1.msra.mxu0 0.0
        %435 = vmatprep.subr.mxu0 0.0
        %436 = vmatpush1.msra.mxu0 0.0
        %437 = vmatprep.subr.mxu0 0.0
        %438 = vmatpush1.msra.mxu0 0.0
        %439 = vmatprep.subr.mxu0 0.0
        %440 = vmatpush1.msra.mxu0 0.0
        %441 = vmatprep.subr.mxu0 0.0
        %442 = vmatpush1.msra.mxu0 0.0
        %443 = vmatprep.subr.mxu0 0.0
        %444 = vmatpush1.msra.mxu0 0.0
        %445 = vmatprep.subr.mxu0 0.0
        %446 = vmatpush1.msra.mxu0 0.0
        %447 = vmatprep.subr.mxu0 0.0
        %448 = vmatpush1.msra.mxu0 0.0
        %449 = vmatprep.subr.mxu0 0.0
        %450 = vmatpush1.msra.mxu0 0.0
        %451 = vmatprep.mubr.f32.mxu0 0.0
        %452 = vmatmul.mubr.f32.gmra.mrb[0].mxu0 %v237
        %v453 = vpop.f32.mrb[0].mxu0
        %v454 = vadd.f32 %v386, %v453
        %v455 = vpop.f32.mrb[0].mxu0
        %456 = vdwg.mxu0
        %458 = vrot.lane.b32.xlu0 %v306, 120
        %v459 = vpop.permute.xlu0 %458
        %460 = vrot.lane.b32.xlu0 %v306, 112
        %v461 = vpop.permute.xlu0 %460
        %462 = vrot.lane.b32.xlu0 %v306, 104
        %v463 = vpop.permute.xlu0 %462
        %465 = vrot.lane.b32.xlu0 %v380, 120
        %v466 = vpop.permute.xlu0 %465
        %467 = vrot.lane.b32.xlu0 %v380, 112
        %v468 = vpop.permute.xlu0 %467
        %469 = vrot.lane.b32.xlu0 %v380, 104
        %v470 = vpop.permute.xlu0 %469
        %472 = vrot.lane.b32.xlu0 %v454, 120
        %v473 = vpop.permute.xlu0 %472
        %475 = vrot.lane.b32.xlu0 %v454, 112
        %v476 = vpop.permute.xlu0 %475
        %478 = vrot.lane.b32.xlu0 %v454, 104
        %v479 = vpop.permute.xlu0 %478
        %vm481 = vcmask 64512
        %v482 = vsel %vm481, %v306, 0
        %v484 = vsel %vm481, %v380, 0
        %486 = vmatprep.subr.mxu0 0.0
        %487 = vmatpush1.xpose.msra.mxu0 %v484
        %488 = vmatprep.subr.mxu0 0.0
        %489 = vmatpush1.xpose.msra.mxu0 0.0
        %490 = vmatprep.subr.mxu0 0.0
        %491 = vmatpush1.xpose.msra.mxu0 0.0
        %492 = vmatprep.subr.mxu0 0.0
        %493 = vmatpush1.xpose.msra.mxu0 0.0
        %494 = vmatprep.subr.mxu0 0.0
        %495 = vmatpush1.xpose.msra.mxu0 0.0
        %496 = vmatprep.subr.mxu0 0.0
        %497 = vmatpush1.xpose.msra.mxu0 0.0
        %498 = vmatprep.subr.mxu0 0.0
        %499 = vmatpush1.xpose.msra.mxu0 0.0
        %500 = vmatprep.subr.mxu0 0.0
        %501 = vmatpush1.xpose.msra.mxu0 0.0
        %502 = vmatprep.subr.mxu0 0.0
        %503 = vmatpush1.xpose.msra.mxu0 0.0
        %504 = vmatprep.subr.mxu0 0.0
        %505 = vmatpush1.xpose.msra.mxu0 0.0
        %506 = vmatprep.subr.mxu0 0.0
        %507 = vmatpush1.xpose.msra.mxu0 0.0
        %508 = vmatprep.subr.mxu0 0.0
        %509 = vmatpush1.xpose.msra.mxu0 0.0
        %510 = vmatprep.subr.mxu0 0.0
        %511 = vmatpush1.xpose.msra.mxu0 0.0
        %512 = vmatprep.subr.mxu0 0.0
        %513 = vmatpush1.xpose.msra.mxu0 0.0
        %514 = vmatprep.subr.mxu0 0.0
        %515 = vmatpush1.xpose.msra.mxu0 0.0
        %516 = vmatprep.subr.mxu0 0.0
        %517 = vmatpush1.xpose.msra.mxu0 0.0
        %518 = vmatprep.subr.mxu0 0.0
        %519 = vmatpush1.xpose.msra.mxu0 0.0
        %520 = vmatprep.subr.mxu0 0.0
        %521 = vmatpush1.xpose.msra.mxu0 0.0
        %522 = vmatprep.subr.mxu0 0.0
        %523 = vmatpush1.xpose.msra.mxu0 0.0
        %524 = vmatprep.subr.mxu0 0.0
        %525 = vmatpush1.xpose.msra.mxu0 0.0
        %526 = vmatprep.subr.mxu0 0.0
        %527 = vmatpush1.xpose.msra.mxu0 0.0
        %528 = vmatprep.subr.mxu0 0.0
        %529 = vmatpush1.xpose.msra.mxu0 0.0
        %530 = vmatprep.subr.mxu0 0.0
        %531 = vmatpush1.xpose.msra.mxu0 0.0
        %532 = vmatprep.subr.mxu0 0.0
        %533 = vmatpush1.xpose.msra.mxu0 0.0
        %534 = vmatprep.subr.mxu0 0.0
        %535 = vmatpush1.xpose.msra.mxu0 0.0
        %536 = vmatprep.subr.mxu0 0.0
        %537 = vmatpush1.xpose.msra.mxu0 0.0
        %538 = vmatprep.subr.mxu0 0.0
        %539 = vmatpush1.xpose.msra.mxu0 0.0
        %540 = vmatprep.subr.mxu0 0.0
        %541 = vmatpush1.xpose.msra.mxu0 0.0
        %542 = vmatprep.subr.mxu0 0.0
        %543 = vmatpush1.xpose.msra.mxu0 0.0
        %544 = vmatprep.subr.mxu0 0.0
        %545 = vmatpush1.xpose.msra.mxu0 0.0
        %546 = vmatprep.subr.mxu0 0.0
        %547 = vmatpush1.xpose.msra.mxu0 0.0
        %548 = vmatprep.subr.mxu0 0.0
        %549 = vmatpush1.xpose.msra.mxu0 0.0
        %550 = vmatprep.mubr.f32.mxu0 0.0
        %551 = vmatmul.mubr.f32.gmra.mrb[0].mxu0 %v482
        %v552 = vpop.f32.mrb[0].mxu0
        %v553 = vadd.f32 0.0, %v552
        %v554 = vpop.f32.mrb[0].mxu0
        %555 = vdwg.mxu0
        %v556 = vsel %vm481, %v459, 0
        %v558 = vsel %vm481, %v466, 0
        %560 = vmatprep.subr.mxu0 0.0
        %561 = vmatpush1.xpose.msra.mxu0 %v558
        %562 = vmatprep.subr.mxu0 0.0
        %563 = vmatpush1.xpose.msra.mxu0 0.0
        %564 = vmatprep.subr.mxu0 0.0
        %565 = vmatpush1.xpose.msra.mxu0 0.0
        %566 = vmatprep.subr.mxu0 0.0
        %567 = vmatpush1.xpose.msra.mxu0 0.0
        %568 = vmatprep.subr.mxu0 0.0
        %569 = vmatpush1.xpose.msra.mxu0 0.0
        %570 = vmatprep.subr.mxu0 0.0
        %571 = vmatpush1.xpose.msra.mxu0 0.0
        %572 = vmatprep.subr.mxu0 0.0
        %573 = vmatpush1.xpose.msra.mxu0 0.0
        %574 = vmatprep.subr.mxu0 0.0
        %575 = vmatpush1.xpose.msra.mxu0 0.0
        %576 = vmatprep.subr.mxu0 0.0
        %577 = vmatpush1.xpose.msra.mxu0 0.0
        %578 = vmatprep.subr.mxu0 0.0
        %579 = vmatpush1.xpose.msra.mxu0 0.0
        %580 = vmatprep.subr.mxu0 0.0
        %581 = vmatpush1.xpose.msra.mxu0 0.0
        %582 = vmatprep.subr.mxu0 0.0
        %583 = vmatpush1.xpose.msra.mxu0 0.0
        %584 = vmatprep.subr.mxu0 0.0
        %585 = vmatpush1.xpose.msra.mxu0 0.0
        %586 = vmatprep.subr.mxu0 0.0
        %587 = vmatpush1.xpose.msra.mxu0 0.0
        %588 = vmatprep.subr.mxu0 0.0
        %589 = vmatpush1.xpose.msra.mxu0 0.0
        %590 = vmatprep.subr.mxu0 0.0
        %591 = vmatpush1.xpose.msra.mxu0 0.0
        %592 = vmatprep.subr.mxu0 0.0
        %593 = vmatpush1.xpose.msra.mxu0 0.0
        %594 = vmatprep.subr.mxu0 0.0
        %595 = vmatpush1.xpose.msra.mxu0 0.0
        %596 = vmatprep.subr.mxu0 0.0
        %597 = vmatpush1.xpose.msra.mxu0 0.0
        %598 = vmatprep.subr.mxu0 0.0
        %599 = vmatpush1.xpose.msra.mxu0 0.0
        %600 = vmatprep.subr.mxu0 0.0
        %601 = vmatpush1.xpose.msra.mxu0 0.0
        %602 = vmatprep.subr.mxu0 0.0
        %603 = vmatpush1.xpose.msra.mxu0 0.0
        %604 = vmatprep.subr.mxu0 0.0
        %605 = vmatpush1.xpose.msra.mxu0 0.0
        %606 = vmatprep.subr.mxu0 0.0
        %607 = vmatpush1.xpose.msra.mxu0 0.0
        %608 = vmatprep.subr.mxu0 0.0
        %609 = vmatpush1.xpose.msra.mxu0 0.0
        %610 = vmatprep.subr.mxu0 0.0
        %611 = vmatpush1.xpose.msra.mxu0 0.0
        %612 = vmatprep.subr.mxu0 0.0
        %613 = vmatpush1.xpose.msra.mxu0 0.0
        %614 = vmatprep.subr.mxu0 0.0
        %615 = vmatpush1.xpose.msra.mxu0 0.0
        %616 = vmatprep.subr.mxu0 0.0
        %617 = vmatpush1.xpose.msra.mxu0 0.0
        %618 = vmatprep.subr.mxu0 0.0
        %619 = vmatpush1.xpose.msra.mxu0 0.0
        %620 = vmatprep.subr.mxu0 0.0
        %621 = vmatpush1.xpose.msra.mxu0 0.0
        %622 = vmatprep.subr.mxu0 0.0
        %623 = vmatpush1.xpose.msra.mxu0 0.0
        %624 = vmatprep.mubr.f32.mxu0 0.0
        %625 = vmatmul.mubr.f32.gmra.mrb[0].mxu0 %v556
        %v626 = vpop.f32.mrb[0].mxu0
        %v627 = vadd.f32 0.0, %v626
        %v628 = vpop.f32.mrb[0].mxu0
        %629 = vdwg.mxu0
        %v630 = vsel %vm481, %v461, 0
        %v632 = vsel %vm481, %v468, 0
        %634 = vmatprep.subr.mxu0 0.0
        %635 = vmatpush1.xpose.msra.mxu0 %v632
        %636 = vmatprep.subr.mxu0 0.0
        %637 = vmatpush1.xpose.msra.mxu0 0.0
        %638 = vmatprep.subr.mxu0 0.0
        %639 = vmatpush1.xpose.msra.mxu0 0.0
        %640 = vmatprep.subr.mxu0 0.0
        %641 = vmatpush1.xpose.msra.mxu0 0.0
        %642 = vmatprep.subr.mxu0 0.0
        %643 = vmatpush1.xpose.msra.mxu0 0.0
        %644 = vmatprep.subr.mxu0 0.0
        %645 = vmatpush1.xpose.msra.mxu0 0.0
        %646 = vmatprep.subr.mxu0 0.0
        %647 = vmatpush1.xpose.msra.mxu0 0.0
        %648 = vmatprep.subr.mxu0 0.0
        %649 = vmatpush1.xpose.msra.mxu0 0.0
        %650 = vmatprep.subr.mxu0 0.0
        %651 = vmatpush1.xpose.msra.mxu0 0.0
        %652 = vmatprep.subr.mxu0 0.0
        %653 = vmatpush1.xpose.msra.mxu0 0.0
        %654 = vmatprep.subr.mxu0 0.0
        %655 = vmatpush1.xpose.msra.mxu0 0.0
        %656 = vmatprep.subr.mxu0 0.0
        %657 = vmatpush1.xpose.msra.mxu0 0.0
        %658 = vmatprep.subr.mxu0 0.0
        %659 = vmatpush1.xpose.msra.mxu0 0.0
        %660 = vmatprep.subr.mxu0 0.0
        %661 = vmatpush1.xpose.msra.mxu0 0.0
        %662 = vmatprep.subr.mxu0 0.0
        %663 = vmatpush1.xpose.msra.mxu0 0.0
        %664 = vmatprep.subr.mxu0 0.0
        %665 = vmatpush1.xpose.msra.mxu0 0.0
        %666 = vmatprep.subr.mxu0 0.0
        %667 = vmatpush1.xpose.msra.mxu0 0.0
        %668 = vmatprep.subr.mxu0 0.0
        %669 = vmatpush1.xpose.msra.mxu0 0.0
        %670 = vmatprep.subr.mxu0 0.0
        %671 = vmatpush1.xpose.msra.mxu0 0.0
        %672 = vmatprep.subr.mxu0 0.0
        %673 = vmatpush1.xpose.msra.mxu0 0.0
        %674 = vmatprep.subr.mxu0 0.0
        %675 = vmatpush1.xpose.msra.mxu0 0.0
        %676 = vmatprep.subr.mxu0 0.0
        %677 = vmatpush1.xpose.msra.mxu0 0.0
        %678 = vmatprep.subr.mxu0 0.0
        %679 = vmatpush1.xpose.msra.mxu0 0.0
        %680 = vmatprep.subr.mxu0 0.0
        %681 = vmatpush1.xpose.msra.mxu0 0.0
        %682 = vmatprep.subr.mxu0 0.0
        %683 = vmatpush1.xpose.msra.mxu0 0.0
        %684 = vmatprep.subr.mxu0 0.0
        %685 = vmatpush1.xpose.msra.mxu0 0.0
        %686 = vmatprep.subr.mxu0 0.0
        %687 = vmatpush1.xpose.msra.mxu0 0.0
        %688 = vmatprep.subr.mxu0 0.0
        %689 = vmatpush1.xpose.msra.mxu0 0.0
        %690 = vmatprep.subr.mxu0 0.0
        %691 = vmatpush1.xpose.msra.mxu0 0.0
        %692 = vmatprep.subr.mxu0 0.0
        %693 = vmatpush1.xpose.msra.mxu0 0.0
        %694 = vmatprep.subr.mxu0 0.0
        %695 = vmatpush1.xpose.msra.mxu0 0.0
        %696 = vmatprep.subr.mxu0 0.0
        %697 = vmatpush1.xpose.msra.mxu0 0.0
        %698 = vmatprep.mubr.f32.mxu0 0.0
        %699 = vmatmul.mubr.f32.gmra.mrb[0].mxu0 %v630
        %v700 = vpop.f32.mrb[0].mxu0
        %v701 = vadd.f32 0.0, %v700
        %v702 = vpop.f32.mrb[0].mxu0
        %703 = vdwg.mxu0
        %v704 = vsel %vm481, %v463, 0
        %v706 = vsel %vm481, %v470, 0
        %708 = vmatprep.subr.mxu0 0.0
        %709 = vmatpush1.xpose.msra.mxu0 %v706
        %710 = vmatprep.subr.mxu0 0.0
        %711 = vmatpush1.xpose.msra.mxu0 0.0
        %712 = vmatprep.subr.mxu0 0.0
        %713 = vmatpush1.xpose.msra.mxu0 0.0
        %714 = vmatprep.subr.mxu0 0.0
        %715 = vmatpush1.xpose.msra.mxu0 0.0
        %716 = vmatprep.subr.mxu0 0.0
        %717 = vmatpush1.xpose.msra.mxu0 0.0
        %718 = vmatprep.subr.mxu0 0.0
        %719 = vmatpush1.xpose.msra.mxu0 0.0
        %720 = vmatprep.subr.mxu0 0.0
        %721 = vmatpush1.xpose.msra.mxu0 0.0
        %722 = vmatprep.subr.mxu0 0.0
        %723 = vmatpush1.xpose.msra.mxu0 0.0
        %724 = vmatprep.subr.mxu0 0.0
        %725 = vmatpush1.xpose.msra.mxu0 0.0
        %726 = vmatprep.subr.mxu0 0.0
        %727 = vmatpush1.xpose.msra.mxu0 0.0
        %728 = vmatprep.subr.mxu0 0.0
        %729 = vmatpush1.xpose.msra.mxu0 0.0
        %730 = vmatprep.subr.mxu0 0.0
        %731 = vmatpush1.xpose.msra.mxu0 0.0
        %732 = vmatprep.subr.mxu0 0.0
        %733 = vmatpush1.xpose.msra.mxu0 0.0
        %734 = vmatprep.subr.mxu0 0.0
        %735 = vmatpush1.xpose.msra.mxu0 0.0
        %736 = vmatprep.subr.mxu0 0.0
        %737 = vmatpush1.xpose.msra.mxu0 0.0
        %738 = vmatprep.subr.mxu0 0.0
        %739 = vmatpush1.xpose.msra.mxu0 0.0
        %740 = vmatprep.subr.mxu0 0.0
        %741 = vmatpush1.xpose.msra.mxu0 0.0
        %742 = vmatprep.subr.mxu0 0.0
        %743 = vmatpush1.xpose.msra.mxu0 0.0
        %744 = vmatprep.subr.mxu0 0.0
        %745 = vmatpush1.xpose.msra.mxu0 0.0
        %746 = vmatprep.subr.mxu0 0.0
        %747 = vmatpush1.xpose.msra.mxu0 0.0
        %748 = vmatprep.subr.mxu0 0.0
        %749 = vmatpush1.xpose.msra.mxu0 0.0
        %750 = vmatprep.subr.mxu0 0.0
        %751 = vmatpush1.xpose.msra.mxu0 0.0
        %752 = vmatprep.subr.mxu0 0.0
        %753 = vmatpush1.xpose.msra.mxu0 0.0
        %754 = vmatprep.subr.mxu0 0.0
        %755 = vmatpush1.xpose.msra.mxu0 0.0
        %756 = vmatprep.subr.mxu0 0.0
        %757 = vmatpush1.xpose.msra.mxu0 0.0
        %758 = vmatprep.subr.mxu0 0.0
        %759 = vmatpush1.xpose.msra.mxu0 0.0
        %760 = vmatprep.subr.mxu0 0.0
        %761 = vmatpush1.xpose.msra.mxu0 0.0
        %762 = vmatprep.subr.mxu0 0.0
        %763 = vmatpush1.xpose.msra.mxu0 0.0
        %764 = vmatprep.subr.mxu0 0.0
        %765 = vmatpush1.xpose.msra.mxu0 0.0
        %766 = vmatprep.subr.mxu0 0.0
        %767 = vmatpush1.xpose.msra.mxu0 0.0
        %768 = vmatprep.subr.mxu0 0.0
        %769 = vmatpush1.xpose.msra.mxu0 0.0
        %770 = vmatprep.subr.mxu0 0.0
        %771 = vmatpush1.xpose.msra.mxu0 0.0
        %772 = vmatprep.mubr.f32.mxu0 0.0
        %773 = vmatmul.mubr.f32.gmra.mrb[0].mxu0 %v704
        %v774 = vpop.f32.mrb[0].mxu0
        %v775 = vadd.f32 0.0, %v774
        %v776 = vpop.f32.mrb[0].mxu0
        %777 = vdwg.mxu0
        %v778 = vmul.f32 %v553, 0.35355338
        %v779 = vmul.f32 %v627, 0.35355338
        %v780 = vmul.f32 %v701, 0.35355338
        %v781 = vmul.f32 %v775, 0.35355338
        %v782 = vsel %vm481, %v778, -inf
        %783 = vmax.xlane.f32.xlu0 %v782
        %v784 = vpop.xlane.xlu0 %783
        %v785 = vsel %vm481, %v779, -inf
        %786 = vmax.xlane.f32.xlu0 %v785
        %v787 = vpop.xlane.xlu0 %786
        %v788 = vsel %vm481, %v780, -inf
        %789 = vmax.xlane.f32.xlu0 %v788
        %v790 = vpop.xlane.xlu0 %789
        %v791 = vsel %vm481, %v781, -inf
        %792 = vmax.xlane.f32.xlu0 %v791
        %v793 = vpop.xlane.xlu0 %792
        %v794 = vsub.f32 %v778, %v784
        %v795 = vsub.f32 %v779, %v787
        %v796 = vsub.f32 %v780, %v790
        %v797 = vsub.f32 %v781, %v793
        %v798 = vmul.f32 %v794, 1.442695
        %v799 = vpow.pop %v798
        %v800 = vmul.f32 %v795, 1.442695
        %v801 = vpow.pop %v800
        %v802 = vmul.f32 %v796, 1.442695
        %v803 = vpow.pop %v802
        %v804 = vmul.f32 %v797, 1.442695
        %v805 = vpow.pop %v804
        %v806 = vsel %vm481, %v799, 0.0
        %807 = vadd.xlane.f32.xlu0 %v806
        %v808 = vpop.xlane.xlu0 %807
        %v809 = vsel %vm481, %v801, 0.0
        %810 = vadd.xlane.f32.xlu0 %v809
        %v811 = vpop.xlane.xlu0 %810
        %v812 = vsel %vm481, %v803, 0.0
        %813 = vadd.xlane.f32.xlu0 %v812
        %v814 = vpop.xlane.xlu0 %813
        %v815 = vsel %vm481, %v805, 0.0
        %816 = vadd.xlane.f32.xlu0 %v815
        %v817 = vpop.xlane.xlu0 %816
        %v818 = vrcp.pop %v808
        %v819 = vmul.f32 %v799, %v818
        %v820 = vrcp.pop %v811
        %v821 = vmul.f32 %v801, %v820
        %v822 = vrcp.pop %v814
        %v823 = vmul.f32 %v803, %v822
        %v824 = vrcp.pop %v817
        %v825 = vmul.f32 %v805, %v824
        %v827 = vsel %vm481, %v819, 0
        %829 = vmatprep.subr.mxu0 0.0
        %830 = vmatpush1.msra.mxu0 %v454
        %831 = vmatprep.subr.mxu0 0.0
        %832 = vmatpush1.msra.mxu0 0.0
        %833 = vmatprep.subr.mxu0 0.0
        %834 = vmatpush1.msra.mxu0 0.0
        %835 = vmatprep.subr.mxu0 0.0
        %836 = vmatpush1.msra.mxu0 0.0
        %837 = vmatprep.subr.mxu0 0.0
        %838 = vmatpush1.msra.mxu0 0.0
        %839 = vmatprep.subr.mxu0 0.0
        %840 = vmatpush1.msra.mxu0 0.0
        %841 = vmatprep.subr.mxu0 0.0
        %842 = vmatpush1.msra.mxu0 0.0
        %843 = vmatprep.subr.mxu0 0.0
        %844 = vmatpush1.msra.mxu0 0.0
        %845 = vmatprep.subr.mxu0 0.0
        %846 = vmatpush1.msra.mxu0 0.0
        %847 = vmatprep.subr.mxu0 0.0
        %848 = vmatpush1.msra.mxu0 0.0
        %849 = vmatprep.subr.mxu0 0.0
        %850 = vmatpush1.msra.mxu0 0.0
        %851 = vmatprep.subr.mxu0 0.0
        %852 = vmatpush1.msra.mxu0 0.0
        %853 = vmatprep.subr.mxu0 0.0
        %854 = vmatpush1.msra.mxu0 0.0
        %855 = vmatprep.subr.mxu0 0.0
        %856 = vmatpush1.msra.mxu0 0.0
        %857 = vmatprep.subr.mxu0 0.0
        %858 = vmatpush1.msra.mxu0 0.0
        %859 = vmatprep.subr.mxu0 0.0
        %860 = vmatpush1.msra.mxu0 0.0
        %861 = vmatprep.subr.mxu0 0.0
        %862 = vmatpush1.msra.mxu0 0.0
        %863 = vmatprep.subr.mxu0 0.0
        %864 = vmatpush1.msra.mxu0 0.0
        %865 = vmatprep.subr.mxu0 0.0
        %866 = vmatpush1.msra.mxu0 0.0
        %867 = vmatprep.subr.mxu0 0.0
        %868 = vmatpush1.msra.mxu0 0.0
        %869 = vmatprep.subr.mxu0 0.0
        %870 = vmatpush1.msra.mxu0 0.0
        %871 = vmatprep.subr.mxu0 0.0
        %872 = vmatpush1.msra.mxu0 0.0
        %873 = vmatprep.subr.mxu0 0.0
        %874 = vmatpush1.msra.mxu0 0.0
        %875 = vmatprep.subr.mxu0 0.0
        %876 = vmatpush1.msra.mxu0 0.0
        %877 = vmatprep.subr.mxu0 0.0
        %878 = vmatpush1.msra.mxu0 0.0
        %879 = vmatprep.subr.mxu0 0.0
        %880 = vmatpush1.msra.mxu0 0.0
        %881 = vmatprep.subr.mxu0 0.0
        %882 = vmatpush1.msra.mxu0 0.0
        %883 = vmatprep.subr.mxu0 0.0
        %884 = vmatpush1.msra.mxu0 0.0
        %885 = vmatprep.subr.mxu0 0.0
        %886 = vmatpush1.msra.mxu0 0.0
        %887 = vmatprep.subr.mxu0 0.0
        %888 = vmatpush1.msra.mxu0 0.0
        %889 = vmatprep.subr.mxu0 0.0
        %890 = vmatpush1.msra.mxu0 0.0
        %891 = vmatprep.subr.mxu0 0.0
        %892 = vmatpush1.msra.mxu0 0.0
        %893 = vmatprep.mubr.f32.mxu0 0.0
        %894 = vmatmul.mubr.f32.gmra.mrb[0].mxu0 %v827
        %v895 = vpop.f32.mrb[0].mxu0
        %v896 = vadd.f32 0.0, %v895
        %v897 = vpop.f32.mrb[0].mxu0
        %898 = vdwg.mxu0
        %v900 = vsel %vm481, %v821, 0
        %902 = vmatprep.subr.mxu0 0.0
        %903 = vmatpush1.msra.mxu0 %v473
        %904 = vmatprep.subr.mxu0 0.0
        %905 = vmatpush1.msra.mxu0 0.0
        %906 = vmatprep.subr.mxu0 0.0
        %907 = vmatpush1.msra.mxu0 0.0
        %908 = vmatprep.subr.mxu0 0.0
        %909 = vmatpush1.msra.mxu0 0.0
        %910 = vmatprep.subr.mxu0 0.0
        %911 = vmatpush1.msra.mxu0 0.0
        %912 = vmatprep.subr.mxu0 0.0
        %913 = vmatpush1.msra.mxu0 0.0
        %914 = vmatprep.subr.mxu0 0.0
        %915 = vmatpush1.msra.mxu0 0.0
        %916 = vmatprep.subr.mxu0 0.0
        %917 = vmatpush1.msra.mxu0 0.0
        %918 = vmatprep.subr.mxu0 0.0
        %919 = vmatpush1.msra.mxu0 0.0
        %920 = vmatprep.subr.mxu0 0.0
        %921 = vmatpush1.msra.mxu0 0.0
        %922 = vmatprep.subr.mxu0 0.0
        %923 = vmatpush1.msra.mxu0 0.0
        %924 = vmatprep.subr.mxu0 0.0
        %925 = vmatpush1.msra.mxu0 0.0
        %926 = vmatprep.subr.mxu0 0.0
        %927 = vmatpush1.msra.mxu0 0.0
        %928 = vmatprep.subr.mxu0 0.0
        %929 = vmatpush1.msra.mxu0 0.0
        %930 = vmatprep.subr.mxu0 0.0
        %931 = vmatpush1.msra.mxu0 0.0
        %932 = vmatprep.subr.mxu0 0.0
        %933 = vmatpush1.msra.mxu0 0.0
        %934 = vmatprep.subr.mxu0 0.0
        %935 = vmatpush1.msra.mxu0 0.0
        %936 = vmatprep.subr.mxu0 0.0
        %937 = vmatpush1.msra.mxu0 0.0
        %938 = vmatprep.subr.mxu0 0.0
        %939 = vmatpush1.msra.mxu0 0.0
        %940 = vmatprep.subr.mxu0 0.0
        %941 = vmatpush1.msra.mxu0 0.0
        %942 = vmatprep.subr.mxu0 0.0
        %943 = vmatpush1.msra.mxu0 0.0
        %944 = vmatprep.subr.mxu0 0.0
        %945 = vmatpush1.msra.mxu0 0.0
        %946 = vmatprep.subr.mxu0 0.0
        %947 = vmatpush1.msra.mxu0 0.0
        %948 = vmatprep.subr.mxu0 0.0
        %949 = vmatpush1.msra.mxu0 0.0
        %950 = vmatprep.subr.mxu0 0.0
        %951 = vmatpush1.msra.mxu0 0.0
        %952 = vmatprep.subr.mxu0 0.0
        %953 = vmatpush1.msra.mxu0 0.0
        %954 = vmatprep.subr.mxu0 0.0
        %955 = vmatpush1.msra.mxu0 0.0
        %956 = vmatprep.subr.mxu0 0.0
        %957 = vmatpush1.msra.mxu0 0.0
        %958 = vmatprep.subr.mxu0 0.0
        %959 = vmatpush1.msra.mxu0 0.0
        %960 = vmatprep.subr.mxu0 0.0
        %961 = vmatpush1.msra.mxu0 0.0
        %962 = vmatprep.subr.mxu0 0.0
        %963 = vmatpush1.msra.mxu0 0.0
        %964 = vmatprep.subr.mxu0 0.0
        %965 = vmatpush1.msra.mxu0 0.0
        %966 = vmatprep.mubr.f32.mxu0 0.0
        %967 = vmatmul.mubr.f32.gmra.mrb[0].mxu0 %v900
        %v968 = vpop.f32.mrb[0].mxu0
        %v969 = vadd.f32 0.0, %v968
        %v970 = vpop.f32.mrb[0].mxu0
        %971 = vdwg.mxu0
        %v973 = vsel %vm481, %v823, 0
        %975 = vmatprep.subr.mxu0 0.0
        %976 = vmatpush1.msra.mxu0 %v476
        %977 = vmatprep.subr.mxu0 0.0
        %978 = vmatpush1.msra.mxu0 0.0
        %979 = vmatprep.subr.mxu0 0.0
        %980 = vmatpush1.msra.mxu0 0.0
        %981 = vmatprep.subr.mxu0 0.0
        %982 = vmatpush1.msra.mxu0 0.0
        %983 = vmatprep.subr.mxu0 0.0
        %984 = vmatpush1.msra.mxu0 0.0
        %985 = vmatprep.subr.mxu0 0.0
        %986 = vmatpush1.msra.mxu0 0.0
        %987 = vmatprep.subr.mxu0 0.0
        %988 = vmatpush1.msra.mxu0 0.0
        %989 = vmatprep.subr.mxu0 0.0
        %990 = vmatpush1.msra.mxu0 0.0
        %991 = vmatprep.subr.mxu0 0.0
        %992 = vmatpush1.msra.mxu0 0.0
        %993 = vmatprep.subr.mxu0 0.0
        %994 = vmatpush1.msra.mxu0 0.0
        %995 = vmatprep.subr.mxu0 0.0
        %996 = vmatpush1.msra.mxu0 0.0
        %997 = vmatprep.subr.mxu0 0.0
        %998 = vmatpush1.msra.mxu0 0.0
        %999 = vmatprep.subr.mxu0 0.0
        %1000 = vmatpush1.msra.mxu0 0.0
        %1001 = vmatprep.subr.mxu0 0.0
        %1002 = vmatpush1.msra.mxu0 0.0
        %1003 = vmatprep.subr.mxu0 0.0
        %1004 = vmatpush1.msra.mxu0 0.0
        %1005 = vmatprep.subr.mxu0 0.0
        %1006 = vmatpush1.msra.mxu0 0.0
        %1007 = vmatprep.subr.mxu0 0.0
        %1008 = vmatpush1.msra.mxu0 0.0
        %1009 = vmatprep.subr.mxu0 0.0
        %1010 = vmatpush1.msra.mxu0 0.0
        %1011 = vmatprep.subr.mxu0 0.0
        %1012 = vmatpush1.msra.mxu0 0.0
        %1013 = vmatprep.subr.mxu0 0.0
        %1014 = vmatpush1.msra.mxu0 0.0
        %1015 = vmatprep.subr.mxu0 0.0
        %1016 = vmatpush1.msra.mxu0 0.0
        %1017 = vmatprep.subr.mxu0 0.0
        %1018 = vmatpush1.msra.mxu0 0.0
        %1019 = vmatprep.subr.mxu0 0.0
        %1020 = vmatpush1.msra.mxu0 0.0
        %1021 = vmatprep.subr.mxu0 0.0
        %1022 = vmatpush1.msra.mxu0 0.0
        %1023 = vmatprep.subr.mxu0 0.0
        %1024 = vmatpush1.msra.mxu0 0.0
        %1025 = vmatprep.subr.mxu0 0.0
        %1026 = vmatpush1.msra.mxu0 0.0
        %1027 = vmatprep.subr.mxu0 0.0
        %1028 = vmatpush1.msra.mxu0 0.0
        %1029 = vmatprep.subr.mxu0 0.0
        %1030 = vmatpush1.msra.mxu0 0.0
        %1031 = vmatprep.subr.mxu0 0.0
        %1032 = vmatpush1.msra.mxu0 0.0
        %1033 = vmatprep.subr.mxu0 0.0
        %1034 = vmatpush1.msra.mxu0 0.0
        %1035 = vmatprep.subr.mxu0 0.0
        %1036 = vmatpush1.msra.mxu0 0.0
        %1037 = vmatprep.subr.mxu0 0.0
        %1038 = vmatpush1.msra.mxu0 0.0
        %1039 = vmatprep.mubr.f32.mxu0 0.0
        %1040 = vmatmul.mubr.f32.gmra.mrb[0].mxu0 %v973
        %v1041 = vpop.f32.mrb[0].mxu0
        %v1042 = vadd.f32 0.0, %v1041
        %v1043 = vpop.f32.mrb[0].mxu0
        %1044 = vdwg.mxu0
        %v1046 = vsel %vm481, %v825, 0
        %1048 = vmatprep.subr.mxu0 0.0
        %1049 = vmatpush1.msra.mxu0 %v479
        %1050 = vmatprep.subr.mxu0 0.0
        %1051 = vmatpush1.msra.mxu0 0.0
        %1052 = vmatprep.subr.mxu0 0.0
        %1053 = vmatpush1.msra.mxu0 0.0
        %1054 = vmatprep.subr.mxu0 0.0
        %1055 = vmatpush1.msra.mxu0 0.0
        %1056 = vmatprep.subr.mxu0 0.0
        %1057 = vmatpush1.msra.mxu0 0.0
        %1058 = vmatprep.subr.mxu0 0.0
        %1059 = vmatpush1.msra.mxu0 0.0
        %1060 = vmatprep.subr.mxu0 0.0
        %1061 = vmatpush1.msra.mxu0 0.0
        %1062 = vmatprep.subr.mxu0 0.0
        %1063 = vmatpush1.msra.mxu0 0.0
        %1064 = vmatprep.subr.mxu0 0.0
        %1065 = vmatpush1.msra.mxu0 0.0
        %1066 = vmatprep.subr.mxu0 0.0
        %1067 = vmatpush1.msra.mxu0 0.0
        %1068 = vmatprep.subr.mxu0 0.0
        %1069 = vmatpush1.msra.mxu0 0.0
        %1070 = vmatprep.subr.mxu0 0.0
        %1071 = vmatpush1.msra.mxu0 0.0
        %1072 = vmatprep.subr.mxu0 0.0
        %1073 = vmatpush1.msra.mxu0 0.0
        %1074 = vmatprep.subr.mxu0 0.0
        %1075 = vmatpush1.msra.mxu0 0.0
        %1076 = vmatprep.subr.mxu0 0.0
        %1077 = vmatpush1.msra.mxu0 0.0
        %1078 = vmatprep.subr.mxu0 0.0
        %1079 = vmatpush1.msra.mxu0 0.0
        %1080 = vmatprep.subr.mxu0 0.0
        %1081 = vmatpush1.msra.mxu0 0.0
        %1082 = vmatprep.subr.mxu0 0.0
        %1083 = vmatpush1.msra.mxu0 0.0
        %1084 = vmatprep.subr.mxu0 0.0
        %1085 = vmatpush1.msra.mxu0 0.0
        %1086 = vmatprep.subr.mxu0 0.0
        %1087 = vmatpush1.msra.mxu0 0.0
        %1088 = vmatprep.subr.mxu0 0.0
        %1089 = vmatpush1.msra.mxu0 0.0
        %1090 = vmatprep.subr.mxu0 0.0
        %1091 = vmatpush1.msra.mxu0 0.0
        %1092 = vmatprep.subr.mxu0 0.0
        %1093 = vmatpush1.msra.mxu0 0.0
        %1094 = vmatprep.subr.mxu0 0.0
        %1095 = vmatpush1.msra.mxu0 0.0
        %1096 = vmatprep.subr.mxu0 0.0
        %1097 = vmatpush1.msra.mxu0 0.0
        %1098 = vmatprep.subr.mxu0 0.0
        %1099 = vmatpush1.msra.mxu0 0.0
        %1100 = vmatprep.subr.mxu0 0.0
        %1101 = vmatpush1.msra.mxu0 0.0
        %1102 = vmatprep.subr.mxu0 0.0
        %1103 = vmatpush1.msra.mxu0 0.0
        %1104 = vmatprep.subr.mxu0 0.0
        %1105 = vmatpush1.msra.mxu0 0.0
        %1106 = vmatprep.subr.mxu0 0.0
        %1107 = vmatpush1.msra.mxu0 0.0
        %1108 = vmatprep.subr.mxu0 0.0
        %1109 = vmatpush1.msra.mxu0 0.0
        %1110 = vmatprep.subr.mxu0 0.0
        %1111 = vmatpush1.msra.mxu0 0.0
        %1112 = vmatprep.mubr.f32.mxu0 0.0
        %1113 = vmatmul.mubr.f32.gmra.mrb[0].mxu0 %v1046
        %v1114 = vpop.f32.mrb[0].mxu0
        %v1115 = vadd.f32 0.0, %v1114
        %v1116 = vpop.f32.mrb[0].mxu0
        %1117 = vdwg.mxu0
        %1118 = vst.msk [vmem:[#allocation2] sm:$0xff] %vm481, %v896
        %1120 = vrot.lane.b32.xlu0 %v969, 8
        %v1121 = vpop.permute.xlu0 %1120
        %vm1123 = vcmask 130112
        %1124 = vst.msk [vmem:[#allocation2] sm:$0xff] %vm1123, %v1121
        %1126 = vrot.lane.b32.xlu0 %v1042, 16
        %v1127 = vpop.permute.xlu0 %1126
        %vm1129 = vcmask 195712
        %1130 = vst.msk [vmem:[#allocation2] sm:$0xff] %vm1129, %v1127
        %1132 = vrot.lane.b32.xlu0 %v1115, 24
        %v1133 = vpop.permute.xlu0 %1132
        %vm1135 = vcmask 261312
        %1136 = vst.msk [vmem:[#allocation2] sm:$0xff] %vm1135, %v1133
        %v1137 = vld [vmem:[#allocation2] sm:$0xff]
        %v1138 = vlaneseq
        %v1139 = vshrl.u32 %v1138, 7
        %v1140 = vsub.s32 0, %v1139
        %v1141 = vrot.slane %v198, %v1140
        %v1143 = vsel %vm207, %v1137, 0
        %1145 = vmatprep.subr.mxu0 0.0
        %1146 = vmatpush1.msra.mxu0 %v178
        %1147 = vmatprep.subr.mxu0 0.0
        %1148 = vmatpush1.msra.mxu0 %v179
        %1149 = vmatprep.subr.mxu0 0.0
        %1150 = vmatpush1.msra.mxu0 %v180
        %1151 = vmatprep.subr.mxu0 0.0
        %1152 = vmatpush1.msra.mxu0 %v181
        %1153 = vmatprep.subr.mxu0 0.0
        %1154 = vmatpush1.msra.mxu0 0.0
        %1155 = vmatprep.subr.mxu0 0.0
        %1156 = vmatpush1.msra.mxu0 0.0
        %1157 = vmatprep.subr.mxu0 0.0
        %1158 = vmatpush1.msra.mxu0 0.0
        %1159 = vmatprep.subr.mxu0 0.0
        %1160 = vmatpush1.msra.mxu0 0.0
        %1161 = vmatprep.subr.mxu0 0.0
        %1162 = vmatpush1.msra.mxu0 0.0
        %1163 = vmatprep.subr.mxu0 0.0
        %1164 = vmatpush1.msra.mxu0 0.0
        %1165 = vmatprep.subr.mxu0 0.0
        %1166 = vmatpush1.msra.mxu0 0.0
        %1167 = vmatprep.subr.mxu0 0.0
        %1168 = vmatpush1.msra.mxu0 0.0
        %1169 = vmatprep.subr.mxu0 0.0
        %1170 = vmatpush1.msra.mxu0 0.0
        %1171 = vmatprep.subr.mxu0 0.0
        %1172 = vmatpush1.msra.mxu0 0.0
        %1173 = vmatprep.subr.mxu0 0.0
        %1174 = vmatpush1.msra.mxu0 0.0
        %1175 = vmatprep.subr.mxu0 0.0
        %1176 = vmatpush1.msra.mxu0 0.0
        %1177 = vmatprep.subr.mxu0 0.0
        %1178 = vmatpush1.msra.mxu0 0.0
        %1179 = vmatprep.subr.mxu0 0.0
        %1180 = vmatpush1.msra.mxu0 0.0
        %1181 = vmatprep.subr.mxu0 0.0
        %1182 = vmatpush1.msra.mxu0 0.0
        %1183 = vmatprep.subr.mxu0 0.0
        %1184 = vmatpush1.msra.mxu0 0.0
        %1185 = vmatprep.subr.mxu0 0.0
        %1186 = vmatpush1.msra.mxu0 0.0
        %1187 = vmatprep.subr.mxu0 0.0
        %1188 = vmatpush1.msra.mxu0 0.0
        %1189 = vmatprep.subr.mxu0 0.0
        %1190 = vmatpush1.msra.mxu0 0.0
        %1191 = vmatprep.subr.mxu0 0.0
        %1192 = vmatpush1.msra.mxu0 0.0
        %1193 = vmatprep.subr.mxu0 0.0
        %1194 = vmatpush1.msra.mxu0 0.0
        %1195 = vmatprep.subr.mxu0 0.0
        %1196 = vmatpush1.msra.mxu0 0.0
        %1197 = vmatprep.subr.mxu0 0.0
        %1198 = vmatpush1.msra.mxu0 0.0
        %1199 = vmatprep.subr.mxu0 0.0
        %1200 = vmatpush1.msra.mxu0 0.0
        %1201 = vmatprep.subr.mxu0 0.0
        %1202 = vmatpush1.msra.mxu0 0.0
        %1203 = vmatprep.subr.mxu0 0.0
        %1204 = vmatpush1.msra.mxu0 0.0
        %1205 = vmatprep.subr.mxu0 0.0
        %1206 = vmatpush1.msra.mxu0 0.0
        %1207 = vmatprep.subr.mxu0 0.0
        %1208 = vmatpush1.msra.mxu0 0.0
        %1209 = vmatprep.mubr.f32.mxu0 0.0
        %1210 = vmatmul.mubr.f32.gmra.mrb[0].mxu0 %v1143
        %v1211 = vpop.f32.mrb[0].mxu0
        %v1212 = vadd.f32 %v1141, %v1211
        %v1213 = vpop.f32.mrb[0].mxu0
        %1214 = vdwg.mxu0
        %v1215 = vadd.f32 %v206, %v1212
        %v1216 = vsel %vm207, %v1215, 0.0
        %1217 = vadd.xlane.f32.xlu0 %v1216
        %v1218 = vpop.xlane.xlu0 %1217
        %v1219 = vmul.f32 %v1218, %v211
        %v1220 = vsub.f32 %v1215, %v1219
        %v1221 = vmul.f32 %v1220, %v1220
        %v1222 = vsel %vm207, %v1221, 0.0
        %1223 = vadd.xlane.f32.xlu0 %v1222
        %v1224 = vpop.xlane.xlu0 %1223
        %v1225 = vmul.f32 %v1224, %v211
        %v1226 = vadd.f32 %v1225, 1e-05
        %v1227 = vrsqrt.pop %v1226
        %v1228 = vmul.f32 %v1220, %v1227
        %v1229 = vlaneseq
        %v1230 = vshrl.u32 %v1229, 7
        %v1231 = vsub.s32 0, %v1230
        %v1232 = vrot.slane %v193, %v1231
        %v1233 = vmul.f32 %v1228, %v1232
        %v1234 = vlaneseq
        %v1235 = vshrl.u32 %v1234, 7
        %v1236 = vsub.s32 0, %v1235
        %v1237 = vrot.slane %v194, %v1236
        %v1238 = vadd.f32 %v1233, %v1237
        %v1239 = vlaneseq
        %v1240 = vshrl.u32 %v1239, 7
        %v1241 = vsub.s32 0, %v1240
        %v1242 = vrot.slane %v204, %v1241
        %v1244 = vsel %vm207, %v1238, 0
        %1246 = vmatprep.subr.mxu0 0.0
        %1247 = vmatpush1.msra.mxu0 %v200
        %1248 = vmatprep.subr.mxu0 0.0
        %1249 = vmatpush1.msra.mxu0 %v201
        %1250 = vmatprep.subr.mxu0 0.0
        %1251 = vmatpush1.msra.mxu0 %v202
        %1252 = vmatprep.subr.mxu0 0.0
        %1253 = vmatpush1.msra.mxu0 %v203
        %1254 = vmatprep.subr.mxu0 0.0
        %1255 = vmatpush1.msra.mxu0 0.0
        %1256 = vmatprep.subr.mxu0 0.0
        %1257 = vmatpush1.msra.mxu0 0.0
        %1258 = vmatprep.subr.mxu0 0.0
        %1259 = vmatpush1.msra.mxu0 0.0
        %1260 = vmatprep.subr.mxu0 0.0
        %1261 = vmatpush1.msra.mxu0 0.0
        %1262 = vmatprep.subr.mxu0 0.0
        %1263 = vmatpush1.msra.mxu0 0.0
        %1264 = vmatprep.subr.mxu0 0.0
        %1265 = vmatpush1.msra.mxu0 0.0
        %1266 = vmatprep.subr.mxu0 0.0
        %1267 = vmatpush1.msra.mxu0 0.0
        %1268 = vmatprep.subr.mxu0 0.0
        %1269 = vmatpush1.msra.mxu0 0.0
        %1270 = vmatprep.subr.mxu0 0.0
        %1271 = vmatpush1.msra.mxu0 0.0
        %1272 = vmatprep.subr.mxu0 0.0
        %1273 = vmatpush1.msra.mxu0 0.0
        %1274 = vmatprep.subr.mxu0 0.0
        %1275 = vmatpush1.msra.mxu0 0.0
        %1276 = vmatprep.subr.mxu0 0.0
        %1277 = vmatpush1.msra.mxu0 0.0
        %1278 = vmatprep.subr.mxu0 0.0
        %1279 = vmatpush1.msra.mxu0 0.0
        %1280 = vmatprep.subr.mxu0 0.0
        %1281 = vmatpush1.msra.mxu0 0.0
        %1282 = vmatprep.subr.mxu0 0.0
        %1283 = vmatpush1.msra.mxu0 0.0
        %1284 = vmatprep.subr.mxu0 0.0
        %1285 = vmatpush1.msra.mxu0 0.0
        %1286 = vmatprep.subr.mxu0 0.0
        %1287 = vmatpush1.msra.mxu0 0.0
        %1288 = vmatprep.subr.mxu0 0.0
        %1289 = vmatpush1.msra.mxu0 0.0
        %1290 = vmatprep.subr.mxu0 0.0
        %1291 = vmatpush1.msra.mxu0 0.0
        %1292 = vmatprep.subr.mxu0 0.0
        %1293 = vmatpush1.msra.mxu0 0.0
        %1294 = vmatprep.subr.mxu0 0.0
        %1295 = vmatpush1.msra.mxu0 0.0
        %1296 = vmatprep.subr.mxu0 0.0
        %1297 = vmatpush1.msra.mxu0 0.0
        %1298 = vmatprep.subr.mxu0 0.0
        %1299 = vmatpush1.msra.mxu0 0.0
        %1300 = vmatprep.subr.mxu0 0.0
        %1301 = vmatpush1.msra.mxu0 0.0
        %1302 = vmatprep.subr.mxu0 0.0
        %1303 = vmatpush1.msra.mxu0 0.0
        %1304 = vmatprep.subr.mxu0 0.0
        %1305 = vmatpush1.msra.mxu0 0.0
        %1306 = vmatprep.subr.mxu0 0.0
        %1307 = vmatpush1.msra.mxu0 0.0
        %1308 = vmatprep.subr.mxu0 0.0
        %1309 = vmatpush1.msra.mxu0 0.0
        %1310 = vmatprep.mubr.f32.mxu0 0.0
        %1311 = vmatmul.mubr.f32.gmra.mrb[0].mxu0 %v1244
        %v1312 = vpop.f32.mrb[0].mxu0
        %v1313 = vadd.f32 %v1242, %v1312
        %v1314 = vpop.f32.mrb[0].mxu0
        %1315 = vdwg.mxu0
        %v1316 = vmul.f32 %v1313, 0.5
        %v1317 = vmul.f32 %v1313, 0.044715
        %v1318 = vmul.f32 %v1317, %v1313
        %v1319 = vmul.f32 %v1318, %v1313
        %v1320 = vadd.f32 %v1313, %v1319
        %v1321 = vmul.f32 %v1320, 0.7978846
        %v1322 = vtanh.pop %v1321
        %v1323 = vadd.f32 %v1322, 1.0
        %v1324 = vmul.f32 %v1316, %v1323
        %v1325 = vlaneseq
        %v1326 = vshrl.u32 %v1325, 7
        %v1327 = vsub.s32 0, %v1326
        %v1328 = vrot.slane %v199, %v1327
        %vm1329 = vcmask 523264
        %v1331 = vsel %vm1329, %v1324, 0
        %1333 = vmatprep.subr.mxu0 0.0
        %1334 = vmatpush1.msra.mxu0 %v182
        %1335 = vmatprep.subr.mxu0 0.0
        %1336 = vmatpush1.msra.mxu0 %v183
        %1337 = vmatprep.subr.mxu0 0.0
        %1338 = vmatpush1.msra.mxu0 %v184
        %1339 = vmatprep.subr.mxu0 0.0
        %1340 = vmatpush1.msra.mxu0 %v185
        %1341 = vmatprep.subr.mxu0 0.0
        %1342 = vmatpush1.msra.mxu0 %v186
        %1343 = vmatprep.subr.mxu0 0.0
        %1344 = vmatpush1.msra.mxu0 %v187
        %1345 = vmatprep.subr.mxu0 0.0
        %1346 = vmatpush1.msra.mxu0 %v188
        %1347 = vmatprep.subr.mxu0 0.0
        %1348 = vmatpush1.msra.mxu0 %v189
        %1349 = vmatprep.subr.mxu0 0.0
        %1350 = vmatpush1.msra.mxu0 0.0
        %1351 = vmatprep.subr.mxu0 0.0
        %1352 = vmatpush1.msra.mxu0 0.0
        %1353 = vmatprep.subr.mxu0 0.0
        %1354 = vmatpush1.msra.mxu0 0.0
        %1355 = vmatprep.subr.mxu0 0.0
        %1356 = vmatpush1.msra.mxu0 0.0
        %1357 = vmatprep.subr.mxu0 0.0
        %1358 = vmatpush1.msra.mxu0 0.0
        %1359 = vmatprep.subr.mxu0 0.0
        %1360 = vmatpush1.msra.mxu0 0.0
        %1361 = vmatprep.subr.mxu0 0.0
        %1362 = vmatpush1.msra.mxu0 0.0
        %1363 = vmatprep.subr.mxu0 0.0
        %1364 = vmatpush1.msra.mxu0 0.0
        %1365 = vmatprep.subr.mxu0 0.0
        %1366 = vmatpush1.msra.mxu0 0.0
        %1367 = vmatprep.subr.mxu0 0.0
        %1368 = vmatpush1.msra.mxu0 0.0
        %1369 = vmatprep.subr.mxu0 0.0
        %1370 = vmatpush1.msra.mxu0 0.0
        %1371 = vmatprep.subr.mxu0 0.0
        %1372 = vmatpush1.msra.mxu0 0.0
        %1373 = vmatprep.subr.mxu0 0.0
        %1374 = vmatpush1.msra.mxu0 0.0
        %1375 = vmatprep.subr.mxu0 0.0
        %1376 = vmatpush1.msra.mxu0 0.0
        %1377 = vmatprep.subr.mxu0 0.0
        %1378 = vmatpush1.msra.mxu0 0.0
        %1379 = vmatprep.subr.mxu0 0.0
        %1380 = vmatpush1.msra.mxu0 0.0
        %1381 = vmatprep.subr.mxu0 0.0
        %1382 = vmatpush1.msra.mxu0 0.0
        %1383 = vmatprep.subr.mxu0 0.0
        %1384 = vmatpush1.msra.mxu0 0.0
        %1385 = vmatprep.subr.mxu0 0.0
        %1386 = vmatpush1.msra.mxu0 0.0
        %1387 = vmatprep.subr.mxu0 0.0
        %1388 = vmatpush1.msra.mxu0 0.0
        %1389 = vmatprep.subr.mxu0 0.0
        %1390 = vmatpush1.msra.mxu0 0.0
        %1391 = vmatprep.subr.mxu0 0.0
        %1392 = vmatpush1.msra.mxu0 0.0
        %1393 = vmatprep.subr.mxu0 0.0
        %1394 = vmatpush1.msra.mxu0 0.0
        %1395 = vmatprep.subr.mxu0 0.0
        %1396 = vmatpush1.msra.mxu0 0.0
        %1397 = vmatprep.mubr.f32.mxu0 0.0
        %1398 = vmatmul.mubr.f32.gmra.mrb[0].mxu0 %v1331
        %v1399 = vpop.f32.mrb[0].mxu0
        %v1400 = vadd.f32 %v1328, %v1399
        %v1401 = vpop.f32.mrb[0].mxu0
        %1402 = vdwg.mxu0
        %v1403 = vadd.f32 %v1215, %v1400
        %v1404 = vsel %vm207, %v1403, 0.0
        %1405 = vadd.xlane.f32.xlu0 %v1404
        %v1406 = vpop.xlane.xlu0 %1405
        %v1407 = vmul.f32 %v1406, %v211
        %v1408 = vsub.f32 %v1403, %v1407
        %v1409 = vmul.f32 %v1408, %v1408
        %v1410 = vsel %vm207, %v1409, 0.0
        %1411 = vadd.xlane.f32.xlu0 %v1410
        %v1412 = vpop.xlane.xlu0 %1411
        %v1413 = vmul.f32 %v1412, %v211
        %v1414 = vadd.f32 %v1413, 1e-05
        %v1415 = vrsqrt.pop %v1414
        %v1416 = vmul.f32 %v1408, %v1415
        %v1417 = vmul.f32 %v1416, %v225
        %v1418 = vadd.f32 %v1417, %v230
        %v1420 = vsel %vm207, %v1418, 0
        %1422 = vmatprep.subr.mxu0 0.0
        %1423 = vmatpush1.msra.mxu0 %v166
        %1424 = vmatprep.subr.mxu0 0.0
        %1425 = vmatpush1.msra.mxu0 %v167
        %1426 = vmatprep.subr.mxu0 0.0
        %1427 = vmatpush1.msra.mxu0 %v168
        %1428 = vmatprep.subr.mxu0 0.0
        %1429 = vmatpush1.msra.mxu0 %v169
        %1430 = vmatprep.subr.mxu0 0.0
        %1431 = vmatpush1.msra.mxu0 0.0
        %1432 = vmatprep.subr.mxu0 0.0
        %1433 = vmatpush1.msra.mxu0 0.0
        %1434 = vmatprep.subr.mxu0 0.0
        %1435 = vmatpush1.msra.mxu0 0.0
        %1436 = vmatprep.subr.mxu0 0.0
        %1437 = vmatpush1.msra.mxu0 0.0
        %1438 = vmatprep.subr.mxu0 0.0
        %1439 = vmatpush1.msra.mxu0 0.0
        %1440 = vmatprep.subr.mxu0 0.0
        %1441 = vmatpush1.msra.mxu0 0.0
        %1442 = vmatprep.subr.mxu0 0.0
        %1443 = vmatpush1.msra.mxu0 0.0
        %1444 = vmatprep.subr.mxu0 0.0
        %1445 = vmatpush1.msra.mxu0 0.0
        %1446 = vmatprep.subr.mxu0 0.0
        %1447 = vmatpush1.msra.mxu0 0.0
        %1448 = vmatprep.subr.mxu0 0.0
        %1449 = vmatpush1.msra.mxu0 0.0
        %1450 = vmatprep.subr.mxu0 0.0
        %1451 = vmatpush1.msra.mxu0 0.0
        %1452 = vmatprep.subr.mxu0 0.0
        %1453 = vmatpush1.msra.mxu0 0.0
        %1454 = vmatprep.subr.mxu0 0.0
        %1455 = vmatpush1.msra.mxu0 0.0
        %1456 = vmatprep.subr.mxu0 0.0
        %1457 = vmatpush1.msra.mxu0 0.0
        %1458 = vmatprep.subr.mxu0 0.0
        %1459 = vmatpush1.msra.mxu0 0.0
        %1460 = vmatprep.subr.mxu0 0.0
        %1461 = vmatpush1.msra.mxu0 0.0
        %1462 = vmatprep.subr.mxu0 0.0
        %1463 = vmatpush1.msra.mxu0 0.0
        %1464 = vmatprep.subr.mxu0 0.0
        %1465 = vmatpush1.msra.mxu0 0.0
        %1466 = vmatprep.subr.mxu0 0.0
        %1467 = vmatpush1.msra.mxu0 0.0
        %1468 = vmatprep.subr.mxu0 0.0
        %1469 = vmatpush1.msra.mxu0 0.0
        %1470 = vmatprep.subr.mxu0 0.0
        %1471 = vmatpush1.msra.mxu0 0.0
        %1472 = vmatprep.subr.mxu0 0.0
        %1473 = vmatpush1.msra.mxu0 0.0
        %1474 = vmatprep.subr.mxu0 0.0
        %1475 = vmatpush1.msra.mxu0 0.0
        %1476 = vmatprep.subr.mxu0 0.0
        %1477 = vmatpush1.msra.mxu0 0.0
        %1478 = vmatprep.subr.mxu0 0.0
        %1479 = vmatpush1.msra.mxu0 0.0
        %1480 = vmatprep.subr.mxu0 0.0
        %1481 = vmatpush1.msra.mxu0 0.0
        %1482 = vmatprep.subr.mxu0 0.0
        %1483 = vmatpush1.msra.mxu0 0.0
        %1484 = vmatprep.subr.mxu0 0.0
        %1485 = vmatpush1.msra.mxu0 0.0
        %1486 = vmatprep.mubr.f32.mxu0 0.0
        %1487 = vmatmul.mubr.f32.gmra.mrb[0].mxu0 %v1420
        %v1488 = vpop.f32.mrb[0].mxu0
        %v1489 = vadd.f32 %v235, %v1488
        %v1490 = vpop.f32.mrb[0].mxu0
        %1491 = vdwg.mxu0
        %1492 = vmatprep.subr.mxu0 0.0
        %1493 = vmatpush1.msra.mxu0 %v170
        %1494 = vmatprep.subr.mxu0 0.0
        %1495 = vmatpush1.msra.mxu0 %v171
        %1496 = vmatprep.subr.mxu0 0.0
        %1497 = vmatpush1.msra.mxu0 %v172
        %1498 = vmatprep.subr.mxu0 0.0
        %1499 = vmatpush1.msra.mxu0 %v173
        %1500 = vmatprep.subr.mxu0 0.0
        %1501 = vmatpush1.msra.mxu0 0.0
        %1502 = vmatprep.subr.mxu0 0.0
        %1503 = vmatpush1.msra.mxu0 0.0
        %1504 = vmatprep.subr.mxu0 0.0
        %1505 = vmatpush1.msra.mxu0 0.0
        %1506 = vmatprep.subr.mxu0 0.0
        %1507 = vmatpush1.msra.mxu0 0.0
        %1508 = vmatprep.subr.mxu0 0.0
        %1509 = vmatpush1.msra.mxu0 0.0
        %1510 = vmatprep.subr.mxu0 0.0
        %1511 = vmatpush1.msra.mxu0 0.0
        %1512 = vmatprep.subr.mxu0 0.0
        %1513 = vmatpush1.msra.mxu0 0.0
        %1514 = vmatprep.subr.mxu0 0.0
        %1515 = vmatpush1.msra.mxu0 0.0
        %1516 = vmatprep.subr.mxu0 0.0
        %1517 = vmatpush1.msra.mxu0 0.0
        %1518 = vmatprep.subr.mxu0 0.0
        %1519 = vmatpush1.msra.mxu0 0.0
        %1520 = vmatprep.subr.mxu0 0.0
        %1521 = vmatpush1.msra.mxu0 0.0
        %1522 = vmatprep.subr.mxu0 0.0
        %1523 = vmatpush1.msra.mxu0 0.0
        %1524 = vmatprep.subr.mxu0 0.0
        %1525 = vmatpush1.msra.mxu0 0.0
        %1526 = vmatprep.subr.mxu0 0.0
        %1527 = vmatpush1.msra.mxu0 0.0
        %1528 = vmatprep.subr.mxu0 0.0
        %1529 = vmatpush1.msra.mxu0 0.0
        %1530 = vmatprep.subr.mxu0 0.0
        %1531 = vmatpush1.msra.mxu0 0.0
        %1532 = vmatprep.subr.mxu0 0.0
        %1533 = vmatpush1.msra.mxu0 0.0
        %1534 = vmatprep.subr.mxu0 0.0
        %1535 = vmatpush1.msra.mxu0 0.0
        %1536 = vmatprep.subr.mxu0 0.0
        %1537 = vmatpush1.msra.mxu0 0.0
        %1538 = vmatprep.subr.mxu0 0.0
        %1539 = vmatpush1.msra.mxu0 0.0
        %1540 = vmatprep.subr.mxu0 0.0
        %1541 = vmatpush1.msra.mxu0 0.0
        %1542 = vmatprep.subr.mxu0 0.0
        %1543 = vmatpush1.msra.mxu0 0.0
        %1544 = vmatprep.subr.mxu0 0.0
        %1545 = vmatpush1.msra.mxu0 0.0
        %1546 = vmatprep.subr.mxu0 0.0
        %1547 = vmatpush1.msra.mxu0 0.0
        %1548 = vmatprep.subr.mxu0 0.0
        %1549 = vmatpush1.msra.mxu0 0.0
        %1550 = vmatprep.subr.mxu0 0.0
        %1551 = vmatpush1.msra.mxu0 0.0
        %1552 = vmatprep.subr.mxu0 0.0
        %1553 = vmatpush1.msra.mxu0 0.0
        %1554 = vmatprep.subr.mxu0 0.0
        %1555 = vmatpush1.msra.mxu0 0.0
        %1556 = vmatprep.mubr.f32.mxu0 0.0
        %1557 = vmatmul.mubr.f32.gmra.mrb[0].mxu0 %v1420
        %v1558 = vpop.f32.mrb[0].mxu0
        %v1559 = vadd.f32 %v312, %v1558
        %v1560 = vpop.f32.mrb[0].mxu0
        %1561 = vdwg.mxu0
        %1562 = vmatprep.subr.mxu0 0.0
        %1563 = vmatpush1.msra.mxu0 %v174
        %1564 = vmatprep.subr.mxu0 0.0
        %1565 = vmatpush1.msra.mxu0 %v175
        %1566 = vmatprep.subr.mxu0 0.0
        %1567 = vmatpush1.msra.mxu0 %v176
        %1568 = vmatprep.subr.mxu0 0.0
        %1569 = vmatpush1.msra.mxu0 %v177
        %1570 = vmatprep.subr.mxu0 0.0
        %1571 = vmatpush1.msra.mxu0 0.0
        %1572 = vmatprep.subr.mxu0 0.0
        %1573 = vmatpush1.msra.mxu0 0.0
        %1574 = vmatprep.subr.mxu0 0.0
        %1575 = vmatpush1.msra.mxu0 0.0
        %1576 = vmatprep.subr.mxu0 0.0
        %1577 = vmatpush1.msra.mxu0 0.0
        %1578 = vmatprep.subr.mxu0 0.0
        %1579 = vmatpush1.msra.mxu0 0.0
        %1580 = vmatprep.subr.mxu0 0.0
        %1581 = vmatpush1.msra.mxu0 0.0
        %1582 = vmatprep.subr.mxu0 0.0
        %1583 = vmatpush1.msra.mxu0 0.0
        %1584 = vmatprep.subr.mxu0 0.0
        %1585 = vmatpush1.msra.mxu0 0.0
        %1586 = vmatprep.subr.mxu0 0.0
        %1587 = vmatpush1.msra.mxu0 0.0
        %1588 = vmatprep.subr.mxu0 0.0
        %1589 = vmatpush1.msra.mxu0 0.0
        %1590 = vmatprep.subr.mxu0 0.0
        %1591 = vmatpush1.msra.mxu0 0.0
        %1592 = vmatprep.subr.mxu0 0.0
        %1593 = vmatpush1.msra.mxu0 0.0
        %1594 = vmatprep.subr.mxu0 0.0
        %1595 = vmatpush1.msra.mxu0 0.0
        %1596 = vmatprep.subr.mxu0 0.0
        %1597 = vmatpush1.msra.mxu0 0.0
        %1598 = vmatprep.subr.mxu0 0.0
        %1599 = vmatpush1.msra.mxu0 0.0
        %1600 = vmatprep.subr.mxu0 0.0
        %1601 = vmatpush1.msra.mxu0 0.0
        %1602 = vmatprep.subr.mxu0 0.0
        %1603 = vmatpush1.msra.mxu0 0.0
        %1604 = vmatprep.subr.mxu0 0.0
        %1605 = vmatpush1.msra.mxu0 0.0
        %1606 = vmatprep.subr.mxu0 0.0
        %1607 = vmatpush1.msra.mxu0 0.0
        %1608 = vmatprep.subr.mxu0 0.0
        %1609 = vmatpush1.msra.mxu0 0.0
        %1610 = vmatprep.subr.mxu0 0.0
        %1611 = vmatpush1.msra.mxu0 0.0
        %1612 = vmatprep.subr.mxu0 0.0
        %1613 = vmatpush1.msra.mxu0 0.0
        %1614 = vmatprep.subr.mxu0 0.0
        %1615 = vmatpush1.msra.mxu0 0.0
        %1616 = vmatprep.subr.mxu0 0.0
        %1617 = vmatpush1.msra.mxu0 0.0
        %1618 = vmatprep.subr.mxu0 0.0
        %1619 = vmatpush1.msra.mxu0 0.0
        %1620 = vmatprep.subr.mxu0 0.0
        %1621 = vmatpush1.msra.mxu0 0.0
        %1622 = vmatprep.subr.mxu0 0.0
        %1623 = vmatpush1.msra.mxu0 0.0
        %1624 = vmatprep.subr.mxu0 0.0
        %1625 = vmatpush1.msra.mxu0 0.0
        %1626 = vmatprep.mubr.f32.mxu0 0.0
        %1627 = vmatmul.mubr.f32.gmra.mrb[0].mxu0 %v1420
        %v1628 = vpop.f32.mrb[0].mxu0
        %v1629 = vadd.f32 %v386, %v1628
        %v1630 = vpop.f32.mrb[0].mxu0
        %1631 = vdwg.mxu0
        %1633 = vrot.lane.b32.xlu0 %v1489, 120
        %v1634 = vpop.permute.xlu0 %1633
        %1635 = vrot.lane.b32.xlu0 %v1489, 112
        %v1636 = vpop.permute.xlu0 %1635
        %1637 = vrot.lane.b32.xlu0 %v1489, 104
        %v1638 = vpop.permute.xlu0 %1637
        %1640 = vrot.lane.b32.xlu0 %v1559, 120
        %v1641 = vpop.permute.xlu0 %1640
        %1642 = vrot.lane.b32.xlu0 %v1559, 112
        %v1643 = vpop.permute.xlu0 %1642
        %1644 = vrot.lane.b32.xlu0 %v1559, 104
        %v1645 = vpop.permute.xlu0 %1644
        %1647 = vrot.lane.b32.xlu0 %v1629, 120
        %v1648 = vpop.permute.xlu0 %1647
        %1650 = vrot.lane.b32.xlu0 %v1629, 112
        %v1651 = vpop.permute.xlu0 %1650
        %1653 = vrot.lane.b32.xlu0 %v1629, 104
        %v1654 = vpop.permute.xlu0 %1653
        %v1656 = vsel %vm481, %v1489, 0
        %v1658 = vsel %vm481, %v1559, 0
        %1660 = vmatprep.subr.mxu0 0.0
        %1661 = vmatpush1.xpose.msra.mxu0 %v1658
        %1662 = vmatprep.subr.mxu0 0.0
        %1663 = vmatpush1.xpose.msra.mxu0 0.0
        %1664 = vmatprep.subr.mxu0 0.0
        %1665 = vmatpush1.xpose.msra.mxu0 0.0
        %1666 = vmatprep.subr.mxu0 0.0
        %1667 = vmatpush1.xpose.msra.mxu0 0.0
        %1668 = vmatprep.subr.mxu0 0.0
        %1669 = vmatpush1.xpose.msra.mxu0 0.0
        %1670 = vmatprep.subr.mxu0 0.0
        %1671 = vmatpush1.xpose.msra.mxu0 0.0
        %1672 = vmatprep.subr.mxu0 0.0
        %1673 = vmatpush1.xpose.msra.mxu0 0.0
        %1674 = vmatprep.subr.mxu0 0.0
        %1675 = vmatpush1.xpose.msra.mxu0 0.0
        %1676 = vmatprep.subr.mxu0 0.0
        %1677 = vmatpush1.xpose.msra.mxu0 0.0
        %1678 = vmatprep.subr.mxu0 0.0
        %1679 = vmatpush1.xpose.msra.mxu0 0.0
        %1680 = vmatprep.subr.mxu0 0.0
        %1681 = vmatpush1.xpose.msra.mxu0 0.0
        %1682 = vmatprep.subr.mxu0 0.0
        %1683 = vmatpush1.xpose.msra.mxu0 0.0
        %1684 = vmatprep.subr.mxu0 0.0
        %1685 = vmatpush1.xpose.msra.mxu0 0.0
        %1686 = vmatprep.subr.mxu0 0.0
        %1687 = vmatpush1.xpose.msra.mxu0 0.0
        %1688 = vmatprep.subr.mxu0 0.0
        %1689 = vmatpush1.xpose.msra.mxu0 0.0
        %1690 = vmatprep.subr.mxu0 0.0
        %1691 = vmatpush1.xpose.msra.mxu0 0.0
        %1692 = vmatprep.subr.mxu0 0.0
        %1693 = vmatpush1.xpose.msra.mxu0 0.0
        %1694 = vmatprep.subr.mxu0 0.0
        %1695 = vmatpush1.xpose.msra.mxu0 0.0
        %1696 = vmatprep.subr.mxu0 0.0
        %1697 = vmatpush1.xpose.msra.mxu0 0.0
        %1698 = vmatprep.subr.mxu0 0.0
        %1699 = vmatpush1.xpose.msra.mxu0 0.0
        %1700 = vmatprep.subr.mxu0 0.0
        %1701 = vmatpush1.xpose.msra.mxu0 0.0
        %1702 = vmatprep.subr.mxu0 0.0
        %1703 = vmatpush1.xpose.msra.mxu0 0.0
        %1704 = vmatprep.subr.mxu0 0.0
        %1705 = vmatpush1.xpose.msra.mxu0 0.0
        %1706 = vmatprep.subr.mxu0 0.0
        %1707 = vmatpush1.xpose.msra.mxu0 0.0
        %1708 = vmatprep.subr.mxu0 0.0
        %1709 = vmatpush1.xpose.msra.mxu0 0.0
        %1710 = vmatprep.subr.mxu0 0.0
        %1711 = vmatpush1.xpose.msra.mxu0 0.0
        %1712 = vmatprep.subr.mxu0 0.0
        %1713 = vmatpush1.xpose.msra.mxu0 0.0
        %1714 = vmatprep.subr.mxu0 0.0
        %1715 = vmatpush1.xpose.msra.mxu0 0.0
        %1716 = vmatprep.subr.mxu0 0.0
        %1717 = vmatpush1.xpose.msra.mxu0 0.0
        %1718 = vmatprep.subr.mxu0 0.0
        %1719 = vmatpush1.xpose.msra.mxu0 0.0
        %1720 = vmatprep.subr.mxu0 0.0
        %1721 = vmatpush1.xpose.msra.mxu0 0.0
        %1722 = vmatprep.subr.mxu0 0.0
        %1723 = vmatpush1.xpose.msra.mxu0 0.0
        %1724 = vmatprep.mubr.f32.mxu0 0.0
        %1725 = vmatmul.mubr.f32.gmra.mrb[0].mxu0 %v1656
        %v1726 = vpop.f32.mrb[0].mxu0
        %v1727 = vadd.f32 0.0, %v1726
        %v1728 = vpop.f32.mrb[0].mxu0
        %1729 = vdwg.mxu0
        %v1730 = vsel %vm481, %v1634, 0
        %v1732 = vsel %vm481, %v1641, 0
        %1734 = vmatprep.subr.mxu0 0.0
        %1735 = vmatpush1.xpose.msra.mxu0 %v1732
        %1736 = vmatprep.subr.mxu0 0.0
        %1737 = vmatpush1.xpose.msra.mxu0 0.0
        %1738 = vmatprep.subr.mxu0 0.0
        %1739 = vmatpush1.xpose.msra.mxu0 0.0
        %1740 = vmatprep.subr.mxu0 0.0
        %1741 = vmatpush1.xpose.msra.mxu0 0.0
        %1742 = vmatprep.subr.mxu0 0.0
        %1743 = vmatpush1.xpose.msra.mxu0 0.0
        %1744 = vmatprep.subr.mxu0 0.0
        %1745 = vmatpush1.xpose.msra.mxu0 0.0
        %1746 = vmatprep.subr.mxu0 0.0
        %1747 = vmatpush1.xpose.msra.mxu0 0.0
        %1748 = vmatprep.subr.mxu0 0.0
        %1749 = vmatpush1.xpose.msra.mxu0 0.0
        %1750 = vmatprep.subr.mxu0 0.0
        %1751 = vmatpush1.xpose.msra.mxu0 0.0
        %1752 = vmatprep.subr.mxu0 0.0
        %1753 = vmatpush1.xpose.msra.mxu0 0.0
        %1754 = vmatprep.subr.mxu0 0.0
        %1755 = vmatpush1.xpose.msra.mxu0 0.0
        %1756 = vmatprep.subr.mxu0 0.0
        %1757 = vmatpush1.xpose.msra.mxu0 0.0
        %1758 = vmatprep.subr.mxu0 0.0
        %1759 = vmatpush1.xpose.msra.mxu0 0.0
        %1760 = vmatprep.subr.mxu0 0.0
        %1761 = vmatpush1.xpose.msra.mxu0 0.0
        %1762 = vmatprep.subr.mxu0 0.0
        %1763 = vmatpush1.xpose.msra.mxu0 0.0
        %1764 = vmatprep.subr.mxu0 0.0
        %1765 = vmatpush1.xpose.msra.mxu0 0.0
        %1766 = vmatprep.subr.mxu0 0.0
        %1767 = vmatpush1.xpose.msra.mxu0 0.0
        %1768 = vmatprep.subr.mxu0 0.0
        %1769 = vmatpush1.xpose.msra.mxu0 0.0
        %1770 = vmatprep.subr.mxu0 0.0
        %1771 = vmatpush1.xpose.msra.mxu0 0.0
        %1772 = vmatprep.subr.mxu0 0.0
        %1773 = vmatpush1.xpose.msra.mxu0 0.0
        %1774 = vmatprep.subr.mxu0 0.0
        %1775 = vmatpush1.xpose.msra.mxu0 0.0
        %1776 = vmatprep.subr.mxu0 0.0
        %1777 = vmatpush1.xpose.msra.mxu0 0.0
        %1778 = vmatprep.subr.mxu0 0.0
        %1779 = vmatpush1.xpose.msra.mxu0 0.0
        %1780 = vmatprep.subr.mxu0 0.0
        %1781 = vmatpush1.xpose.msra.mxu0 0.0
        %1782 = vmatprep.subr.mxu0 0.0
        %1783 = vmatpush1.xpose.msra.mxu0 0.0
        %1784 = vmatprep.subr.mxu0 0.0
        %1785 = vmatpush1.xpose.msra.mxu0 0.0
        %1786 = vmatprep.subr.mxu0 0.0
        %1787 = vmatpush1.xpose.msra.mxu0 0.0
        %1788 = vmatprep.subr.mxu0 0.0
        %1789 = vmatpush1.xpose.msra.mxu0 0.0
        %1790 = vmatprep.subr.mxu0 0.0
        %1791 = vmatpush1.xpose.msra.mxu0 0.0
        %1792 = vmatprep.subr.mxu0 0.0
        %1793 = vmatpush1.xpose.msra.mxu0 0.0
        %1794 = vmatprep.subr.mxu0 0.0
        %1795 = vmatpush1.xpose.msra.mxu0 0.0
        %1796 = vmatprep.subr.mxu0 0.0
        %1797 = vmatpush1.xpose.msra.mxu0 0.0
        %1798 = vmatprep.mubr.f32.mxu0 0.0
        %1799 = vmatmul.mubr.f32.gmra.mrb[0].mxu0 %v1730
        %v1800 = vpop.f32.mrb[0].mxu0
        %v1801 = vadd.f32 0.0, %v1800
        %v1802 = vpop.f32.mrb[0].mxu0
        %1803 = vdwg.mxu0
        %v1804 = vsel %vm481, %v1636, 0
        %v1806 = vsel %vm481, %v1643, 0
        %1808 = vmatprep.subr.mxu0 0.0
        %1809 = vmatpush1.xpose.msra.mxu0 %v1806
        %1810 = vmatprep.subr.mxu0 0.0
        %1811 = vmatpush1.xpose.msra.mxu0 0.0
        %1812 = vmatprep.subr.mxu0 0.0
        %1813 = vmatpush1.xpose.msra.mxu0 0.0
        %1814 = vmatprep.subr.mxu0 0.0
        %1815 = vmatpush1.xpose.msra.mxu0 0.0
        %1816 = vmatprep.subr.mxu0 0.0
        %1817 = vmatpush1.xpose.msra.mxu0 0.0
        %1818 = vmatprep.subr.mxu0 0.0
        %1819 = vmatpush1.xpose.msra.mxu0 0.0
        %1820 = vmatprep.subr.mxu0 0.0
        %1821 = vmatpush1.xpose.msra.mxu0 0.0
        %1822 = vmatprep.subr.mxu0 0.0
        %1823 = vmatpush1.xpose.msra.mxu0 0.0
        %1824 = vmatprep.subr.mxu0 0.0
        %1825 = vmatpush1.xpose.msra.mxu0 0.0
        %1826 = vmatprep.subr.mxu0 0.0
        %1827 = vmatpush1.xpose.msra.mxu0 0.0
        %1828 = vmatprep.subr.mxu0 0.0
        %1829 = vmatpush1.xpose.msra.mxu0 0.0
        %1830 = vmatprep.subr.mxu0 0.0
        %1831 = vmatpush1.xpose.msra.mxu0 0.0
        %1832 = vmatprep.subr.mxu0 0.0
        %1833 = vmatpush1.xpose.msra.mxu0 0.0
        %1834 = vmatprep.subr.mxu0 0.0
        %1835 = vmatpush1.xpose.msra.mxu0 0.0
        %1836 = vmatprep.subr.mxu0 0.0
        %1837 = vmatpush1.xpose.msra.mxu0 0.0
        %1838 = vmatprep.subr.mxu0 0.0
        %1839 = vmatpush1.xpose.msra.mxu0 0.0
        %1840 = vmatprep.subr.mxu0 0.0
        %1841 = vmatpush1.xpose.msra.mxu0 0.0
        %1842 = vmatprep.subr.mxu0 0.0
        %1843 = vmatpush1.xpose.msra.mxu0 0.0
        %1844 = vmatprep.subr.mxu0 0.0
        %1845 = vmatpush1.xpose.msra.mxu0 0.0
        %1846 = vmatprep.subr.mxu0 0.0
        %1847 = vmatpush1.xpose.msra.mxu0 0.0
        %1848 = vmatprep.subr.mxu0 0.0
        %1849 = vmatpush1.xpose.msra.mxu0 0.0
        %1850 = vmatprep.subr.mxu0 0.0
        %1851 = vmatpush1.xpose.msra.mxu0 0.0
        %1852 = vmatprep.subr.mxu0 0.0
        %1853 = vmatpush1.xpose.msra.mxu0 0.0
        %1854 = vmatprep.subr.mxu0 0.0
        %1855 = vmatpush1.xpose.msra.mxu0 0.0
        %1856 = vmatprep.subr.mxu0 0.0
        %1857 = vmatpush1.xpose.msra.mxu0 0.0
        %1858 = vmatprep.subr.mxu0 0.0
        %1859 = vmatpush1.xpose.msra.mxu0 0.0
        %1860 = vmatprep.subr.mxu0 0.0
        %1861 = vmatpush1.xpose.msra.mxu0 0.0
        %1862 = vmatprep.subr.mxu0 0.0
        %1863 = vmatpush1.xpose.msra.mxu0 0.0
        %1864 = vmatprep.subr.mxu0 0.0
        %1865 = vmatpush1.xpose.msra.mxu0 0.0
        %1866 = vmatprep.subr.mxu0 0.0
        %1867 = vmatpush1.xpose.msra.mxu0 0.0
        %1868 = vmatprep.subr.mxu0 0.0
        %1869 = vmatpush1.xpose.msra.mxu0 0.0
        %1870 = vmatprep.subr.mxu0 0.0
        %1871 = vmatpush1.xpose.msra.mxu0 0.0
        %1872 = vmatprep.mubr.f32.mxu0 0.0
        %1873 = vmatmul.mubr.f32.gmra.mrb[0].mxu0 %v1804
        %v1874 = vpop.f32.mrb[0].mxu0
        %v1875 = vadd.f32 0.0, %v1874
        %v1876 = vpop.f32.mrb[0].mxu0
        %1877 = vdwg.mxu0
        %v1878 = vsel %vm481, %v1638, 0
        %v1880 = vsel %vm481, %v1645, 0
        %1882 = vmatprep.subr.mxu0 0.0
        %1883 = vmatpush1.xpose.msra.mxu0 %v1880
        %1884 = vmatprep.subr.mxu0 0.0
        %1885 = vmatpush1.xpose.msra.mxu0 0.0
        %1886 = vmatprep.subr.mxu0 0.0
        %1887 = vmatpush1.xpose.msra.mxu0 0.0
        %1888 = vmatprep.subr.mxu0 0.0
        %1889 = vmatpush1.xpose.msra.mxu0 0.0
        %1890 = vmatprep.subr.mxu0 0.0
        %1891 = vmatpush1.xpose.msra.mxu0 0.0
        %1892 = vmatprep.subr.mxu0 0.0
        %1893 = vmatpush1.xpose.msra.mxu0 0.0
        %1894 = vmatprep.subr.mxu0 0.0
        %1895 = vmatpush1.xpose.msra.mxu0 0.0
        %1896 = vmatprep.subr.mxu0 0.0
        %1897 = vmatpush1.xpose.msra.mxu0 0.0
        %1898 = vmatprep.subr.mxu0 0.0
        %1899 = vmatpush1.xpose.msra.mxu0 0.0
        %1900 = vmatprep.subr.mxu0 0.0
        %1901 = vmatpush1.xpose.msra.mxu0 0.0
        %1902 = vmatprep.subr.mxu0 0.0
        %1903 = vmatpush1.xpose.msra.mxu0 0.0
        %1904 = vmatprep.subr.mxu0 0.0
        %1905 = vmatpush1.xpose.msra.mxu0 0.0
        %1906 = vmatprep.subr.mxu0 0.0
        %1907 = vmatpush1.xpose.msra.mxu0 0.0
        %1908 = vmatprep.subr.mxu0 0.0
        %1909 = vmatpush1.xpose.msra.mxu0 0.0
        %1910 = vmatprep.subr.mxu0 0.0
        %1911 = vmatpush1.xpose.msra.mxu0 0.0
        %1912 = vmatprep.subr.mxu0 0.0
        %1913 = vmatpush1.xpose.msra.mxu0 0.0
        %1914 = vmatprep.subr.mxu0 0.0
        %1915 = vmatpush1.xpose.msra.mxu0 0.0
        %1916 = vmatprep.subr.mxu0 0.0
        %1917 = vmatpush1.xpose.msra.mxu0 0.0
        %1918 = vmatprep.subr.mxu0 0.0
        %1919 = vmatpush1.xpose.msra.mxu0 0.0
        %1920 = vmatprep.subr.mxu0 0.0
        %1921 = vmatpush1.xpose.msra.mxu0 0.0
        %1922 = vmatprep.subr.mxu0 0.0
        %1923 = vmatpush1.xpose.msra.mxu0 0.0
        %1924 = vmatprep.subr.mxu0 0.0
        %1925 = vmatpush1.xpose.msra.mxu0 0.0
        %1926 = vmatprep.subr.mxu0 0.0
        %1927 = vmatpush1.xpose.msra.mxu0 0.0
        %1928 = vmatprep.subr.mxu0 0.0
        %1929 = vmatpush1.xpose.msra.mxu0 0.0
        %1930 = vmatprep.subr.mxu0 0.0
        %1931 = vmatpush1.xpose.msra.mxu0 0.0
        %1932 = vmatprep.subr.mxu0 0.0
        %1933 = vmatpush1.xpose.msra.mxu0 0.0
        %1934 = vmatprep.subr.mxu0 0.0
        %1935 = vmatpush1.xpose.msra.mxu0 0.0
        %1936 = vmatprep.subr.mxu0 0.0
        %1937 = vmatpush1.xpose.msra.mxu0 0.0
        %1938 = vmatprep.subr.mxu0 0.0
        %1939 = vmatpush1.xpose.msra.mxu0 0.0
        %1940 = vmatprep.subr.mxu0 0.0
        %1941 = vmatpush1.xpose.msra.mxu0 0.0
        %1942 = vmatprep.subr.mxu0 0.0
        %1943 = vmatpush1.xpose.msra.mxu0 0.0
        %1944 = vmatprep.subr.mxu0 0.0
        %1945 = vmatpush1.xpose.msra.mxu0 0.0
        %1946 = vmatprep.mubr.f32.mxu0 0.0
        %1947 = vmatmul.mubr.f32.gmra.mrb[0].mxu0 %v1878
        %v1948 = vpop.f32.mrb[0].mxu0
        %v1949 = vadd.f32 0.0, %v1948
        %v1950 = vpop.f32.mrb[0].mxu0
        %1951 = vdwg.mxu0
        %v1952 = vmul.f32 %v1727, 0.35355338
        %v1953 = vmul.f32 %v1801, 0.35355338
        %v1954 = vmul.f32 %v1875, 0.35355338
        %v1955 = vmul.f32 %v1949, 0.35355338
        %v1956 = vsel %vm481, %v1952, -inf
        %1957 = vmax.xlane.f32.xlu0 %v1956
        %v1958 = vpop.xlane.xlu0 %1957
        %v1959 = vsel %vm481, %v1953, -inf
        %1960 = vmax.xlane.f32.xlu0 %v1959
        %v1961 = vpop.xlane.xlu0 %1960
        %v1962 = vsel %vm481, %v1954, -inf
        %1963 = vmax.xlane.f32.xlu0 %v1962
        %v1964 = vpop.xlane.xlu0 %1963
        %v1965 = vsel %vm481, %v1955, -inf
        %1966 = vmax.xlane.f32.xlu0 %v1965
        %v1967 = vpop.xlane.xlu0 %1966
        %v1968 = vsub.f32 %v1952, %v1958
        %v1969 = vsub.f32 %v1953, %v1961
        %v1970 = vsub.f32 %v1954, %v1964
        %v1971 = vsub.f32 %v1955, %v1967
        %v1972 = vmul.f32 %v1968, 1.442695
        %v1973 = vpow.pop %v1972
        %v1974 = vmul.f32 %v1969, 1.442695
        %v1975 = vpow.pop %v1974
        %v1976 = vmul.f32 %v1970, 1.442695
        %v1977 = vpow.pop %v1976
        %v1978 = vmul.f32 %v1971, 1.442695
        %v1979 = vpow.pop %v1978
        %v1980 = vsel %vm481, %v1973, 0.0
        %1981 = vadd.xlane.f32.xlu0 %v1980
        %v1982 = vpop.xlane.xlu0 %1981
        %v1983 = vsel %vm481, %v1975, 0.0
        %1984 = vadd.xlane.f32.xlu0 %v1983
        %v1985 = vpop.xlane.xlu0 %1984
        %v1986 = vsel %vm481, %v1977, 0.0
        %1987 = vadd.xlane.f32.xlu0 %v1986
        %v1988 = vpop.xlane.xlu0 %1987
        %v1989 = vsel %vm481, %v1979, 0.0
        %1990 = vadd.xlane.f32.xlu0 %v1989
        %v1991 = vpop.xlane.xlu0 %1990
        %v1992 = vrcp.pop %v1982
        %v1993 = vmul.f32 %v1973, %v1992
        %v1994 = vrcp.pop %v1985
        %v1995 = vmul.f32 %v1975, %v1994
        %v1996 = vrcp.pop %v1988
        %v1997 = vmul.f32 %v1977, %v1996
        %v1998 = vrcp.pop %v1991
        %v1999 = vmul.f32 %v1979, %v1998
        %v2001 = vsel %vm481, %v1993, 0
        %2003 = vmatprep.subr.mxu0 0.0
        %2004 = vmatpush1.msra.mxu0 %v1629
        %2005 = vmatprep.subr.mxu0 0.0
        %2006 = vmatpush1.msra.mxu0 0.0
        %2007 = vmatprep.subr.mxu0 0.0
        %2008 = vmatpush1.msra.mxu0 0.0
        %2009 = vmatprep.subr.mxu0 0.0
        %2010 = vmatpush1.msra.mxu0 0.0
        %2011 = vmatprep.subr.mxu0 0.0
        %2012 = vmatpush1.msra.mxu0 0.0
        %2013 = vmatprep.subr.mxu0 0.0
        %2014 = vmatpush1.msra.mxu0 0.0
        %2015 = vmatprep.subr.mxu0 0.0
        %2016 = vmatpush1.msra.mxu0 0.0
        %2017 = vmatprep.subr.mxu0 0.0
        %2018 = vmatpush1.msra.mxu0 0.0
        %2019 = vmatprep.subr.mxu0 0.0
        %2020 = vmatpush1.msra.mxu0 0.0
        %2021 = vmatprep.subr.mxu0 0.0
        %2022 = vmatpush1.msra.mxu0 0.0
        %2023 = vmatprep.subr.mxu0 0.0
        %2024 = vmatpush1.msra.mxu0 0.0
        %2025 = vmatprep.subr.mxu0 0.0
        %2026 = vmatpush1.msra.mxu0 0.0
        %2027 = vmatprep.subr.mxu0 0.0
        %2028 = vmatpush1.msra.mxu0 0.0
        %2029 = vmatprep.subr.mxu0 0.0
        %2030 = vmatpush1.msra.mxu0 0.0
        %2031 = vmatprep.subr.mxu0 0.0
        %2032 = vmatpush1.msra.mxu0 0.0
        %2033 = vmatprep.subr.mxu0 0.0
        %2034 = vmatpush1.msra.mxu0 0.0
        %2035 = vmatprep.subr.mxu0 0.0
        %2036 = vmatpush1.msra.mxu0 0.0
        %2037 = vmatprep.subr.mxu0 0.0
        %2038 = vmatpush1.msra.mxu0 0.0
        %2039 = vmatprep.subr.mxu0 0.0
        %2040 = vmatpush1.msra.mxu0 0.0
        %2041 = vmatprep.subr.mxu0 0.0
        %2042 = vmatpush1.msra.mxu0 0.0
        %2043 = vmatprep.subr.mxu0 0.0
        %2044 = vmatpush1.msra.mxu0 0.0
        %2045 = vmatprep.subr.mxu0 0.0
        %2046 = vmatpush1.msra.mxu0 0.0
        %2047 = vmatprep.subr.mxu0 0.0
        %2048 = vmatpush1.msra.mxu0 0.0
        %2049 = vmatprep.subr.mxu0 0.0
        %2050 = vmatpush1.msra.mxu0 0.0
        %2051 = vmatprep.subr.mxu0 0.0
        %2052 = vmatpush1.msra.mxu0 0.0
        %2053 = vmatprep.subr.mxu0 0.0
        %2054 = vmatpush1.msra.mxu0 0.0
        %2055 = vmatprep.subr.mxu0 0.0
        %2056 = vmatpush1.msra.mxu0 0.0
        %2057 = vmatprep.subr.mxu0 0.0
        %2058 = vmatpush1.msra.mxu0 0.0
        %2059 = vmatprep.subr.mxu0 0.0
        %2060 = vmatpush1.msra.mxu0 0.0
        %2061 = vmatprep.subr.mxu0 0.0
        %2062 = vmatpush1.msra.mxu0 0.0
        %2063 = vmatprep.subr.mxu0 0.0
        %2064 = vmatpush1.msra.mxu0 0.0
        %2065 = vmatprep.subr.mxu0 0.0
        %2066 = vmatpush1.msra.mxu0 0.0
        %2067 = vmatprep.mubr.f32.mxu0 0.0
        %2068 = vmatmul.mubr.f32.gmra.mrb[0].mxu0 %v2001
        %v2069 = vpop.f32.mrb[0].mxu0
        %v2070 = vadd.f32 0.0, %v2069
        %v2071 = vpop.f32.mrb[0].mxu0
        %2072 = vdwg.mxu0
        %v2074 = vsel %vm481, %v1995, 0
        %2076 = vmatprep.subr.mxu0 0.0
        %2077 = vmatpush1.msra.mxu0 %v1648
        %2078 = vmatprep.subr.mxu0 0.0
        %2079 = vmatpush1.msra.mxu0 0.0
        %2080 = vmatprep.subr.mxu0 0.0
        %2081 = vmatpush1.msra.mxu0 0.0
        %2082 = vmatprep.subr.mxu0 0.0
        %2083 = vmatpush1.msra.mxu0 0.0
        %2084 = vmatprep.subr.mxu0 0.0
        %2085 = vmatpush1.msra.mxu0 0.0
        %2086 = vmatprep.subr.mxu0 0.0
        %2087 = vmatpush1.msra.mxu0 0.0
        %2088 = vmatprep.subr.mxu0 0.0
        %2089 = vmatpush1.msra.mxu0 0.0
        %2090 = vmatprep.subr.mxu0 0.0
        %2091 = vmatpush1.msra.mxu0 0.0
        %2092 = vmatprep.subr.mxu0 0.0
        %2093 = vmatpush1.msra.mxu0 0.0
        %2094 = vmatprep.subr.mxu0 0.0
        %2095 = vmatpush1.msra.mxu0 0.0
        %2096 = vmatprep.subr.mxu0 0.0
        %2097 = vmatpush1.msra.mxu0 0.0
        %2098 = vmatprep.subr.mxu0 0.0
        %2099 = vmatpush1.msra.mxu0 0.0
        %2100 = vmatprep.subr.mxu0 0.0
        %2101 = vmatpush1.msra.mxu0 0.0
        %2102 = vmatprep.subr.mxu0 0.0
        %2103 = vmatpush1.msra.mxu0 0.0
        %2104 = vmatprep.subr.mxu0 0.0
        %2105 = vmatpush1.msra.mxu0 0.0
        %2106 = vmatprep.subr.mxu0 0.0
        %2107 = vmatpush1.msra.mxu0 0.0
        %2108 = vmatprep.subr.mxu0 0.0
        %2109 = vmatpush1.msra.mxu0 0.0
        %2110 = vmatprep.subr.mxu0 0.0
        %2111 = vmatpush1.msra.mxu0 0.0
        %2112 = vmatprep.subr.mxu0 0.0
        %2113 = vmatpush1.msra.mxu0 0.0
        %2114 = vmatprep.subr.mxu0 0.0
        %2115 = vmatpush1.msra.mxu0 0.0
        %2116 = vmatprep.subr.mxu0 0.0
        %2117 = vmatpush1.msra.mxu0 0.0
        %2118 = vmatprep.subr.mxu0 0.0
        %2119 = vmatpush1.msra.mxu0 0.0
        %2120 = vmatprep.subr.mxu0 0.0
        %2121 = vmatpush1.msra.mxu0 0.0
        %2122 = vmatprep.subr.mxu0 0.0
        %2123 = vmatpush1.msra.mxu0 0.0
        %2124 = vmatprep.subr.mxu0 0.0
        %2125 = vmatpush1.msra.mxu0 0.0
        %2126 = vmatprep.subr.mxu0 0.0
        %2127 = vmatpush1.msra.mxu0 0.0
        %2128 = vmatprep.subr.mxu0 0.0
        %2129 = vmatpush1.msra.mxu0 0.0
        %2130 = vmatprep.subr.mxu0 0.0
        %2131 = vmatpush1.msra.mxu0 0.0
        %2132 = vmatprep.subr.mxu0 0.0
        %2133 = vmatpush1.msra.mxu0 0.0
        %2134 = vmatprep.subr.mxu0 0.0
        %2135 = vmatpush1.msra.mxu0 0.0
        %2136 = vmatprep.subr.mxu0 0.0
        %2137 = vmatpush1.msra.mxu0 0.0
        %2138 = vmatprep.subr.mxu0 0.0
        %2139 = vmatpush1.msra.mxu0 0.0
        %2140 = vmatprep.mubr.f32.mxu0 0.0
        %2141 = vmatmul.mubr.f32.gmra.mrb[0].mxu0 %v2074
        %v2142 = vpop.f32.mrb[0].mxu0
        %v2143 = vadd.f32 0.0, %v2142
        %v2144 = vpop.f32.mrb[0].mxu0
        %2145 = vdwg.mxu0
        %v2147 = vsel %vm481, %v1997, 0
        %2149 = vmatprep.subr.mxu0 0.0
        %2150 = vmatpush1.msra.mxu0 %v1651
        %2151 = vmatprep.subr.mxu0 0.0
        %2152 = vmatpush1.msra.mxu0 0.0
        %2153 = vmatprep.subr.mxu0 0.0
        %2154 = vmatpush1.msra.mxu0 0.0
        %2155 = vmatprep.subr.mxu0 0.0
        %2156 = vmatpush1.msra.mxu0 0.0
        %2157 = vmatprep.subr.mxu0 0.0
        %2158 = vmatpush1.msra.mxu0 0.0
        %2159 = vmatprep.subr.mxu0 0.0
        %2160 = vmatpush1.msra.mxu0 0.0
        %2161 = vmatprep.subr.mxu0 0.0
        %2162 = vmatpush1.msra.mxu0 0.0
        %2163 = vmatprep.subr.mxu0 0.0
        %2164 = vmatpush1.msra.mxu0 0.0
        %2165 = vmatprep.subr.mxu0 0.0
        %2166 = vmatpush1.msra.mxu0 0.0
        %2167 = vmatprep.subr.mxu0 0.0
        %2168 = vmatpush1.msra.mxu0 0.0
        %2169 = vmatprep.subr.mxu0 0.0
        %2170 = vmatpush1.msra.mxu0 0.0
        %2171 = vmatprep.subr.mxu0 0.0
        %2172 = vmatpush1.msra.mxu0 0.0
        %2173 = vmatprep.subr.mxu0 0.0
        %2174 = vmatpush1.msra.mxu0 0.0
        %2175 = vmatprep.subr.mxu0 0.0
        %2176 = vmatpush1.msra.mxu0 0.0
        %2177 = vmatprep.subr.mxu0 0.0
        %2178 = vmatpush1.msra.mxu0 0.0
        %2179 = vmatprep.subr.mxu0 0.0
        %2180 = vmatpush1.msra.mxu0 0.0
        %2181 = vmatprep.subr.mxu0 0.0
        %2182 = vmatpush1.msra.mxu0 0.0
        %2183 = vmatprep.subr.mxu0 0.0
        %2184 = vmatpush1.msra.mxu0 0.0
        %2185 = vmatprep.subr.mxu0 0.0
        %2186 = vmatpush1.msra.mxu0 0.0
        %2187 = vmatprep.subr.mxu0 0.0
        %2188 = vmatpush1.msra.mxu0 0.0
        %2189 = vmatprep.subr.mxu0 0.0
        %2190 = vmatpush1.msra.mxu0 0.0
        %2191 = vmatprep.subr.mxu0 0.0
        %2192 = vmatpush1.msra.mxu0 0.0
        %2193 = vmatprep.subr.mxu0 0.0
        %2194 = vmatpush1.msra.mxu0 0.0
        %2195 = vmatprep.subr.mxu0 0.0
        %2196 = vmatpush1.msra.mxu0 0.0
        %2197 = vmatprep.subr.mxu0 0.0
        %2198 = vmatpush1.msra.mxu0 0.0
        %2199 = vmatprep.subr.mxu0 0.0
        %2200 = vmatpush1.msra.mxu0 0.0
        %2201 = vmatprep.subr.mxu0 0.0
        %2202 = vmatpush1.msra.mxu0 0.0
        %2203 = vmatprep.subr.mxu0 0.0
        %2204 = vmatpush1.msra.mxu0 0.0
        %2205 = vmatprep.subr.mxu0 0.0
        %2206 = vmatpush1.msra.mxu0 0.0
        %2207 = vmatprep.subr.mxu0 0.0
        %2208 = vmatpush1.msra.mxu0 0.0
        %2209 = vmatprep.subr.mxu0 0.0
        %2210 = vmatpush1.msra.mxu0 0.0
        %2211 = vmatprep.subr.mxu0 0.0
        %2212 = vmatpush1.msra.mxu0 0.0
        %2213 = vmatprep.mubr.f32.mxu0 0.0
        %2214 = vmatmul.mubr.f32.gmra.mrb[0].mxu0 %v2147
        %v2215 = vpop.f32.mrb[0].mxu0
        %v2216 = vadd.f32 0.0, %v2215
        %v2217 = vpop.f32.mrb[0].mxu0
        %2218 = vdwg.mxu0
        %v2220 = vsel %vm481, %v1999, 0
        %2222 = vmatprep.subr.mxu0 0.0
        %2223 = vmatpush1.msra.mxu0 %v1654
        %2224 = vmatprep.subr.mxu0 0.0
        %2225 = vmatpush1.msra.mxu0 0.0
        %2226 = vmatprep.subr.mxu0 0.0
        %2227 = vmatpush1.msra.mxu0 0.0
        %2228 = vmatprep.subr.mxu0 0.0
        %2229 = vmatpush1.msra.mxu0 0.0
        %2230 = vmatprep.subr.mxu0 0.0
        %2231 = vmatpush1.msra.mxu0 0.0
        %2232 = vmatprep.subr.mxu0 0.0
        %2233 = vmatpush1.msra.mxu0 0.0
        %2234 = vmatprep.subr.mxu0 0.0
        %2235 = vmatpush1.msra.mxu0 0.0
        %2236 = vmatprep.subr.mxu0 0.0
        %2237 = vmatpush1.msra.mxu0 0.0
        %2238 = vmatprep.subr.mxu0 0.0
        %2239 = vmatpush1.msra.mxu0 0.0
        %2240 = vmatprep.subr.mxu0 0.0
        %2241 = vmatpush1.msra.mxu0 0.0
        %2242 = vmatprep.subr.mxu0 0.0
        %2243 = vmatpush1.msra.mxu0 0.0
        %2244 = vmatprep.subr.mxu0 0.0
        %2245 = vmatpush1.msra.mxu0 0.0
        %2246 = vmatprep.subr.mxu0 0.0
        %2247 = vmatpush1.msra.mxu0 0.0
        %2248 = vmatprep.subr.mxu0 0.0
        %2249 = vmatpush1.msra.mxu0 0.0
        %2250 = vmatprep.subr.mxu0 0.0
        %2251 = vmatpush1.msra.mxu0 0.0
        %2252 = vmatprep.subr.mxu0 0.0
        %2253 = vmatpush1.msra.mxu0 0.0
        %2254 = vmatprep.subr.mxu0 0.0
        %2255 = vmatpush1.msra.mxu0 0.0
        %2256 = vmatprep.subr.mxu0 0.0
        %2257 = vmatpush1.msra.mxu0 0.0
        %2258 = vmatprep.subr.mxu0 0.0
        %2259 = vmatpush1.msra.mxu0 0.0
        %2260 = vmatprep.subr.mxu0 0.0
        %2261 = vmatpush1.msra.mxu0 0.0
        %2262 = vmatprep.subr.mxu0 0.0
        %2263 = vmatpush1.msra.mxu0 0.0
        %2264 = vmatprep.subr.mxu0 0.0
        %2265 = vmatpush1.msra.mxu0 0.0
        %2266 = vmatprep.subr.mxu0 0.0
        %2267 = vmatpush1.msra.mxu0 0.0
        %2268 = vmatprep.subr.mxu0 0.0
        %2269 = vmatpush1.msra.mxu0 0.0
        %2270 = vmatprep.subr.mxu0 0.0
        %2271 = vmatpush1.msra.mxu0 0.0
        %2272 = vmatprep.subr.mxu0 0.0
        %2273 = vmatpush1.msra.mxu0 0.0
        %2274 = vmatprep.subr.mxu0 0.0
        %2275 = vmatpush1.msra.mxu0 0.0
        %2276 = vmatprep.subr.mxu0 0.0
        %2277 = vmatpush1.msra.mxu0 0.0
        %2278 = vmatprep.subr.mxu0 0.0
        %2279 = vmatpush1.msra.mxu0 0.0
        %2280 = vmatprep.subr.mxu0 0.0
        %2281 = vmatpush1.msra.mxu0 0.0
        %2282 = vmatprep.subr.mxu0 0.0
        %2283 = vmatpush1.msra.mxu0 0.0
        %2284 = vmatprep.subr.mxu0 0.0
        %2285 = vmatpush1.msra.mxu0 0.0
        %2286 = vmatprep.mubr.f32.mxu0 0.0
        %2287 = vmatmul.mubr.f32.gmra.mrb[0].mxu0 %v2220
        %v2288 = vpop.f32.mrb[0].mxu0
        %v2289 = vadd.f32 0.0, %v2288
        %v2290 = vpop.f32.mrb[0].mxu0
        %2291 = vdwg.mxu0
        %2292 = vst.msk [vmem:[#allocation2] sm:$0xff] %vm481, %v2070
        %2294 = vrot.lane.b32.xlu0 %v2143, 8
        %v2295 = vpop.permute.xlu0 %2294
        %2297 = vst.msk [vmem:[#allocation2] sm:$0xff] %vm1123, %v2295
        %2299 = vrot.lane.b32.xlu0 %v2216, 16
        %v2300 = vpop.permute.xlu0 %2299
        %2302 = vst.msk [vmem:[#allocation2] sm:$0xff] %vm1129, %v2300
        %2304 = vrot.lane.b32.xlu0 %v2289, 24
        %v2305 = vpop.permute.xlu0 %2304
        %2307 = vst.msk [vmem:[#allocation2] sm:$0xff] %vm1135, %v2305
        %v2308 = vld [vmem:[#allocation2] sm:$0xff]
        %v2310 = vsel %vm207, %v2308, 0
        %2312 = vmatprep.subr.mxu0 0.0
        %2313 = vmatpush1.msra.mxu0 %v178
        %2314 = vmatprep.subr.mxu0 0.0
        %2315 = vmatpush1.msra.mxu0 %v179
        %2316 = vmatprep.subr.mxu0 0.0
        %2317 = vmatpush1.msra.mxu0 %v180
        %2318 = vmatprep.subr.mxu0 0.0
        %2319 = vmatpush1.msra.mxu0 %v181
        %2320 = vmatprep.subr.mxu0 0.0
        %2321 = vmatpush1.msra.mxu0 0.0
        %2322 = vmatprep.subr.mxu0 0.0
        %2323 = vmatpush1.msra.mxu0 0.0
        %2324 = vmatprep.subr.mxu0 0.0
        %2325 = vmatpush1.msra.mxu0 0.0
        %2326 = vmatprep.subr.mxu0 0.0
        %2327 = vmatpush1.msra.mxu0 0.0
        %2328 = vmatprep.subr.mxu0 0.0
        %2329 = vmatpush1.msra.mxu0 0.0
        %2330 = vmatprep.subr.mxu0 0.0
        %2331 = vmatpush1.msra.mxu0 0.0
        %2332 = vmatprep.subr.mxu0 0.0
        %2333 = vmatpush1.msra.mxu0 0.0
        %2334 = vmatprep.subr.mxu0 0.0
        %2335 = vmatpush1.msra.mxu0 0.0
        %2336 = vmatprep.subr.mxu0 0.0
        %2337 = vmatpush1.msra.mxu0 0.0
        %2338 = vmatprep.subr.mxu0 0.0
        %2339 = vmatpush1.msra.mxu0 0.0
        %2340 = vmatprep.subr.mxu0 0.0
        %2341 = vmatpush1.msra.mxu0 0.0
        %2342 = vmatprep.subr.mxu0 0.0
        %2343 = vmatpush1.msra.mxu0 0.0
        %2344 = vmatprep.subr.mxu0 0.0
        %2345 = vmatpush1.msra.mxu0 0.0
        %2346 = vmatprep.subr.mxu0 0.0
        %2347 = vmatpush1.msra.mxu0 0.0
        %2348 = vmatprep.subr.mxu0 0.0
        %2349 = vmatpush1.msra.mxu0 0.0
        %2350 = vmatprep.subr.mxu0 0.0
        %2351 = vmatpush1.msra.mxu0 0.0
        %2352 = vmatprep.subr.mxu0 0.0
        %2353 = vmatpush1.msra.mxu0 0.0
        %2354 = vmatprep.subr.mxu0 0.0
        %2355 = vmatpush1.msra.mxu0 0.0
        %2356 = vmatprep.subr.mxu0 0.0
        %2357 = vmatpush1.msra.mxu0 0.0
        %2358 = vmatprep.subr.mxu0 0.0
        %2359 = vmatpush1.msra.mxu0 0.0
        %2360 = vmatprep.subr.mxu0 0.0
        %2361 = vmatpush1.msra.mxu0 0.0
        %2362 = vmatprep.subr.mxu0 0.0
        %2363 = vmatpush1.msra.mxu0 0.0
        %2364 = vmatprep.subr.mxu0 0.0
        %2365 = vmatpush1.msra.mxu0 0.0
        %2366 = vmatprep.subr.mxu0 0.0
        %2367 = vmatpush1.msra.mxu0 0.0
        %2368 = vmatprep.subr.mxu0 0.0
        %2369 = vmatpush1.msra.mxu0 0.0
        %2370 = vmatprep.subr.mxu0 0.0
        %2371 = vmatpush1.msra.mxu0 0.0
        %2372 = vmatprep.subr.mxu0 0.0
        %2373 = vmatpush1.msra.mxu0 0.0
        %2374 = vmatprep.subr.mxu0 0.0
        %2375 = vmatpush1.msra.mxu0 0.0
        %2376 = vmatprep.mubr.f32.mxu0 0.0
        %2377 = vmatmul.mubr.f32.gmra.mrb[0].mxu0 %v2310
        %v2378 = vpop.f32.mrb[0].mxu0
        %v2379 = vadd.f32 %v1141, %v2378
        %v2380 = vpop.f32.mrb[0].mxu0
        %2381 = vdwg.mxu0
        %v2382 = vadd.f32 %v1403, %v2379
        %v2383 = vsel %vm207, %v2382, 0.0
        %2384 = vadd.xlane.f32.xlu0 %v2383
        %v2385 = vpop.xlane.xlu0 %2384
        %v2386 = vmul.f32 %v2385, %v211
        %v2387 = vsub.f32 %v2382, %v2386
        %v2388 = vmul.f32 %v2387, %v2387
        %v2389 = vsel %vm207, %v2388, 0.0
        %2390 = vadd.xlane.f32.xlu0 %v2389
        %v2391 = vpop.xlane.xlu0 %2390
        %v2392 = vmul.f32 %v2391, %v211
        %v2393 = vadd.f32 %v2392, 1e-05
        %v2394 = vrsqrt.pop %v2393
        %v2395 = vmul.f32 %v2387, %v2394
        %v2396 = vmul.f32 %v2395, %v1232
        %v2397 = vadd.f32 %v2396, %v1237
        %v2399 = vsel %vm207, %v2397, 0
        %2401 = vmatprep.subr.mxu0 0.0
        %2402 = vmatpush1.msra.mxu0 %v200
        %2403 = vmatprep.subr.mxu0 0.0
        %2404 = vmatpush1.msra.mxu0 %v201
        %2405 = vmatprep.subr.mxu0 0.0
        %2406 = vmatpush1.msra.mxu0 %v202
        %2407 = vmatprep.subr.mxu0 0.0
        %2408 = vmatpush1.msra.mxu0 %v203
        %2409 = vmatprep.subr.mxu0 0.0
        %2410 = vmatpush1.msra.mxu0 0.0
        %2411 = vmatprep.subr.mxu0 0.0
        %2412 = vmatpush1.msra.mxu0 0.0
        %2413 = vmatprep.subr.mxu0 0.0
        %2414 = vmatpush1.msra.mxu0 0.0
        %2415 = vmatprep.subr.mxu0 0.0
        %2416 = vmatpush1.msra.mxu0 0.0
        %2417 = vmatprep.subr.mxu0 0.0
        %2418 = vmatpush1.msra.mxu0 0.0
        %2419 = vmatprep.subr.mxu0 0.0
        %2420 = vmatpush1.msra.mxu0 0.0
        %2421 = vmatprep.subr.mxu0 0.0
        %2422 = vmatpush1.msra.mxu0 0.0
        %2423 = vmatprep.subr.mxu0 0.0
        %2424 = vmatpush1.msra.mxu0 0.0
        %2425 = vmatprep.subr.mxu0 0.0
        %2426 = vmatpush1.msra.mxu0 0.0
        %2427 = vmatprep.subr.mxu0 0.0
        %2428 = vmatpush1.msra.mxu0 0.0
        %2429 = vmatprep.subr.mxu0 0.0
        %2430 = vmatpush1.msra.mxu0 0.0
        %2431 = vmatprep.subr.mxu0 0.0
        %2432 = vmatpush1.msra.mxu0 0.0
        %2433 = vmatprep.subr.mxu0 0.0
        %2434 = vmatpush1.msra.mxu0 0.0
        %2435 = vmatprep.subr.mxu0 0.0
        %2436 = vmatpush1.msra.mxu0 0.0
        %2437 = vmatprep.subr.mxu0 0.0
        %2438 = vmatpush1.msra.mxu0 0.0
        %2439 = vmatprep.subr.mxu0 0.0
        %2440 = vmatpush1.msra.mxu0 0.0
        %2441 = vmatprep.subr.mxu0 0.0
        %2442 = vmatpush1.msra.mxu0 0.0
        %2443 = vmatprep.subr.mxu0 0.0
        %2444 = vmatpush1.msra.mxu0 0.0
        %2445 = vmatprep.subr.mxu0 0.0
        %2446 = vmatpush1.msra.mxu0 0.0
        %2447 = vmatprep.subr.mxu0 0.0
        %2448 = vmatpush1.msra.mxu0 0.0
        %2449 = vmatprep.subr.mxu0 0.0
        %2450 = vmatpush1.msra.mxu0 0.0
        %2451 = vmatprep.subr.mxu0 0.0
        %2452 = vmatpush1.msra.mxu0 0.0
        %2453 = vmatprep.subr.mxu0 0.0
        %2454 = vmatpush1.msra.mxu0 0.0
        %2455 = vmatprep.subr.mxu0 0.0
        %2456 = vmatpush1.msra.mxu0 0.0
        %2457 = vmatprep.subr.mxu0 0.0
        %2458 = vmatpush1.msra.mxu0 0.0
        %2459 = vmatprep.subr.mxu0 0.0
        %2460 = vmatpush1.msra.mxu0 0.0
        %2461 = vmatprep.subr.mxu0 0.0
        %2462 = vmatpush1.msra.mxu0 0.0
        %2463 = vmatprep.subr.mxu0 0.0
        %2464 = vmatpush1.msra.mxu0 0.0
        %2465 = vmatprep.mubr.f32.mxu0 0.0
        %2466 = vmatmul.mubr.f32.gmra.mrb[0].mxu0 %v2399
        %v2467 = vpop.f32.mrb[0].mxu0
        %v2468 = vadd.f32 %v1242, %v2467
        %v2469 = vpop.f32.mrb[0].mxu0
        %2470 = vdwg.mxu0
        %v2471 = vmul.f32 %v2468, 0.5
        %v2472 = vmul.f32 %v2468, 0.044715
        %v2473 = vmul.f32 %v2472, %v2468
        %v2474 = vmul.f32 %v2473, %v2468
        %v2475 = vadd.f32 %v2468, %v2474
        %v2476 = vmul.f32 %v2475, 0.7978846
        %v2477 = vtanh.pop %v2476
        %v2478 = vadd.f32 %v2477, 1.0
        %v2479 = vmul.f32 %v2471, %v2478
        %v2481 = vsel %vm1329, %v2479, 0
        %2483 = vmatprep.subr.mxu0 0.0
        %2484 = vmatpush1.msra.mxu0 %v182
        %2485 = vmatprep.subr.mxu0 0.0
        %2486 = vmatpush1.msra.mxu0 %v183
        %2487 = vmatprep.subr.mxu0 0.0
        %2488 = vmatpush1.msra.mxu0 %v184
        %2489 = vmatprep.subr.mxu0 0.0
        %2490 = vmatpush1.msra.mxu0 %v185
        %2491 = vmatprep.subr.mxu0 0.0
        %2492 = vmatpush1.msra.mxu0 %v186
        %2493 = vmatprep.subr.mxu0 0.0
        %2494 = vmatpush1.msra.mxu0 %v187
        %2495 = vmatprep.subr.mxu0 0.0
        %2496 = vmatpush1.msra.mxu0 %v188
        %2497 = vmatprep.subr.mxu0 0.0
        %2498 = vmatpush1.msra.mxu0 %v189
        %2499 = vmatprep.subr.mxu0 0.0
        %2500 = vmatpush1.msra.mxu0 0.0
        %2501 = vmatprep.subr.mxu0 0.0
        %2502 = vmatpush1.msra.mxu0 0.0
        %2503 = vmatprep.subr.mxu0 0.0
        %2504 = vmatpush1.msra.mxu0 0.0
        %2505 = vmatprep.subr.mxu0 0.0
        %2506 = vmatpush1.msra.mxu0 0.0
        %2507 = vmatprep.subr.mxu0 0.0
        %2508 = vmatpush1.msra.mxu0 0.0
        %2509 = vmatprep.subr.mxu0 0.0
        %2510 = vmatpush1.msra.mxu0 0.0
        %2511 = vmatprep.subr.mxu0 0.0
        %2512 = vmatpush1.msra.mxu0 0.0
        %2513 = vmatprep.subr.mxu0 0.0
        %2514 = vmatpush1.msra.mxu0 0.0
        %2515 = vmatprep.subr.mxu0 0.0
        %2516 = vmatpush1.msra.mxu0 0.0
        %2517 = vmatprep.subr.mxu0 0.0
        %2518 = vmatpush1.msra.mxu0 0.0
        %2519 = vmatprep.subr.mxu0 0.0
        %2520 = vmatpush1.msra.mxu0 0.0
        %2521 = vmatprep.subr.mxu0 0.0
        %2522 = vmatpush1.msra.mxu0 0.0
        %2523 = vmatprep.subr.mxu0 0.0
        %2524 = vmatpush1.msra.mxu0 0.0
        %2525 = vmatprep.subr.mxu0 0.0
        %2526 = vmatpush1.msra.mxu0 0.0
        %2527 = vmatprep.subr.mxu0 0.0
        %2528 = vmatpush1.msra.mxu0 0.0
        %2529 = vmatprep.subr.mxu0 0.0
        %2530 = vmatpush1.msra.mxu0 0.0
        %2531 = vmatprep.subr.mxu0 0.0
        %2532 = vmatpush1.msra.mxu0 0.0
        %2533 = vmatprep.subr.mxu0 0.0
        %2534 = vmatpush1.msra.mxu0 0.0
        %2535 = vmatprep.subr.mxu0 0.0
        %2536 = vmatpush1.msra.mxu0 0.0
        %2537 = vmatprep.subr.mxu0 0.0
        %2538 = vmatpush1.msra.mxu0 0.0
        %2539 = vmatprep.subr.mxu0 0.0
        %2540 = vmatpush1.msra.mxu0 0.0
        %2541 = vmatprep.subr.mxu0 0.0
        %2542 = vmatpush1.msra.mxu0 0.0
        %2543 = vmatprep.subr.mxu0 0.0
        %2544 = vmatpush1.msra.mxu0 0.0
        %2545 = vmatprep.subr.mxu0 0.0
        %2546 = vmatpush1.msra.mxu0 0.0
        %2547 = vmatprep.mubr.f32.mxu0 0.0
        %2548 = vmatmul.mubr.f32.gmra.mrb[0].mxu0 %v2481
        %v2549 = vpop.f32.mrb[0].mxu0
        %v2550 = vadd.f32 %v1328, %v2549
        %v2551 = vpop.f32.mrb[0].mxu0
        %2552 = vdwg.mxu0
        %v2553 = vadd.f32 %v2382, %v2550
        %2554 = vst.msk [vmem:[%s161] sm:$0xff] %vm207, %v2553
        %s2555 = sand.u32 %s93, 1
        %s2556 = scalar_lea.sflag [#allocation4], %s2555
        %s2557 = sand.u32 %s93, 1
        %s2558 = smul.addr %s2557, 8
        %s2559 = scalar_lea.vmem [#allocation3], %s2558
        // Predicated region
        $region33: #{tpu_custom_call.1} parent=31 // pred_check
          %p2560 = pneg %p103
        $region34: #{tpu_custom_call.1} parent=31 // pred_check_branch
          %2562 = sbr.rel (%p2560) target = $region36
        $region35: #{tpu_custom_call.1} parent=31 // pred_region
          %s2564 = ssub.s32 128, 128
          %2565 = vsyncadd %s2556, %s2564
          %s2566 = smul.addr %s17, 128
          %s2567 = scalar_lea.hbm %s3, %s2566
          %s2569 = sshll.u32 %s2559, 4
          %s2570 = int_to_ptr.vmem [resolvable:$true] %s2569
          %2572 = dma.vmem_to_hbm [thread:$0]  %s2570, 128, %s2567, %s2556
        $region36: #{tpu_custom_call.1} parent=31 // pred_fallthru
          _
      $region32: #{tpu_custom_call.1} parent=5 // pred_fallthru
        _
      %p2573 = scmp.le.s32.totalorder 2, %s12
      // Predicated region
      $region37: #{tpu_custom_call.1} parent=5 // pred_check
        %p2574 = pneg %p2573
      $region38: #{tpu_custom_call.1} parent=5 // pred_check_branch
        %2576 = sbr.rel (%p2574) target = $region40
      $region39: #{tpu_custom_call.1} parent=5 // pred_region
        %s2577 = ssub.s32 %s12, 2
        // Predicated region
        $region41: #{tpu_custom_call.1} parent=39 // pred_check
          %p2578 = pneg %p109
        $region42: #{tpu_custom_call.1} parent=39 // pred_check_branch
          %2580 = sbr.rel (%p2578) target = $region44
        $region43: #{tpu_custom_call.1} parent=39 // pred_region
          %s2581 = sand.u32 %s94, 1
          %s2582 = scalar_lea.sflag [#allocation4], %s2581
          %s2583 = sand.u32 %s94, 1
          %s2584 = smul.addr %s2583, 8
          %s2585 = scalar_lea.vmem [#allocation3], %s2584
          %2586 = dma.done %s2582, 128
        $region44: #{tpu_custom_call.1} parent=39 // pred_fallthru
          _
      $region40: #{tpu_custom_call.1} parent=5 // pred_fallthru
        _
    $region6: #{tpu_custom_call.1} parent=1 // loop_footer
      %s16 = sadd.s32 1, %s12
    $region7: #{tpu_custom_call.1} parent=1 // loop_footer_branch
      %11 = sbr.rel target = $region3
    $region8: #{tpu_custom_call.1} parent=1 // loop_exit
      _
    %2587 = vsyncpa [#allocation4], 1
    %s2588 = scalar_lea.sflag [#allocation4], 1
    %2589 = vsyncpa %s2588, 1

</llo_original>
